<compile_context>
chip_gen: v5e
topology: v5e:2x2
jax: 0.10.0
libtpu: 0.0.40
codegen_flags: <defaults>
</compile_context>

<pallas_src>
import functools
import math

import jax
import jax.numpy as jnp
from jax import lax
from jax.experimental import pallas as pl
from jax.experimental.pallas import tpu as pltpu


def _layernorm(v, g, b, eps=1e-5):
    mu = jnp.mean(v, axis=-1, keepdims=True)
    var = jnp.mean((v - mu) * (v - mu), axis=-1, keepdims=True)
    return (v - mu) * lax.rsqrt(var + eps) * g + b


def _gelu(v, use_tanh):
    if use_tanh:
        # tanh approximation runs on the EUP slot; deviates slightly from the
        # torch.nn.GELU default (exact erf), so it is opt-in.
        c = math.sqrt(2.0 / math.pi)
        return 0.5 * v * (1.0 + jnp.tanh(c * (v + 0.044715 * v * v * v)))
    return 0.5 * v * (1.0 + lax.erf(v * (1.0 / math.sqrt(2.0))))


def encoder_kernel(x_ref,
                   ln1_g_ref, ln1_b_ref,
                   wqkv_t_ref, bqkv_t_ref,
                   ln2_g_ref, ln2_b_ref,
                   w1_ref, b1_ref, w2_ref, b2_ref,
                   o_ref,
                   *scratch,
                   n_heads, head_dim, tile_s, num_s_tiles,
                   compute_dtype, head_batched, use_tanh_gelu):
    e = n_heads * head_dim
    i = pl.program_id(1)
    inv_scale = 1.0 / math.sqrt(float(head_dim))
    exact_f32 = jnp.dtype(compute_dtype) == jnp.dtype(jnp.float32)

    def softmax_rows(scores):
        scores = scores - jnp.max(scores, axis=-1, keepdims=True)
        p = jnp.exp(scores)
        denom = jnp.sum(p, axis=-1, keepdims=True)
        if exact_f32:
            return p / denom                                # keep f32 path exact
        return p * pl.reciprocal(denom, approx=True)        # EUP slot, ~free

    def qkv_projection():
        # LN1 + fused QKV projection for the WHOLE sequence, produced in
        # feature-major layout: qkvT[r, j] = (LN1(x) @ Wqkv + bqkv)[j, r].
        # Feature-major makes every later per-head view a *sublane* split
        # (cheap) instead of a sub-128 lane split (masked stores / relayouts).
        x_full = x_ref[...]                                       # (s, e) f32
        h = _layernorm(x_full, ln1_g_ref[...], ln1_b_ref[...])
        hT = jnp.transpose(h).astype(compute_dtype)               # (e, s)
        qkvT = jnp.dot(wqkv_t_ref[...], hT,
                       preferred_element_type=jnp.float32)
        return qkvT + bqkv_t_ref[...]                             # (3e, s) f32

    if head_batched:
        # ---- primary path: all heads batched through the MXU ----
        q_sc, k_sc, v_sc = scratch   # (nh, s, hd), (nh, hd, s), (nh, hd, s)

        @pl.when(i == 0)
        def _project():
            qkvT = qkv_projection()
            # Cast to the MXU compute dtype exactly once, here.
            q_sc[...] = jnp.transpose(
                qkvT[0:e].reshape(n_heads, head_dim, -1),
                (0, 2, 1)).astype(compute_dtype)
            k_sc[...] = qkvT[e:2 * e].reshape(
                n_heads, head_dim, -1).astype(compute_dtype)
            v_sc[...] = qkvT[2 * e:3 * e].reshape(
                n_heads, head_dim, -1).astype(compute_dtype)

        if num_s_tiles == 1:
            x_rows = x_ref[...]                                   # (s, e) f32
            q3 = q_sc[...]                                        # (nh, s, hd)
        else:
            start = pl.multiple_of(i * tile_s, tile_s)
            x_rows = x_ref[pl.ds(start, tile_s), :]
            q3 = q_sc[:, pl.ds(start, tile_s), :]                 # (nh, tq, hd)
        k3 = k_sc[...]
        v3 = v_sc[...]

        # (nh, tq, hd) x (nh, hd, s) -> (nh, tq, s): one batched MXU call.
        scores = lax.dot_general(
            q3, k3, (((2,), (1,)), ((0,), (0,))),
            preferred_element_type=jnp.float32) * inv_scale
        p = softmax_rows(scores).astype(compute_dtype)
        # (nh, hd, s) x (nh, tq, s), contracting the kv axis -> (nh, hd, tq).
        pvT = lax.dot_general(
            v3, p, (((2,), (2,)), ((0,), (0,))),
            preferred_element_type=jnp.float32)
        attn = jnp.transpose(pvT.reshape(e, -1))                  # (tq, e) f32
        x1_rows = x_rows + attn                                   # residual 1
    else:
        # ---- conservative fallback: 2-D ops only, sublane-sliced heads ----
        # Attention for the whole sequence at tile 0; per-tile MLP below.
        (x1_sc,) = scratch                                        # (s, e) f32

        @pl.when(i == 0)
        def _attention():
            qkvT = qkv_projection()                               # (3e, s) f32
            parts = []
            for hh in range(n_heads):
                lo = hh * head_dim
                qh = jnp.transpose(
                    qkvT[lo:lo + head_dim]).astype(compute_dtype)           # (s, hd)
                khT = qkvT[e + lo:e + lo + head_dim].astype(compute_dtype)  # (hd, s)
                vhT = qkvT[2 * e + lo:2 * e + lo + head_dim].astype(compute_dtype)
                sc = jnp.dot(qh, khT,
                             preferred_element_type=jnp.float32) * inv_scale
                ph = softmax_rows(sc).astype(compute_dtype)
                parts.append(lax.dot_general(
                    vhT, ph, (((1,), (1,)), ((), ())),
                    preferred_element_type=jnp.float32))          # (hd, s)
            attnT = jnp.concatenate(parts, axis=0)                # (e, s)
            x1_sc[...] = x_ref[...] + jnp.transpose(attnT)

        if num_s_tiles == 1:
            x1_rows = x1_sc[...]
        else:
            start = pl.multiple_of(i * tile_s, tile_s)
            x1_rows = x1_sc[pl.ds(start, tile_s), :]

    # ---- pre-norm 2 + row-tiled GELU MLP + residual 2 (all elementwise f32) ----
    h2 = _layernorm(x1_rows, ln2_g_ref[...], ln2_b_ref[...]).astype(compute_dtype)
    f = jnp.dot(h2, w1_ref[...], preferred_element_type=jnp.float32) + b1_ref[...]
    f = _gelu(f, use_tanh_gelu).astype(compute_dtype)
    f = jnp.dot(f, w2_ref[...], preferred_element_type=jnp.float32) + b2_ref[...]
    o_ref[...] = (x1_rows + f).astype(o_ref.dtype)


def _pick_tile_s(s):
    # Sequence (query-row) tiling: only tile when the sequence is long enough
    # to matter AND splits into lane-aligned tiles.  Prefer multiples of 256
    # (native MXU tile on v6e/v7x), fall back to 128 (v5e MXU tile).
    if s <= 512 or s % 128 != 0:
        return s
    for cand in (512, 256, 384, 128):
        if s % cand == 0:
            return cand
    return s


def encoder_forward(x, params, *, n_heads, compute_dtype=jnp.bfloat16,
                    use_tanh_gelu=False):
    m, s, e = x.shape
    head_dim = e // n_heads
    f_dim = params["w1"].shape[1]
    tile_s = _pick_tile_s(s)
    num_s_tiles = s // tile_s
    cdt = jnp.dtype(compute_dtype)

    # Fused, pre-transposed QKV projection: qkvT = WqkvT @ LN1(x)^T + bqkvT.
    wqkv_t = jnp.concatenate([params["wq"], params["wk"], params["wv"]],
                             axis=1).T.astype(compute_dtype)       # (3e, e)
    bqkv_t = jnp.concatenate([params["bq"], params["bk"], params["bv"]],
                             axis=1).T                              # (3e, 1) f32
    ordered = [
        params["ln1_g"], params["ln1_b"],
        wqkv_t, bqkv_t,
        params["ln2_g"], params["ln2_b"],
        params["w1"].astype(compute_dtype), params["b1"],
        params["w2"].astype(compute_dtype), params["b2"],
    ]
    weight_bytes = sum(int(a.size) * a.dtype.itemsize for a in ordered)

    # Advisory cost estimate for XLA's scheduler around the fused custom call.
    flops = 2 * m * s * e * (3 * e + 2 * s + 2 * f_dim)
    transcendentals = m * s * (n_heads * s + f_dim + 8)
    bytes_accessed = 2 * int(x.size) * x.dtype.itemsize + weight_bytes
    cost = pl.CostEstimate(flops=flops, transcendentals=transcendentals,
                           bytes_accessed=bytes_accessed)

    # Generation-aware VMEM capacity (64 MiB on v7x, 128 MiB on v5e/v6e).
    try:
        cap = int(getattr(pltpu.get_tpu_info(), "vmem_capacity_bytes", 64 << 20))
    except Exception:
        cap = 64 << 20

    def build(head_batched, single_buffer_weights):
        def param_spec(arr):
            if single_buffer_weights:
                # Constant index map -> single-buffer the resident weights
                # (double-buffering only doubles VMEM; matters most on v7x).
                return pl.BlockSpec(arr.shape, lambda b, i: (0, 0),
                                    pipeline_mode=pl.Buffered(1))
            return pl.BlockSpec(arr.shape, lambda b, i: (0, 0))

        if head_batched:
            scratch = [pltpu.VMEM((n_heads, s, head_dim), compute_dtype),
                       pltpu.VMEM((n_heads, head_dim, s), compute_dtype),
                       pltpu.VMEM((n_heads, head_dim, s), compute_dtype)]
        else:
            scratch = [pltpu.VMEM((s, e), jnp.float32)]

        # VMEM budget now includes the qkv scratch, the (heads, tile_s, s)
        # score block and the (tile_s, f_dim) MLP intermediate.
        weight_resident = weight_bytes * (1 if single_buffer_weights else 2)
        act_bytes = (2 * s * e * 4                       # x slab (2 buffers)
                     + 2 * tile_s * e * 4                # out tile (2 buffers)
                     + 3 * s * e * max(cdt.itemsize, 4)  # q/k/v scratch
                     + 3 * e * s * 4                     # qkvT temporary
                     + 2 * n_heads * tile_s * s * 4      # scores + probs
                     + 2 * tile_s * f_dim * 4            # MLP hidden
                     + 4 * tile_s * e * 4)               # misc temporaries
        vmem_limit = int(min(max(weight_resident + act_bytes + (8 << 20),
                                 32 << 20),
                             int(0.9 * cap)))

        kernel = functools.partial(
            encoder_kernel, n_heads=n_heads, head_dim=head_dim,
            tile_s=tile_s, num_s_tiles=num_s_tiles,
            compute_dtype=compute_dtype, head_batched=head_batched,
            use_tanh_gelu=use_tanh_gelu)

        return pl.pallas_call(
            kernel,
            out_shape=jax.ShapeDtypeStruct((m, s, e), x.dtype),
            grid_spec=pltpu.PrefetchScalarGridSpec(
                num_scalar_prefetch=0,
                grid=(m, num_s_tiles),
                in_specs=[pl.BlockSpec((pl.Squeezed(), s, e),
                                       lambda b, i: (b, 0, 0))]
                         + [param_spec(a) for a in ordered],
                out_specs=pl.BlockSpec((pl.Squeezed(), tile_s, e),
                                       lambda b, i: (b, i, 0)),
                scratch_shapes=scratch,
            ),
            compiler_params=pltpu.CompilerParams(
                dimension_semantics=("parallel", "arbitrary"),
                vmem_limit_bytes=vmem_limit,
            ),
            cost_estimate=cost,
        )

    args = (x, *ordered)
    last_exc = None
    for head_batched, single_buf in ((True, True), (True, False), (False, False)):
        try:
            return jax.block_until_ready(build(head_batched, single_buf)(*args))
        except Exception as exc:  # conservative retry if a variant fails to lower
            last_exc = exc
    raise last_exc


def init_params(key, embed_dim, n_heads, forward_mul):
    e = embed_dim
    f = e * forward_mul
    ks = jax.random.split(key, 8)
    scale = 0.02

    def lin(k, din, dout):
        k1, k2 = jax.random.split(k)
        w = scale * jax.random.normal(k1, (din, dout), jnp.float32)   # (in, out)
        b = scale * jax.random.normal(k2, (1, dout), jnp.float32)
        return w, b

    wq, bq = lin(ks[0], e, e)
    wk, bk = lin(ks[1], e, e)
    wv, bv = lin(ks[2], e, e)
    w1, b1 = lin(ks[3], e, f)
    w2, b2 = lin(ks[4], f, e)
    return dict(
        ln1_g=jnp.ones((1, e), jnp.float32), ln1_b=jnp.zeros((1, e), jnp.float32),
        ln2_g=jnp.ones((1, e), jnp.float32), ln2_b=jnp.zeros((1, e), jnp.float32),
        wq=wq, bq=bq, wk=wk, bk=bk, wv=wv, bv=bv,
        w1=w1, b1=b1, w2=w2, b2=b2,
    )


def encoder_reference(x, p, *, n_heads):
    # plain-JAX reference mirroring the PyTorch forward exactly
    m, s, e = x.shape
    hd = e // n_heads

    def ln(v, g, b):
        mu = v.mean(-1, keepdims=True)
        var = ((v - mu) ** 2).mean(-1, keepdims=True)
        return (v - mu) / jnp.sqrt(var + 1e-5) * g + b

    h = ln(x, p["ln1_g"], p["ln1_b"])
    q = (h @ p["wq"] + p["bq"]).reshape(m, s, n_heads, hd).transpose(0, 2, 1, 3)
    k = (h @ p["wk"] + p["bk"]).reshape(m, s, n_heads, hd).transpose(0, 2, 1, 3)
    v = (h @ p["wv"] + p["bv"]).reshape(m, s, n_heads, hd).transpose(0, 2, 1, 3)
    att = jnp.einsum("mhqd,mhkd->mhqk", q, k) / math.sqrt(float(hd))
    att = jax.nn.softmax(att, axis=-1)
    o = jnp.einsum("mhqk,mhkd->mhqd", att, v).transpose(0, 2, 1, 3).reshape(m, s, e)
    x1 = x + o
    h2 = ln(x1, p["ln2_g"], p["ln2_b"])
    ff = jax.nn.gelu(h2 @ p["w1"] + p["b1"], approximate=False) @ p["w2"] + p["b2"]
    return x1 + ff


if __name__ == "__main__":
    # small shapes consistent with the module: batch=2, seq=8, embed=32,
    # 4 attention heads, forward_mul=2
    m, s, e = 2, 8, 32
    n_heads, forward_mul = 4, 2

    key = jax.random.PRNGKey(0)
    kx, kp = jax.random.split(key)
    x = jax.random.normal(kx, (m, s, e), jnp.float32)
    params = init_params(kp, e, n_heads, forward_mul)

    ref = encoder_reference(x, params, n_heads=n_heads)

    # Exact path (f32 MXU operands, exact softmax division) -- tight tolerance.
    out_f32 = jax.block_until_ready(
        encoder_forward(x, params, n_heads=n_heads, compute_dtype=jnp.float32))
    assert jnp.allclose(out_f32, ref, rtol=1e-3, atol=1e-3), "f32 mismatch vs reference"

    # Performance configuration: bf16 MXU operands, f32 accumulation/elementwise.
    out_bf16 = jax.block_until_ready(
        encoder_forward(x, params, n_heads=n_heads, compute_dtype=jnp.bfloat16))
    assert jnp.allclose(out_bf16, ref, rtol=2e-2, atol=2e-2), "bf16 mismatch vs reference"

    print("KERNEL_OK")
</pallas_src>

<mosaic_0001>
module attributes {stable_mosaic.version = 11 : i64} {
  func.func @encoder_kernel(%arg0: i32, %arg1: i32, %arg2: memref<1x8x32xf32, #tpu.memory_space<vmem>>, %arg3: memref<1x32xf32, #tpu.memory_space<vmem>>, %arg4: memref<1x32xf32, #tpu.memory_space<vmem>>, %arg5: memref<96x32xf32, #tpu.memory_space<vmem>>, %arg6: memref<96x1xf32, #tpu.memory_space<vmem>>, %arg7: memref<1x32xf32, #tpu.memory_space<vmem>>, %arg8: memref<1x32xf32, #tpu.memory_space<vmem>>, %arg9: memref<32x64xf32, #tpu.memory_space<vmem>>, %arg10: memref<1x64xf32, #tpu.memory_space<vmem>>, %arg11: memref<64x32xf32, #tpu.memory_space<vmem>>, %arg12: memref<1x32xf32, #tpu.memory_space<vmem>>, %arg13: memref<1x8x32xf32, #tpu.memory_space<vmem>>, %arg14: memref<4x8x8xf32, #tpu.memory_space<vmem>>, %arg15: memref<4x8x8xf32, #tpu.memory_space<vmem>>, %arg16: memref<4x8x8xf32, #tpu.memory_space<vmem>>) attributes {dimension_semantics = [#tpu.dimension_semantics<parallel>, #tpu.dimension_semantics<arbitrary>], iteration_bounds = array<i64: 2, 1>, scalar_prefetch = 0 : i64, scratch_operands = 3 : i64, tpu.core_type = #tpu.core_type<tc>, window_params = [{transform_indices = @transform_0, window_bounds = array<i64: 1, 8, 32>}, {pipeline_mode = #tpu.pipeline_mode<synchronous>, transform_indices = @transform_1, window_bounds = array<i64: 1, 32>}, {pipeline_mode = #tpu.pipeline_mode<synchronous>, transform_indices = @transform_2, window_bounds = array<i64: 1, 32>}, {pipeline_mode = #tpu.pipeline_mode<synchronous>, transform_indices = @transform_3, window_bounds = array<i64: 96, 32>}, {pipeline_mode = #tpu.pipeline_mode<synchronous>, transform_indices = @transform_4, window_bounds = array<i64: 96, 1>}, {pipeline_mode = #tpu.pipeline_mode<synchronous>, transform_indices = @transform_5, window_bounds = array<i64: 1, 32>}, {pipeline_mode = #tpu.pipeline_mode<synchronous>, transform_indices = @transform_6, window_bounds = array<i64: 1, 32>}, {pipeline_mode = #tpu.pipeline_mode<synchronous>, transform_indices = @transform_7, window_bounds = array<i64: 32, 64>}, {pipeline_mode = #tpu.pipeline_mode<synchronous>, transform_indices = @transform_8, window_bounds = array<i64: 1, 64>}, {pipeline_mode = #tpu.pipeline_mode<synchronous>, transform_indices = @transform_9, window_bounds = array<i64: 64, 32>}, {pipeline_mode = #tpu.pipeline_mode<synchronous>, transform_indices = @transform_10, window_bounds = array<i64: 1, 32>}, {transform_indices = @transform_11, window_bounds = array<i64: 1, 8, 32>}]} {
    %c0_i32 = arith.constant 0 : i32
    %0 = arith.cmpi eq, %arg1, %c0_i32 : i32
    %1 = arith.extui %0 : i1 to i32
    %c0_i32_0 = arith.constant 0 : i32
    %2 = arith.cmpi ne, %1, %c0_i32_0 : i32
    scf.if %2 {
      %c0_41 = arith.constant 0 : index
      %c0_42 = arith.constant 0 : index
      %c0_43 = arith.constant 0 : index
      %72 = vector.load %arg2[%c0_41, %c0_42, %c0_43] : memref<1x8x32xf32, #tpu.memory_space<vmem>>, vector<1x8x32xf32>
      %73 = vector.shape_cast %72 : vector<1x8x32xf32> to vector<8x32xf32>
      %c0_44 = arith.constant 0 : index
      %c0_45 = arith.constant 0 : index
      %74 = vector.load %arg3[%c0_44, %c0_45] : memref<1x32xf32, #tpu.memory_space<vmem>>, vector<1x32xf32>
      %c0_46 = arith.constant 0 : index
      %c0_47 = arith.constant 0 : index
      %75 = vector.load %arg4[%c0_46, %c0_47] : memref<1x32xf32, #tpu.memory_space<vmem>>, vector<1x32xf32>
      %cst_48 = arith.constant dense<0.000000e+00> : vector<8xf32>
      %76 = vector.multi_reduction <add>, %73, %cst_48 [1] : vector<8x32xf32> to vector<8xf32>
      %77 = vector.shape_cast %76 : vector<8xf32> to vector<8x1xf32>
      %cst_49 = arith.constant 3.200000e+01 : f32
      %78 = vector.broadcast %cst_49 : f32 to vector<8x1xf32>
      %79 = arith.divf %77, %78 : vector<8x1xf32>
      %80 = vector.broadcast %79 : vector<8x1xf32> to vector<8x32xf32>
      %81 = arith.subf %73, %80 : vector<8x32xf32>
      %82 = vector.broadcast %79 : vector<8x1xf32> to vector<8x32xf32>
      %83 = arith.subf %73, %82 : vector<8x32xf32>
      %84 = arith.mulf %81, %83 : vector<8x32xf32>
      %cst_50 = arith.constant dense<0.000000e+00> : vector<8xf32>
      %85 = vector.multi_reduction <add>, %84, %cst_50 [1] : vector<8x32xf32> to vector<8xf32>
      %86 = vector.shape_cast %85 : vector<8xf32> to vector<8x1xf32>
      %cst_51 = arith.constant 3.200000e+01 : f32
      %87 = vector.broadcast %cst_51 : f32 to vector<8x1xf32>
      %88 = arith.divf %86, %87 : vector<8x1xf32>
      %89 = vector.broadcast %79 : vector<8x1xf32> to vector<8x32xf32>
      %90 = arith.subf %73, %89 : vector<8x32xf32>
      %cst_52 = arith.constant 9.99999974E-6 : f32
      %91 = vector.broadcast %cst_52 : f32 to vector<8x1xf32>
      %92 = arith.addf %88, %91 : vector<8x1xf32>
      %93 = math.rsqrt %92 : vector<8x1xf32>
      %94 = vector.broadcast %93 : vector<8x1xf32> to vector<8x32xf32>
      %95 = arith.mulf %90, %94 : vector<8x32xf32>
      %96 = vector.broadcast %74 : vector<1x32xf32> to vector<8x32xf32>
      %97 = arith.mulf %95, %96 : vector<8x32xf32>
      %98 = vector.broadcast %75 : vector<1x32xf32> to vector<8x32xf32>
      %99 = arith.addf %97, %98 : vector<8x32xf32>
      %100 = tpu.transpose %99, [1, 0] : vector<8x32xf32> -> vector<32x8xf32>
      %c0_53 = arith.constant 0 : index
      %c0_54 = arith.constant 0 : index
      %101 = vector.load %arg5[%c0_53, %c0_54] : memref<96x32xf32, #tpu.memory_space<vmem>>, vector<96x32xf32>
      %cst_55 = arith.constant dense<0.000000e+00> : vector<96x8xf32>
      %102 = tpu.matmul %101, %100, %cst_55 {dimension_numbers = #tpu.dot_dimension_numbers<[1], [0], [0], [1], [0, 0, 1, 1], [], []>} : vector<96x32xf32>, vector<32x8xf32>, vector<96x8xf32> -> vector<96x8xf32>
      %c0_56 = arith.constant 0 : index
      %c0_57 = arith.constant 0 : index
      %103 = vector.load %arg6[%c0_56, %c0_57] : memref<96x1xf32, #tpu.memory_space<vmem>>, vector<96x1xf32>
      %104 = vector.broadcast %103 : vector<96x1xf32> to vector<96x8xf32>
      %105 = arith.addf %102, %104 : vector<96x8xf32>
      %106 = vector.extract_strided_slice %105 {offsets = [0, 0], sizes = [32, 8], strides = [1, 1]} : vector<96x8xf32> to vector<32x8xf32>
      %107 = vector.shape_cast %106 : vector<32x8xf32> to vector<4x8x8xf32>
      %108 = tpu.transpose %107, [0, 2, 1] : vector<4x8x8xf32> -> vector<4x8x8xf32>
      %c0_58 = arith.constant 0 : index
      %c0_59 = arith.constant 0 : index
      %c0_60 = arith.constant 0 : index
      %109 = vector.load %arg14[%c0_58, %c0_59, %c0_60] : memref<4x8x8xf32, #tpu.memory_space<vmem>>, vector<4x8x8xf32>
      tpu.vector_store %arg14[%c0_58, %c0_59, %c0_60], %108 {strides = array<i32>} : memref<4x8x8xf32, #tpu.memory_space<vmem>>, vector<4x8x8xf32>,
      %110 = vector.extract_strided_slice %105 {offsets = [32, 0], sizes = [32, 8], strides = [1, 1]} : vector<96x8xf32> to vector<32x8xf32>
      %111 = vector.shape_cast %110 : vector<32x8xf32> to vector<4x8x8xf32>
      %c0_61 = arith.constant 0 : index
      %c0_62 = arith.constant 0 : index
      %c0_63 = arith.constant 0 : index
      %112 = vector.load %arg15[%c0_61, %c0_62, %c0_63] : memref<4x8x8xf32, #tpu.memory_space<vmem>>, vector<4x8x8xf32>
      tpu.vector_store %arg15[%c0_61, %c0_62, %c0_63], %111 {strides = array<i32>} : memref<4x8x8xf32, #tpu.memory_space<vmem>>, vector<4x8x8xf32>,
      %113 = vector.extract_strided_slice %105 {offsets = [64, 0], sizes = [32, 8], strides = [1, 1]} : vector<96x8xf32> to vector<32x8xf32>
      %114 = vector.shape_cast %113 : vector<32x8xf32> to vector<4x8x8xf32>
      %c0_64 = arith.constant 0 : index
      %c0_65 = arith.constant 0 : index
      %c0_66 = arith.constant 0 : index
      %115 = vector.load %arg16[%c0_64, %c0_65, %c0_66] : memref<4x8x8xf32, #tpu.memory_space<vmem>>, vector<4x8x8xf32>
      tpu.vector_store %arg16[%c0_64, %c0_65, %c0_66], %114 {strides = array<i32>} : memref<4x8x8xf32, #tpu.memory_space<vmem>>, vector<4x8x8xf32>,
    } else {
    }
    %c0 = arith.constant 0 : index
    %c0_1 = arith.constant 0 : index
    %c0_2 = arith.constant 0 : index
    %3 = vector.load %arg2[%c0, %c0_1, %c0_2] : memref<1x8x32xf32, #tpu.memory_space<vmem>>, vector<1x8x32xf32>
    %4 = vector.shape_cast %3 : vector<1x8x32xf32> to vector<8x32xf32>
    %c0_3 = arith.constant 0 : index
    %c0_4 = arith.constant 0 : index
    %c0_5 = arith.constant 0 : index
    %5 = vector.load %arg14[%c0_3, %c0_4, %c0_5] : memref<4x8x8xf32, #tpu.memory_space<vmem>>, vector<4x8x8xf32>
    %c0_6 = arith.constant 0 : index
    %c0_7 = arith.constant 0 : index
    %c0_8 = arith.constant 0 : index
    %6 = vector.load %arg15[%c0_6, %c0_7, %c0_8] : memref<4x8x8xf32, #tpu.memory_space<vmem>>, vector<4x8x8xf32>
    %c0_9 = arith.constant 0 : index
    %c0_10 = arith.constant 0 : index
    %c0_11 = arith.constant 0 : index
    %7 = vector.load %arg16[%c0_9, %c0_10, %c0_11] : memref<4x8x8xf32, #tpu.memory_space<vmem>>, vector<4x8x8xf32>
    %cst = arith.constant dense<0.000000e+00> : vector<4x8x8xf32>
    %8 = tpu.matmul %5, %6, %cst {dimension_numbers = #tpu.dot_dimension_numbers<[2], [1], [1], [2], [0, 0, 0, 1, 1, 2], [0], [0]>} : vector<4x8x8xf32>, vector<4x8x8xf32>, vector<4x8x8xf32> -> vector<4x8x8xf32>
    %cst_12 = arith.constant 0.353553385 : f32
    %9 = vector.broadcast %cst_12 : f32 to vector<4x8x8xf32>
    %10 = arith.mulf %8, %9 : vector<4x8x8xf32>
    %cst_13 = arith.constant dense<0xFF800000> : vector<4x8xf32>
    %11 = vector.multi_reduction <maximumf>, %10, %cst_13 [2] : vector<4x8x8xf32> to vector<4x8xf32>
    %12 = vector.shape_cast %11 : vector<4x8xf32> to vector<4x8x1xf32>
    %13 = vector.broadcast %12 : vector<4x8x1xf32> to vector<4x8x8xf32>
    %14 = arith.subf %10, %13 : vector<4x8x8xf32>
    %15 = math.exp %14 : vector<4x8x8xf32>
    %cst_14 = arith.constant dense<0.000000e+00> : vector<4x8xf32>
    %16 = vector.multi_reduction <add>, %15, %cst_14 [2] : vector<4x8x8xf32> to vector<4x8xf32>
    %17 = vector.shape_cast %16 : vector<4x8xf32> to vector<4x8x1xf32>
    %18 = vector.broadcast %17 : vector<4x8x1xf32> to vector<4x8x8xf32>
    %19 = arith.divf %15, %18 : vector<4x8x8xf32>
    %cst_15 = arith.constant dense<0.000000e+00> : vector<4x8x8xf32>
    %20 = tpu.matmul %7, %19, %cst_15 {dimension_numbers = #tpu.dot_dimension_numbers<[2], [2], [1], [1], [0, 0, 0, 1, 1, 1], [0], [0]>} : vector<4x8x8xf32>, vector<4x8x8xf32>, vector<4x8x8xf32> -> vector<4x8x8xf32>
    %21 = vector.shape_cast %20 : vector<4x8x8xf32> to vector<32x8xf32>
    %22 = tpu.transpose %21, [1, 0] : vector<32x8xf32> -> vector<8x32xf32>
    %23 = arith.addf %4, %22 : vector<8x32xf32>
    %c0_16 = arith.constant 0 : index
    %c0_17 = arith.constant 0 : index
    %24 = vector.load %arg7[%c0_16, %c0_17] : memref<1x32xf32, #tpu.memory_space<vmem>>, vector<1x32xf32>
    %c0_18 = arith.constant 0 : index
    %c0_19 = arith.constant 0 : index
    %25 = vector.load %arg8[%c0_18, %c0_19] : memref<1x32xf32, #tpu.memory_space<vmem>>, vector<1x32xf32>
    %cst_20 = arith.constant dense<0.000000e+00> : vector<8xf32>
    %26 = vector.multi_reduction <add>, %23, %cst_20 [1] : vector<8x32xf32> to vector<8xf32>
    %27 = vector.shape_cast %26 : vector<8xf32> to vector<8x1xf32>
    %cst_21 = arith.constant 3.200000e+01 : f32
    %28 = vector.broadcast %cst_21 : f32 to vector<8x1xf32>
    %29 = arith.divf %27, %28 : vector<8x1xf32>
    %30 = vector.broadcast %29 : vector<8x1xf32> to vector<8x32xf32>
    %31 = arith.subf %23, %30 : vector<8x32xf32>
    %32 = vector.broadcast %29 : vector<8x1xf32> to vector<8x32xf32>
    %33 = arith.subf %23, %32 : vector<8x32xf32>
    %34 = arith.mulf %31, %33 : vector<8x32xf32>
    %cst_22 = arith.constant dense<0.000000e+00> : vector<8xf32>
    %35 = vector.multi_reduction <add>, %34, %cst_22 [1] : vector<8x32xf32> to vector<8xf32>
    %36 = vector.shape_cast %35 : vector<8xf32> to vector<8x1xf32>
    %cst_23 = arith.constant 3.200000e+01 : f32
    %37 = vector.broadcast %cst_23 : f32 to vector<8x1xf32>
    %38 = arith.divf %36, %37 : vector<8x1xf32>
    %39 = vector.broadcast %29 : vector<8x1xf32> to vector<8x32xf32>
    %40 = arith.subf %23, %39 : vector<8x32xf32>
    %cst_24 = arith.constant 9.99999974E-6 : f32
    %41 = vector.broadcast %cst_24 : f32 to vector<8x1xf32>
    %42 = arith.addf %38, %41 : vector<8x1xf32>
    %43 = math.rsqrt %42 : vector<8x1xf32>
    %44 = vector.broadcast %43 : vector<8x1xf32> to vector<8x32xf32>
    %45 = arith.mulf %40, %44 : vector<8x32xf32>
    %46 = vector.broadcast %24 : vector<1x32xf32> to vector<8x32xf32>
    %47 = arith.mulf %45, %46 : vector<8x32xf32>
    %48 = vector.broadcast %25 : vector<1x32xf32> to vector<8x32xf32>
    %49 = arith.addf %47, %48 : vector<8x32xf32>
    %c0_25 = arith.constant 0 : index
    %c0_26 = arith.constant 0 : index
    %50 = vector.load %arg9[%c0_25, %c0_26] : memref<32x64xf32, #tpu.memory_space<vmem>>, vector<32x64xf32>
    %cst_27 = arith.constant dense<0.000000e+00> : vector<8x64xf32>
    %51 = tpu.matmul %49, %50, %cst_27 {dimension_numbers = #tpu.dot_dimension_numbers<[1], [0], [0], [1], [0, 0, 1, 1], [], []>} : vector<8x32xf32>, vector<32x64xf32>, vector<8x64xf32> -> vector<8x64xf32>
    %c0_28 = arith.constant 0 : index
    %c0_29 = arith.constant 0 : index
    %52 = vector.load %arg10[%c0_28, %c0_29] : memref<1x64xf32, #tpu.memory_space<vmem>>, vector<1x64xf32>
    %53 = vector.broadcast %52 : vector<1x64xf32> to vector<8x64xf32>
    %54 = arith.addf %51, %53 : vector<8x64xf32>
    %cst_30 = arith.constant 5.000000e-01 : f32
    %55 = vector.broadcast %cst_30 : f32 to vector<8x64xf32>
    %56 = arith.mulf %55, %54 : vector<8x64xf32>
    %cst_31 = arith.constant 0.707106769 : f32
    %57 = vector.broadcast %cst_31 : f32 to vector<8x64xf32>
    %58 = arith.mulf %54, %57 : vector<8x64xf32>
    %59 = math.erf %58 : vector<8x64xf32>
    %cst_32 = arith.constant 1.000000e+00 : f32
    %60 = vector.broadcast %cst_32 : f32 to vector<8x64xf32>
    %61 = arith.addf %60, %59 : vector<8x64xf32>
    %62 = arith.mulf %56, %61 : vector<8x64xf32>
    %c0_33 = arith.constant 0 : index
    %c0_34 = arith.constant 0 : index
    %63 = vector.load %arg11[%c0_33, %c0_34] : memref<64x32xf32, #tpu.memory_space<vmem>>, vector<64x32xf32>
    %cst_35 = arith.constant dense<0.000000e+00> : vector<8x32xf32>
    %64 = tpu.matmul %62, %63, %cst_35 {dimension_numbers = #tpu.dot_dimension_numbers<[1], [0], [0], [1], [0, 0, 1, 1], [], []>} : vector<8x64xf32>, vector<64x32xf32>, vector<8x32xf32> -> vector<8x32xf32>
    %c0_36 = arith.constant 0 : index
    %c0_37 = arith.constant 0 : index
    %65 = vector.load %arg12[%c0_36, %c0_37] : memref<1x32xf32, #tpu.memory_space<vmem>>, vector<1x32xf32>
    %66 = vector.broadcast %65 : vector<1x32xf32> to vector<8x32xf32>
    %67 = arith.addf %64, %66 : vector<8x32xf32>
    %68 = arith.addf %23, %67 : vector<8x32xf32>
    %c0_38 = arith.constant 0 : index
    %c0_39 = arith.constant 0 : index
    %c0_40 = arith.constant 0 : index
    %69 = vector.load %arg13[%c0_38, %c0_39, %c0_40] : memref<1x8x32xf32, #tpu.memory_space<vmem>>, vector<1x8x32xf32>
    %70 = vector.shape_cast %69 : vector<1x8x32xf32> to vector<8x32xf32>
    %71 = vector.shape_cast %68 : vector<8x32xf32> to vector<1x8x32xf32>
    tpu.vector_store %arg13[%c0_38, %c0_39, %c0_40], %71 {strides = array<i32>} : memref<1x8x32xf32, #tpu.memory_space<vmem>>, vector<1x8x32xf32>,
    return
  }
  func.func @transform_0(%arg0: i32, %arg1: i32) -> (i32, i32, i32) {
    %c0_i32 = arith.constant 0 : i32
    %c0_i32_0 = arith.constant 0 : i32
    %c0_i32_1 = arith.constant 0 : i32
    return %arg0, %c0_i32, %c0_i32_0 : i32, i32, i32
  }
  func.func @transform_1(%arg0: i32, %arg1: i32) -> (i32, i32) {
    %c0_i32 = arith.constant 0 : i32
    %c0_i32_0 = arith.constant 0 : i32
    %c0_i32_1 = arith.constant 0 : i32
    return %c0_i32, %c0_i32_0 : i32, i32
  }
  func.func @transform_2(%arg0: i32, %arg1: i32) -> (i32, i32) {
    %c0_i32 = arith.constant 0 : i32
    %c0_i32_0 = arith.constant 0 : i32
    %c0_i32_1 = arith.constant 0 : i32
    return %c0_i32, %c0_i32_0 : i32, i32
  }
  func.func @transform_3(%arg0: i32, %arg1: i32) -> (i32, i32) {
    %c0_i32 = arith.constant 0 : i32
    %c0_i32_0 = arith.constant 0 : i32
    %c0_i32_1 = arith.constant 0 : i32
    return %c0_i32, %c0_i32_0 : i32, i32
  }
  func.func @transform_4(%arg0: i32, %arg1: i32) -> (i32, i32) {
    %c0_i32 = arith.constant 0 : i32
    %c0_i32_0 = arith.constant 0 : i32
    %c0_i32_1 = arith.constant 0 : i32
    return %c0_i32, %c0_i32_0 : i32, i32
  }
  func.func @transform_5(%arg0: i32, %arg1: i32) -> (i32, i32) {
    %c0_i32 = arith.constant 0 : i32
    %c0_i32_0 = arith.constant 0 : i32
    %c0_i32_1 = arith.constant 0 : i32
    return %c0_i32, %c0_i32_0 : i32, i32
  }
  func.func @transform_6(%arg0: i32, %arg1: i32) -> (i32, i32) {
    %c0_i32 = arith.constant 0 : i32
    %c0_i32_0 = arith.constant 0 : i32
    %c0_i32_1 = arith.constant 0 : i32
    return %c0_i32, %c0_i32_0 : i32, i32
  }
  func.func @transform_7(%arg0: i32, %arg1: i32) -> (i32, i32) {
    %c0_i32 = arith.constant 0 : i32
    %c0_i32_0 = arith.constant 0 : i32
    %c0_i32_1 = arith.constant 0 : i32
    return %c0_i32, %c0_i32_0 : i32, i32
  }
  func.func @transform_8(%arg0: i32, %arg1: i32) -> (i32, i32) {
    %c0_i32 = arith.constant 0 : i32
    %c0_i32_0 = arith.constant 0 : i32
    %c0_i32_1 = arith.constant 0 : i32
    return %c0_i32, %c0_i32_0 : i32, i32
  }
  func.func @transform_9(%arg0: i32, %arg1: i32) -> (i32, i32) {
    %c0_i32 = arith.constant 0 : i32
    %c0_i32_0 = arith.constant 0 : i32
    %c0_i32_1 = arith.constant 0 : i32
    return %c0_i32, %c0_i32_0 : i32, i32
  }
  func.func @transform_10(%arg0: i32, %arg1: i32) -> (i32, i32) {
    %c0_i32 = arith.constant 0 : i32
    %c0_i32_0 = arith.constant 0 : i32
    %c0_i32_1 = arith.constant 0 : i32
    return %c0_i32, %c0_i32_0 : i32, i32
  }
  func.func @transform_11(%arg0: i32, %arg1: i32) -> (i32, i32, i32) {
    %c0_i32 = arith.constant 0 : i32
    %c0_i32_0 = arith.constant 0 : i32
    return %arg0, %arg1, %c0_i32 : i32, i32, i32
  }
}

module attributes {stable_mosaic.version = 11 : i64} {
  func.func @encoder_kernel(%arg0: i32, %arg1: i32, %arg2: memref<1x8x32xf32, #tpu.memory_space<vmem>>, %arg3: memref<1x32xf32, #tpu.memory_space<vmem>>, %arg4: memref<1x32xf32, #tpu.memory_space<vmem>>, %arg5: memref<96x32xf32, #tpu.memory_space<vmem>>, %arg6: memref<96x1xf32, #tpu.memory_space<vmem>>, %arg7: memref<1x32xf32, #tpu.memory_space<vmem>>, %arg8: memref<1x32xf32, #tpu.memory_space<vmem>>, %arg9: memref<32x64xf32, #tpu.memory_space<vmem>>, %arg10: memref<1x64xf32, #tpu.memory_space<vmem>>, %arg11: memref<64x32xf32, #tpu.memory_space<vmem>>, %arg12: memref<1x32xf32, #tpu.memory_space<vmem>>, %arg13: memref<1x8x32xf32, #tpu.memory_space<vmem>>, %arg14: memref<4x8x8xf32, #tpu.memory_space<vmem>>, %arg15: memref<4x8x8xf32, #tpu.memory_space<vmem>>, %arg16: memref<4x8x8xf32, #tpu.memory_space<vmem>>) attributes {dimension_semantics = [#tpu.dimension_semantics<parallel>, #tpu.dimension_semantics<arbitrary>], iteration_bounds = array<i64: 2, 1>, scalar_prefetch = 0 : i64, scratch_operands = 3 : i64, tpu.core_type = #tpu.core_type<tc>, window_params = [{transform_indices = @transform_0, window_bounds = array<i64: 1, 8, 32>}, {pipeline_mode = #tpu.pipeline_mode<synchronous>, transform_indices = @transform_1, window_bounds = array<i64: 1, 32>}, {pipeline_mode = #tpu.pipeline_mode<synchronous>, transform_indices = @transform_2, window_bounds = array<i64: 1, 32>}, {pipeline_mode = #tpu.pipeline_mode<synchronous>, transform_indices = @transform_3, window_bounds = array<i64: 96, 32>}, {pipeline_mode = #tpu.pipeline_mode<synchronous>, transform_indices = @transform_4, window_bounds = array<i64: 96, 1>}, {pipeline_mode = #tpu.pipeline_mode<synchronous>, transform_indices = @transform_5, window_bounds = array<i64: 1, 32>}, {pipeline_mode = #tpu.pipeline_mode<synchronous>, transform_indices = @transform_6, window_bounds = array<i64: 1, 32>}, {pipeline_mode = #tpu.pipeline_mode<synchronous>, transform_indices = @transform_7, window_bounds = array<i64: 32, 64>}, {pipeline_mode = #tpu.pipeline_mode<synchronous>, transform_indices = @transform_8, window_bounds = array<i64: 1, 64>}, {pipeline_mode = #tpu.pipeline_mode<synchronous>, transform_indices = @transform_9, window_bounds = array<i64: 64, 32>}, {pipeline_mode = #tpu.pipeline_mode<synchronous>, transform_indices = @transform_10, window_bounds = array<i64: 1, 32>}, {transform_indices = @transform_11, window_bounds = array<i64: 1, 8, 32>}]} {
    %c0_i32 = arith.constant 0 : i32
    %0 = arith.cmpi eq, %arg1, %c0_i32 : i32
    %1 = arith.extui %0 : i1 to i32
    %c0_i32_0 = arith.constant 0 : i32
    %2 = arith.cmpi ne, %1, %c0_i32_0 : i32
    scf.if %2 {
      %c0_41 = arith.constant 0 : index
      %c0_42 = arith.constant 0 : index
      %c0_43 = arith.constant 0 : index
      %72 = vector.load %arg2[%c0_41, %c0_42, %c0_43] : memref<1x8x32xf32, #tpu.memory_space<vmem>>, vector<1x8x32xf32>
      %73 = vector.shape_cast %72 : vector<1x8x32xf32> to vector<8x32xf32>
      %c0_44 = arith.constant 0 : index
      %c0_45 = arith.constant 0 : index
      %74 = vector.load %arg3[%c0_44, %c0_45] : memref<1x32xf32, #tpu.memory_space<vmem>>, vector<1x32xf32>
      %c0_46 = arith.constant 0 : index
      %c0_47 = arith.constant 0 : index
      %75 = vector.load %arg4[%c0_46, %c0_47] : memref<1x32xf32, #tpu.memory_space<vmem>>, vector<1x32xf32>
      %cst_48 = arith.constant dense<0.000000e+00> : vector<8xf32>
      %76 = vector.multi_reduction <add>, %73, %cst_48 [1] : vector<8x32xf32> to vector<8xf32>
      %77 = vector.shape_cast %76 : vector<8xf32> to vector<8x1xf32>
      %cst_49 = arith.constant 3.200000e+01 : f32
      %78 = vector.broadcast %cst_49 : f32 to vector<8x1xf32>
      %79 = arith.divf %77, %78 : vector<8x1xf32>
      %80 = vector.broadcast %79 : vector<8x1xf32> to vector<8x32xf32>
      %81 = arith.subf %73, %80 : vector<8x32xf32>
      %82 = vector.broadcast %79 : vector<8x1xf32> to vector<8x32xf32>
      %83 = arith.subf %73, %82 : vector<8x32xf32>
      %84 = arith.mulf %81, %83 : vector<8x32xf32>
      %cst_50 = arith.constant dense<0.000000e+00> : vector<8xf32>
      %85 = vector.multi_reduction <add>, %84, %cst_50 [1] : vector<8x32xf32> to vector<8xf32>
      %86 = vector.shape_cast %85 : vector<8xf32> to vector<8x1xf32>
      %cst_51 = arith.constant 3.200000e+01 : f32
      %87 = vector.broadcast %cst_51 : f32 to vector<8x1xf32>
      %88 = arith.divf %86, %87 : vector<8x1xf32>
      %89 = vector.broadcast %79 : vector<8x1xf32> to vector<8x32xf32>
      %90 = arith.subf %73, %89 : vector<8x32xf32>
      %cst_52 = arith.constant 9.99999974E-6 : f32
      %91 = vector.broadcast %cst_52 : f32 to vector<8x1xf32>
      %92 = arith.addf %88, %91 : vector<8x1xf32>
      %93 = math.rsqrt %92 : vector<8x1xf32>
      %94 = vector.broadcast %93 : vector<8x1xf32> to vector<8x32xf32>
      %95 = arith.mulf %90, %94 : vector<8x32xf32>
      %96 = vector.broadcast %74 : vector<1x32xf32> to vector<8x32xf32>
      %97 = arith.mulf %95, %96 : vector<8x32xf32>
      %98 = vector.broadcast %75 : vector<1x32xf32> to vector<8x32xf32>
      %99 = arith.addf %97, %98 : vector<8x32xf32>
      %100 = tpu.transpose %99, [1, 0] : vector<8x32xf32> -> vector<32x8xf32>
      %c0_53 = arith.constant 0 : index
      %c0_54 = arith.constant 0 : index
      %101 = vector.load %arg5[%c0_53, %c0_54] : memref<96x32xf32, #tpu.memory_space<vmem>>, vector<96x32xf32>
      %cst_55 = arith.constant dense<0.000000e+00> : vector<96x8xf32>
      %102 = tpu.matmul %101, %100, %cst_55 {dimension_numbers = #tpu.dot_dimension_numbers<[1], [0], [0], [1], [0, 0, 1, 1], [], []>} : vector<96x32xf32>, vector<32x8xf32>, vector<96x8xf32> -> vector<96x8xf32>
      %c0_56 = arith.constant 0 : index
      %c0_57 = arith.constant 0 : index
      %103 = vector.load %arg6[%c0_56, %c0_57] : memref<96x1xf32, #tpu.memory_space<vmem>>, vector<96x1xf32>
      %104 = vector.broadcast %103 : vector<96x1xf32> to vector<96x8xf32>
      %105 = arith.addf %102, %104 : vector<96x8xf32>
      %106 = vector.extract_strided_slice %105 {offsets = [0, 0], sizes = [32, 8], strides = [1, 1]} : vector<96x8xf32> to vector<32x8xf32>
      %107 = vector.shape_cast %106 : vector<32x8xf32> to vector<4x8x8xf32>
      %108 = tpu.transpose %107, [0, 2, 1] : vector<4x8x8xf32> -> vector<4x8x8xf32>
      %c0_58 = arith.constant 0 : index
      %c0_59 = arith.constant 0 : index
      %c0_60 = arith.constant 0 : index
      %109 = vector.load %arg14[%c0_58, %c0_59, %c0_60] : memref<4x8x8xf32, #tpu.memory_space<vmem>>, vector<4x8x8xf32>
      tpu.vector_store %arg14[%c0_58, %c0_59, %c0_60], %108 {strides = array<i32>} : memref<4x8x8xf32, #tpu.memory_space<vmem>>, vector<4x8x8xf32>,
      %110 = vector.extract_strided_slice %105 {offsets = [32, 0], sizes = [32, 8], strides = [1, 1]} : vector<96x8xf32> to vector<32x8xf32>
      %111 = vector.shape_cast %110 : vector<32x8xf32> to vector<4x8x8xf32>
      %c0_61 = arith.constant 0 : index
      %c0_62 = arith.constant 0 : index
      %c0_63 = arith.constant 0 : index
      %112 = vector.load %arg15[%c0_61, %c0_62, %c0_63] : memref<4x8x8xf32, #tpu.memory_space<vmem>>, vector<4x8x8xf32>
      tpu.vector_store %arg15[%c0_61, %c0_62, %c0_63], %111 {strides = array<i32>} : memref<4x8x8xf32, #tpu.memory_space<vmem>>, vector<4x8x8xf32>,
      %113 = vector.extract_strided_slice %105 {offsets = [64, 0], sizes = [32, 8], strides = [1, 1]} : vector<96x8xf32> to vector<32x8xf32>
      %114 = vector.shape_cast %113 : vector<32x8xf32> to vector<4x8x8xf32>
      %c0_64 = arith.constant 0 : index
      %c0_65 = arith.constant 0 : index
      %c0_66 = arith.constant 0 : index
      %115 = vector.load %arg16[%c0_64, %c0_65, %c0_66] : memref<4x8x8xf32, #tpu.memory_space<vmem>>, vector<4x8x8xf32>
      tpu.vector_store %arg16[%c0_64, %c0_65, %c0_66], %114 {strides = array<i32>} : memref<4x8x8xf32, #tpu.memory_space<vmem>>, vector<4x8x8xf32>,
    } else {
    }
    %c0 = arith.constant 0 : index
    %c0_1 = arith.constant 0 : index
    %c0_2 = arith.constant 0 : index
    %3 = vector.load %arg2[%c0, %c0_1, %c0_2] : memref<1x8x32xf32, #tpu.memory_space<vmem>>, vector<1x8x32xf32>
    %4 = vector.shape_cast %3 : vector<1x8x32xf32> to vector<8x32xf32>
    %c0_3 = arith.constant 0 : index
    %c0_4 = arith.constant 0 : index
    %c0_5 = arith.constant 0 : index
    %5 = vector.load %arg14[%c0_3, %c0_4, %c0_5] : memref<4x8x8xf32, #tpu.memory_space<vmem>>, vector<4x8x8xf32>
    %c0_6 = arith.constant 0 : index
    %c0_7 = arith.constant 0 : index
    %c0_8 = arith.constant 0 : index
    %6 = vector.load %arg15[%c0_6, %c0_7, %c0_8] : memref<4x8x8xf32, #tpu.memory_space<vmem>>, vector<4x8x8xf32>
    %c0_9 = arith.constant 0 : index
    %c0_10 = arith.constant 0 : index
    %c0_11 = arith.constant 0 : index
    %7 = vector.load %arg16[%c0_9, %c0_10, %c0_11] : memref<4x8x8xf32, #tpu.memory_space<vmem>>, vector<4x8x8xf32>
    %cst = arith.constant dense<0.000000e+00> : vector<4x8x8xf32>
    %8 = tpu.matmul %5, %6, %cst {dimension_numbers = #tpu.dot_dimension_numbers<[2], [1], [1], [2], [0, 0, 0, 1, 1, 2], [0], [0]>} : vector<4x8x8xf32>, vector<4x8x8xf32>, vector<4x8x8xf32> -> vector<4x8x8xf32>
    %cst_12 = arith.constant 0.353553385 : f32
    %9 = vector.broadcast %cst_12 : f32 to vector<4x8x8xf32>
    %10 = arith.mulf %8, %9 : vector<4x8x8xf32>
    %cst_13 = arith.constant dense<0xFF800000> : vector<4x8xf32>
    %11 = vector.multi_reduction <maximumf>, %10, %cst_13 [2] : vector<4x8x8xf32> to vector<4x8xf32>
    %12 = vector.shape_cast %11 : vector<4x8xf32> to vector<4x8x1xf32>
    %13 = vector.broadcast %12 : vector<4x8x1xf32> to vector<4x8x8xf32>
    %14 = arith.subf %10, %13 : vector<4x8x8xf32>
    %15 = math.exp %14 : vector<4x8x8xf32>
    %cst_14 = arith.constant dense<0.000000e+00> : vector<4x8xf32>
    %16 = vector.multi_reduction <add>, %15, %cst_14 [2] : vector<4x8x8xf32> to vector<4x8xf32>
    %17 = vector.shape_cast %16 : vector<4x8xf32> to vector<4x8x1xf32>
    %18 = vector.broadcast %17 : vector<4x8x1xf32> to vector<4x8x8xf32>
    %19 = arith.divf %15, %18 : vector<4x8x8xf32>
    %cst_15 = arith.constant dense<0.000000e+00> : vector<4x8x8xf32>
    %20 = tpu.matmul %7, %19, %cst_15 {dimension_numbers = #tpu.dot_dimension_numbers<[2], [2], [1], [1], [0, 0, 0, 1, 1, 1], [0], [0]>} : vector<4x8x8xf32>, vector<4x8x8xf32>, vector<4x8x8xf32> -> vector<4x8x8xf32>
    %21 = vector.shape_cast %20 : vector<4x8x8xf32> to vector<32x8xf32>
    %22 = tpu.transpose %21, [1, 0] : vector<32x8xf32> -> vector<8x32xf32>
    %23 = arith.addf %4, %22 : vector<8x32xf32>
    %c0_16 = arith.constant 0 : index
    %c0_17 = arith.constant 0 : index
    %24 = vector.load %arg7[%c0_16, %c0_17] : memref<1x32xf32, #tpu.memory_space<vmem>>, vector<1x32xf32>
    %c0_18 = arith.constant 0 : index
    %c0_19 = arith.constant 0 : index
    %25 = vector.load %arg8[%c0_18, %c0_19] : memref<1x32xf32, #tpu.memory_space<vmem>>, vector<1x32xf32>
    %cst_20 = arith.constant dense<0.000000e+00> : vector<8xf32>
    %26 = vector.multi_reduction <add>, %23, %cst_20 [1] : vector<8x32xf32> to vector<8xf32>
    %27 = vector.shape_cast %26 : vector<8xf32> to vector<8x1xf32>
    %cst_21 = arith.constant 3.200000e+01 : f32
    %28 = vector.broadcast %cst_21 : f32 to vector<8x1xf32>
    %29 = arith.divf %27, %28 : vector<8x1xf32>
    %30 = vector.broadcast %29 : vector<8x1xf32> to vector<8x32xf32>
    %31 = arith.subf %23, %30 : vector<8x32xf32>
    %32 = vector.broadcast %29 : vector<8x1xf32> to vector<8x32xf32>
    %33 = arith.subf %23, %32 : vector<8x32xf32>
    %34 = arith.mulf %31, %33 : vector<8x32xf32>
    %cst_22 = arith.constant dense<0.000000e+00> : vector<8xf32>
    %35 = vector.multi_reduction <add>, %34, %cst_22 [1] : vector<8x32xf32> to vector<8xf32>
    %36 = vector.shape_cast %35 : vector<8xf32> to vector<8x1xf32>
    %cst_23 = arith.constant 3.200000e+01 : f32
    %37 = vector.broadcast %cst_23 : f32 to vector<8x1xf32>
    %38 = arith.divf %36, %37 : vector<8x1xf32>
    %39 = vector.broadcast %29 : vector<8x1xf32> to vector<8x32xf32>
    %40 = arith.subf %23, %39 : vector<8x32xf32>
    %cst_24 = arith.constant 9.99999974E-6 : f32
    %41 = vector.broadcast %cst_24 : f32 to vector<8x1xf32>
    %42 = arith.addf %38, %41 : vector<8x1xf32>
    %43 = math.rsqrt %42 : vector<8x1xf32>
    %44 = vector.broadcast %43 : vector<8x1xf32> to vector<8x32xf32>
    %45 = arith.mulf %40, %44 : vector<8x32xf32>
    %46 = vector.broadcast %24 : vector<1x32xf32> to vector<8x32xf32>
    %47 = arith.mulf %45, %46 : vector<8x32xf32>
    %48 = vector.broadcast %25 : vector<1x32xf32> to vector<8x32xf32>
    %49 = arith.addf %47, %48 : vector<8x32xf32>
    %c0_25 = arith.constant 0 : index
    %c0_26 = arith.constant 0 : index
    %50 = vector.load %arg9[%c0_25, %c0_26] : memref<32x64xf32, #tpu.memory_space<vmem>>, vector<32x64xf32>
    %cst_27 = arith.constant dense<0.000000e+00> : vector<8x64xf32>
    %51 = tpu.matmul %49, %50, %cst_27 {dimension_numbers = #tpu.dot_dimension_numbers<[1], [0], [0], [1], [0, 0, 1, 1], [], []>} : vector<8x32xf32>, vector<32x64xf32>, vector<8x64xf32> -> vector<8x64xf32>
    %c0_28 = arith.constant 0 : index
    %c0_29 = arith.constant 0 : index
    %52 = vector.load %arg10[%c0_28, %c0_29] : memref<1x64xf32, #tpu.memory_space<vmem>>, vector<1x64xf32>
    %53 = vector.broadcast %52 : vector<1x64xf32> to vector<8x64xf32>
    %54 = arith.addf %51, %53 : vector<8x64xf32>
    %cst_30 = arith.constant 5.000000e-01 : f32
    %55 = vector.broadcast %cst_30 : f32 to vector<8x64xf32>
    %56 = arith.mulf %55, %54 : vector<8x64xf32>
    %cst_31 = arith.constant 0.707106769 : f32
    %57 = vector.broadcast %cst_31 : f32 to vector<8x64xf32>
    %58 = arith.mulf %54, %57 : vector<8x64xf32>
    %59 = math.erf %58 : vector<8x64xf32>
    %cst_32 = arith.constant 1.000000e+00 : f32
    %60 = vector.broadcast %cst_32 : f32 to vector<8x64xf32>
    %61 = arith.addf %60, %59 : vector<8x64xf32>
    %62 = arith.mulf %56, %61 : vector<8x64xf32>
    %c0_33 = arith.constant 0 : index
    %c0_34 = arith.constant 0 : index
    %63 = vector.load %arg11[%c0_33, %c0_34] : memref<64x32xf32, #tpu.memory_space<vmem>>, vector<64x32xf32>
    %cst_35 = arith.constant dense<0.000000e+00> : vector<8x32xf32>
    %64 = tpu.matmul %62, %63, %cst_35 {dimension_numbers = #tpu.dot_dimension_numbers<[1], [0], [0], [1], [0, 0, 1, 1], [], []>} : vector<8x64xf32>, vector<64x32xf32>, vector<8x32xf32> -> vector<8x32xf32>
    %c0_36 = arith.constant 0 : index
    %c0_37 = arith.constant 0 : index
    %65 = vector.load %arg12[%c0_36, %c0_37] : memref<1x32xf32, #tpu.memory_space<vmem>>, vector<1x32xf32>
    %66 = vector.broadcast %65 : vector<1x32xf32> to vector<8x32xf32>
    %67 = arith.addf %64, %66 : vector<8x32xf32>
    %68 = arith.addf %23, %67 : vector<8x32xf32>
    %c0_38 = arith.constant 0 : index
    %c0_39 = arith.constant 0 : index
    %c0_40 = arith.constant 0 : index
    %69 = vector.load %arg13[%c0_38, %c0_39, %c0_40] : memref<1x8x32xf32, #tpu.memory_space<vmem>>, vector<1x8x32xf32>
    %70 = vector.shape_cast %69 : vector<1x8x32xf32> to vector<8x32xf32>
    %71 = vector.shape_cast %68 : vector<8x32xf32> to vector<1x8x32xf32>
    tpu.vector_store %arg13[%c0_38, %c0_39, %c0_40], %71 {strides = array<i32>} : memref<1x8x32xf32, #tpu.memory_space<vmem>>, vector<1x8x32xf32>,
    return
  }
  func.func @transform_0(%arg0: i32, %arg1: i32) -> (i32, i32, i32) {
    %c0_i32 = arith.constant 0 : i32
    %c0_i32_0 = arith.constant 0 : i32
    %c0_i32_1 = arith.constant 0 : i32
    return %arg0, %c0_i32, %c0_i32_0 : i32, i32, i32
  }
  func.func @transform_1(%arg0: i32, %arg1: i32) -> (i32, i32) {
    %c0_i32 = arith.constant 0 : i32
    %c0_i32_0 = arith.constant 0 : i32
    %c0_i32_1 = arith.constant 0 : i32
    return %c0_i32, %c0_i32_0 : i32, i32
  }
  func.func @transform_2(%arg0: i32, %arg1: i32) -> (i32, i32) {
    %c0_i32 = arith.constant 0 : i32
    %c0_i32_0 = arith.constant 0 : i32
    %c0_i32_1 = arith.constant 0 : i32
    return %c0_i32, %c0_i32_0 : i32, i32
  }
  func.func @transform_3(%arg0: i32, %arg1: i32) -> (i32, i32) {
    %c0_i32 = arith.constant 0 : i32
    %c0_i32_0 = arith.constant 0 : i32
    %c0_i32_1 = arith.constant 0 : i32
    return %c0_i32, %c0_i32_0 : i32, i32
  }
  func.func @transform_4(%arg0: i32, %arg1: i32) -> (i32, i32) {
    %c0_i32 = arith.constant 0 : i32
    %c0_i32_0 = arith.constant 0 : i32
    %c0_i32_1 = arith.constant 0 : i32
    return %c0_i32, %c0_i32_0 : i32, i32
  }
  func.func @transform_5(%arg0: i32, %arg1: i32) -> (i32, i32) {
    %c0_i32 = arith.constant 0 : i32
    %c0_i32_0 = arith.constant 0 : i32
    %c0_i32_1 = arith.constant 0 : i32
    return %c0_i32, %c0_i32_0 : i32, i32
  }
  func.func @transform_6(%arg0: i32, %arg1: i32) -> (i32, i32) {
    %c0_i32 = arith.constant 0 : i32
    %c0_i32_0 = arith.constant 0 : i32
    %c0_i32_1 = arith.constant 0 : i32
    return %c0_i32, %c0_i32_0 : i32, i32
  }
  func.func @transform_7(%arg0: i32, %arg1: i32) -> (i32, i32) {
    %c0_i32 = arith.constant 0 : i32
    %c0_i32_0 = arith.constant 0 : i32
    %c0_i32_1 = arith.constant 0 : i32
    return %c0_i32, %c0_i32_0 : i32, i32
  }
  func.func @transform_8(%arg0: i32, %arg1: i32) -> (i32, i32) {
    %c0_i32 = arith.constant 0 : i32
    %c0_i32_0 = arith.constant 0 : i32
    %c0_i32_1 = arith.constant 0 : i32
    return %c0_i32, %c0_i32_0 : i32, i32
  }
  func.func @transform_9(%arg0: i32, %arg1: i32) -> (i32, i32) {
    %c0_i32 = arith.constant 0 : i32
    %c0_i32_0 = arith.constant 0 : i32
    %c0_i32_1 = arith.constant 0 : i32
    return %c0_i32, %c0_i32_0 : i32, i32
  }
  func.func @transform_10(%arg0: i32, %arg1: i32) -> (i32, i32) {
    %c0_i32 = arith.constant 0 : i32
    %c0_i32_0 = arith.constant 0 : i32
    %c0_i32_1 = arith.constant 0 : i32
    return %c0_i32, %c0_i32_0 : i32, i32
  }
  func.func @transform_11(%arg0: i32, %arg1: i32) -> (i32, i32, i32) {
    %c0_i32 = arith.constant 0 : i32
    %c0_i32_0 = arith.constant 0 : i32
    return %arg0, %arg1, %c0_i32 : i32, i32, i32
  }
}

module attributes {stable_mosaic.version = 11 : i64} {
  func.func @encoder_kernel(%arg0: i32, %arg1: i32, %arg2: memref<1x8x32xf32, #tpu.memory_space<vmem>>, %arg3: memref<1x32xf32, #tpu.memory_space<vmem>>, %arg4: memref<1x32xf32, #tpu.memory_space<vmem>>, %arg5: memref<96x32xf32, #tpu.memory_space<vmem>>, %arg6: memref<96x1xf32, #tpu.memory_space<vmem>>, %arg7: memref<1x32xf32, #tpu.memory_space<vmem>>, %arg8: memref<1x32xf32, #tpu.memory_space<vmem>>, %arg9: memref<32x64xf32, #tpu.memory_space<vmem>>, %arg10: memref<1x64xf32, #tpu.memory_space<vmem>>, %arg11: memref<64x32xf32, #tpu.memory_space<vmem>>, %arg12: memref<1x32xf32, #tpu.memory_space<vmem>>, %arg13: memref<1x8x32xf32, #tpu.memory_space<vmem>>, %arg14: memref<8x32xf32, #tpu.memory_space<vmem>>) attributes {dimension_semantics = [#tpu.dimension_semantics<parallel>, #tpu.dimension_semantics<arbitrary>], iteration_bounds = array<i64: 2, 1>, scalar_prefetch = 0 : i64, scratch_operands = 1 : i64, tpu.core_type = #tpu.core_type<tc>, window_params = [{transform_indices = @transform_0, window_bounds = array<i64: 1, 8, 32>}, {pipeline_mode = #tpu.pipeline_mode<synchronous>, transform_indices = @transform_1, window_bounds = array<i64: 1, 32>}, {pipeline_mode = #tpu.pipeline_mode<synchronous>, transform_indices = @transform_2, window_bounds = array<i64: 1, 32>}, {pipeline_mode = #tpu.pipeline_mode<synchronous>, transform_indices = @transform_3, window_bounds = array<i64: 96, 32>}, {pipeline_mode = #tpu.pipeline_mode<synchronous>, transform_indices = @transform_4, window_bounds = array<i64: 96, 1>}, {pipeline_mode = #tpu.pipeline_mode<synchronous>, transform_indices = @transform_5, window_bounds = array<i64: 1, 32>}, {pipeline_mode = #tpu.pipeline_mode<synchronous>, transform_indices = @transform_6, window_bounds = array<i64: 1, 32>}, {pipeline_mode = #tpu.pipeline_mode<synchronous>, transform_indices = @transform_7, window_bounds = array<i64: 32, 64>}, {pipeline_mode = #tpu.pipeline_mode<synchronous>, transform_indices = @transform_8, window_bounds = array<i64: 1, 64>}, {pipeline_mode = #tpu.pipeline_mode<synchronous>, transform_indices = @transform_9, window_bounds = array<i64: 64, 32>}, {pipeline_mode = #tpu.pipeline_mode<synchronous>, transform_indices = @transform_10, window_bounds = array<i64: 1, 32>}, {transform_indices = @transform_11, window_bounds = array<i64: 1, 8, 32>}]} {
    %c0_i32 = arith.constant 0 : i32
    %0 = arith.cmpi eq, %arg1, %c0_i32 : i32
    %1 = arith.extui %0 : i1 to i32
    %c0_i32_0 = arith.constant 0 : i32
    %2 = arith.cmpi ne, %1, %c0_i32_0 : i32
    scf.if %2 {
      %c0_26 = arith.constant 0 : index
      %c0_27 = arith.constant 0 : index
      %c0_28 = arith.constant 0 : index
      %52 = vector.load %arg2[%c0_26, %c0_27, %c0_28] : memref<1x8x32xf32, #tpu.memory_space<vmem>>, vector<1x8x32xf32>
      %53 = vector.shape_cast %52 : vector<1x8x32xf32> to vector<8x32xf32>
      %c0_29 = arith.constant 0 : index
      %c0_30 = arith.constant 0 : index
      %54 = vector.load %arg3[%c0_29, %c0_30] : memref<1x32xf32, #tpu.memory_space<vmem>>, vector<1x32xf32>
      %c0_31 = arith.constant 0 : index
      %c0_32 = arith.constant 0 : index
      %55 = vector.load %arg4[%c0_31, %c0_32] : memref<1x32xf32, #tpu.memory_space<vmem>>, vector<1x32xf32>
      %cst_33 = arith.constant dense<0.000000e+00> : vector<8xf32>
      %56 = vector.multi_reduction <add>, %53, %cst_33 [1] : vector<8x32xf32> to vector<8xf32>
      %57 = vector.shape_cast %56 : vector<8xf32> to vector<8x1xf32>
      %cst_34 = arith.constant 3.200000e+01 : f32
      %58 = vector.broadcast %cst_34 : f32 to vector<8x1xf32>
      %59 = arith.divf %57, %58 : vector<8x1xf32>
      %60 = vector.broadcast %59 : vector<8x1xf32> to vector<8x32xf32>
      %61 = arith.subf %53, %60 : vector<8x32xf32>
      %62 = vector.broadcast %59 : vector<8x1xf32> to vector<8x32xf32>
      %63 = arith.subf %53, %62 : vector<8x32xf32>
      %64 = arith.mulf %61, %63 : vector<8x32xf32>
      %cst_35 = arith.constant dense<0.000000e+00> : vector<8xf32>
      %65 = vector.multi_reduction <add>, %64, %cst_35 [1] : vector<8x32xf32> to vector<8xf32>
      %66 = vector.shape_cast %65 : vector<8xf32> to vector<8x1xf32>
      %cst_36 = arith.constant 3.200000e+01 : f32
      %67 = vector.broadcast %cst_36 : f32 to vector<8x1xf32>
      %68 = arith.divf %66, %67 : vector<8x1xf32>
      %69 = vector.broadcast %59 : vector<8x1xf32> to vector<8x32xf32>
      %70 = arith.subf %53, %69 : vector<8x32xf32>
      %cst_37 = arith.constant 9.99999974E-6 : f32
      %71 = vector.broadcast %cst_37 : f32 to vector<8x1xf32>
      %72 = arith.addf %68, %71 : vector<8x1xf32>
      %73 = math.rsqrt %72 : vector<8x1xf32>
      %74 = vector.broadcast %73 : vector<8x1xf32> to vector<8x32xf32>
      %75 = arith.mulf %70, %74 : vector<8x32xf32>
      %76 = vector.broadcast %54 : vector<1x32xf32> to vector<8x32xf32>
      %77 = arith.mulf %75, %76 : vector<8x32xf32>
      %78 = vector.broadcast %55 : vector<1x32xf32> to vector<8x32xf32>
      %79 = arith.addf %77, %78 : vector<8x32xf32>
      %80 = tpu.transpose %79, [1, 0] : vector<8x32xf32> -> vector<32x8xf32>
      %c0_38 = arith.constant 0 : index
      %c0_39 = arith.constant 0 : index
      %81 = vector.load %arg5[%c0_38, %c0_39] : memref<96x32xf32, #tpu.memory_space<vmem>>, vector<96x32xf32>
      %cst_40 = arith.constant dense<0.000000e+00> : vector<96x8xf32>
      %82 = tpu.matmul %81, %80, %cst_40 {dimension_numbers = #tpu.dot_dimension_numbers<[1], [0], [0], [1], [0, 0, 1, 1], [], []>} : vector<96x32xf32>, vector<32x8xf32>, vector<96x8xf32> -> vector<96x8xf32>
      %c0_41 = arith.constant 0 : index
      %c0_42 = arith.constant 0 : index
      %83 = vector.load %arg6[%c0_41, %c0_42] : memref<96x1xf32, #tpu.memory_space<vmem>>, vector<96x1xf32>
      %84 = vector.broadcast %83 : vector<96x1xf32> to vector<96x8xf32>
      %85 = arith.addf %82, %84 : vector<96x8xf32>
      %86 = vector.extract_strided_slice %85 {offsets = [0, 0], sizes = [8, 8], strides = [1, 1]} : vector<96x8xf32> to vector<8x8xf32>
      %87 = tpu.transpose %86, [1, 0] : vector<8x8xf32> -> vector<8x8xf32>
      %88 = vector.extract_strided_slice %85 {offsets = [32, 0], sizes = [8, 8], strides = [1, 1]} : vector<96x8xf32> to vector<8x8xf32>
      %89 = vector.extract_strided_slice %85 {offsets = [64, 0], sizes = [8, 8], strides = [1, 1]} : vector<96x8xf32> to vector<8x8xf32>
      %cst_43 = arith.constant dense<0.000000e+00> : vector<8x8xf32>
      %90 = tpu.matmul %87, %88, %cst_43 {dimension_numbers = #tpu.dot_dimension_numbers<[1], [0], [0], [1], [0, 0, 1, 1], [], []>} : vector<8x8xf32>, vector<8x8xf32>, vector<8x8xf32> -> vector<8x8xf32>
      %cst_44 = arith.constant 0.353553385 : f32
      %91 = vector.broadcast %cst_44 : f32 to vector<8x8xf32>
      %92 = arith.mulf %90, %91 : vector<8x8xf32>
      %cst_45 = arith.constant dense<0xFF800000> : vector<8xf32>
      %93 = vector.multi_reduction <maximumf>, %92, %cst_45 [1] : vector<8x8xf32> to vector<8xf32>
      %94 = vector.shape_cast %93 : vector<8xf32> to vector<8x1xf32>
      %95 = vector.broadcast %94 : vector<8x1xf32> to vector<8x8xf32>
      %96 = arith.subf %92, %95 : vector<8x8xf32>
      %97 = math.exp %96 : vector<8x8xf32>
      %cst_46 = arith.constant dense<0.000000e+00> : vector<8xf32>
      %98 = vector.multi_reduction <add>, %97, %cst_46 [1] : vector<8x8xf32> to vector<8xf32>
      %99 = vector.shape_cast %98 : vector<8xf32> to vector<8x1xf32>
      %100 = vector.broadcast %99 : vector<8x1xf32> to vector<8x8xf32>
      %101 = arith.divf %97, %100 : vector<8x8xf32>
      %cst_47 = arith.constant dense<0.000000e+00> : vector<8x8xf32>
      %102 = tpu.matmul %89, %101, %cst_47 {dimension_numbers = #tpu.dot_dimension_numbers<[1], [1], [0], [0], [0, 0, 1, 0], [], []>} : vector<8x8xf32>, vector<8x8xf32>, vector<8x8xf32> -> vector<8x8xf32>
      %103 = vector.extract_strided_slice %85 {offsets = [8, 0], sizes = [8, 8], strides = [1, 1]} : vector<96x8xf32> to vector<8x8xf32>
      %104 = tpu.transpose %103, [1, 0] : vector<8x8xf32> -> vector<8x8xf32>
      %105 = vector.extract_strided_slice %85 {offsets = [40, 0], sizes = [8, 8], strides = [1, 1]} : vector<96x8xf32> to vector<8x8xf32>
      %106 = vector.extract_strided_slice %85 {offsets = [72, 0], sizes = [8, 8], strides = [1, 1]} : vector<96x8xf32> to vector<8x8xf32>
      %cst_48 = arith.constant dense<0.000000e+00> : vector<8x8xf32>
      %107 = tpu.matmul %104, %105, %cst_48 {dimension_numbers = #tpu.dot_dimension_numbers<[1], [0], [0], [1], [0, 0, 1, 1], [], []>} : vector<8x8xf32>, vector<8x8xf32>, vector<8x8xf32> -> vector<8x8xf32>
      %cst_49 = arith.constant 0.353553385 : f32
      %108 = vector.broadcast %cst_49 : f32 to vector<8x8xf32>
      %109 = arith.mulf %107, %108 : vector<8x8xf32>
      %cst_50 = arith.constant dense<0xFF800000> : vector<8xf32>
      %110 = vector.multi_reduction <maximumf>, %109, %cst_50 [1] : vector<8x8xf32> to vector<8xf32>
      %111 = vector.shape_cast %110 : vector<8xf32> to vector<8x1xf32>
      %112 = vector.broadcast %111 : vector<8x1xf32> to vector<8x8xf32>
      %113 = arith.subf %109, %112 : vector<8x8xf32>
      %114 = math.exp %113 : vector<8x8xf32>
      %cst_51 = arith.constant dense<0.000000e+00> : vector<8xf32>
      %115 = vector.multi_reduction <add>, %114, %cst_51 [1] : vector<8x8xf32> to vector<8xf32>
      %116 = vector.shape_cast %115 : vector<8xf32> to vector<8x1xf32>
      %117 = vector.broadcast %116 : vector<8x1xf32> to vector<8x8xf32>
      %118 = arith.divf %114, %117 : vector<8x8xf32>
      %cst_52 = arith.constant dense<0.000000e+00> : vector<8x8xf32>
      %119 = tpu.matmul %106, %118, %cst_52 {dimension_numbers = #tpu.dot_dimension_numbers<[1], [1], [0], [0], [0, 0, 1, 0], [], []>} : vector<8x8xf32>, vector<8x8xf32>, vector<8x8xf32> -> vector<8x8xf32>
      %120 = vector.extract_strided_slice %85 {offsets = [16, 0], sizes = [8, 8], strides = [1, 1]} : vector<96x8xf32> to vector<8x8xf32>
      %121 = tpu.transpose %120, [1, 0] : vector<8x8xf32> -> vector<8x8xf32>
      %122 = vector.extract_strided_slice %85 {offsets = [48, 0], sizes = [8, 8], strides = [1, 1]} : vector<96x8xf32> to vector<8x8xf32>
      %123 = vector.extract_strided_slice %85 {offsets = [80, 0], sizes = [8, 8], strides = [1, 1]} : vector<96x8xf32> to vector<8x8xf32>
      %cst_53 = arith.constant dense<0.000000e+00> : vector<8x8xf32>
      %124 = tpu.matmul %121, %122, %cst_53 {dimension_numbers = #tpu.dot_dimension_numbers<[1], [0], [0], [1], [0, 0, 1, 1], [], []>} : vector<8x8xf32>, vector<8x8xf32>, vector<8x8xf32> -> vector<8x8xf32>
      %cst_54 = arith.constant 0.353553385 : f32
      %125 = vector.broadcast %cst_54 : f32 to vector<8x8xf32>
      %126 = arith.mulf %124, %125 : vector<8x8xf32>
      %cst_55 = arith.constant dense<0xFF800000> : vector<8xf32>
      %127 = vector.multi_reduction <maximumf>, %126, %cst_55 [1] : vector<8x8xf32> to vector<8xf32>
      %128 = vector.shape_cast %127 : vector<8xf32> to vector<8x1xf32>
      %129 = vector.broadcast %128 : vector<8x1xf32> to vector<8x8xf32>
      %130 = arith.subf %126, %129 : vector<8x8xf32>
      %131 = math.exp %130 : vector<8x8xf32>
      %cst_56 = arith.constant dense<0.000000e+00> : vector<8xf32>
      %132 = vector.multi_reduction <add>, %131, %cst_56 [1] : vector<8x8xf32> to vector<8xf32>
      %133 = vector.shape_cast %132 : vector<8xf32> to vector<8x1xf32>
      %134 = vector.broadcast %133 : vector<8x1xf32> to vector<8x8xf32>
      %135 = arith.divf %131, %134 : vector<8x8xf32>
      %cst_57 = arith.constant dense<0.000000e+00> : vector<8x8xf32>
      %136 = tpu.matmul %123, %135, %cst_57 {dimension_numbers = #tpu.dot_dimension_numbers<[1], [1], [0], [0], [0, 0, 1, 0], [], []>} : vector<8x8xf32>, vector<8x8xf32>, vector<8x8xf32> -> vector<8x8xf32>
      %137 = vector.extract_strided_slice %85 {offsets = [24, 0], sizes = [8, 8], strides = [1, 1]} : vector<96x8xf32> to vector<8x8xf32>
      %138 = tpu.transpose %137, [1, 0] : vector<8x8xf32> -> vector<8x8xf32>
      %139 = vector.extract_strided_slice %85 {offsets = [56, 0], sizes = [8, 8], strides = [1, 1]} : vector<96x8xf32> to vector<8x8xf32>
      %140 = vector.extract_strided_slice %85 {offsets = [88, 0], sizes = [8, 8], strides = [1, 1]} : vector<96x8xf32> to vector<8x8xf32>
      %cst_58 = arith.constant dense<0.000000e+00> : vector<8x8xf32>
      %141 = tpu.matmul %138, %139, %cst_58 {dimension_numbers = #tpu.dot_dimension_numbers<[1], [0], [0], [1], [0, 0, 1, 1], [], []>} : vector<8x8xf32>, vector<8x8xf32>, vector<8x8xf32> -> vector<8x8xf32>
      %cst_59 = arith.constant 0.353553385 : f32
      %142 = vector.broadcast %cst_59 : f32 to vector<8x8xf32>
      %143 = arith.mulf %141, %142 : vector<8x8xf32>
      %cst_60 = arith.constant dense<0xFF800000> : vector<8xf32>
      %144 = vector.multi_reduction <maximumf>, %143, %cst_60 [1] : vector<8x8xf32> to vector<8xf32>
      %145 = vector.shape_cast %144 : vector<8xf32> to vector<8x1xf32>
      %146 = vector.broadcast %145 : vector<8x1xf32> to vector<8x8xf32>
      %147 = arith.subf %143, %146 : vector<8x8xf32>
      %148 = math.exp %147 : vector<8x8xf32>
      %cst_61 = arith.constant dense<0.000000e+00> : vector<8xf32>
      %149 = vector.multi_reduction <add>, %148, %cst_61 [1] : vector<8x8xf32> to vector<8xf32>
      %150 = vector.shape_cast %149 : vector<8xf32> to vector<8x1xf32>
      %151 = vector.broadcast %150 : vector<8x1xf32> to vector<8x8xf32>
      %152 = arith.divf %148, %151 : vector<8x8xf32>
      %cst_62 = arith.constant dense<0.000000e+00> : vector<8x8xf32>
      %153 = tpu.matmul %140, %152, %cst_62 {dimension_numbers = #tpu.dot_dimension_numbers<[1], [1], [0], [0], [0, 0, 1, 0], [], []>} : vector<8x8xf32>, vector<8x8xf32>, vector<8x8xf32> -> vector<8x8xf32>
      %154 = tpu.concatenate %102, %119, %136, %153 in 0 : vector<8x8xf32>, vector<8x8xf32>, vector<8x8xf32>, vector<8x8xf32> -> vector<32x8xf32>
      %c0_63 = arith.constant 0 : index
      %c0_64 = arith.constant 0 : index
      %c0_65 = arith.constant 0 : index
      %155 = vector.load %arg2[%c0_63, %c0_64, %c0_65] : memref<1x8x32xf32, #tpu.memory_space<vmem>>, vector<1x8x32xf32>
      %156 = vector.shape_cast %155 : vector<1x8x32xf32> to vector<8x32xf32>
      %157 = tpu.transpose %154, [1, 0] : vector<32x8xf32> -> vector<8x32xf32>
      %158 = arith.addf %156, %157 : vector<8x32xf32>
      %c0_66 = arith.constant 0 : index
      %c0_67 = arith.constant 0 : index
      %159 = vector.load %arg14[%c0_66, %c0_67] : memref<8x32xf32, #tpu.memory_space<vmem>>, vector<8x32xf32>
      tpu.vector_store %arg14[%c0_66, %c0_67], %158 {strides = array<i32>} : memref<8x32xf32, #tpu.memory_space<vmem>>, vector<8x32xf32>,
    } else {
    }
    %c0 = arith.constant 0 : index
    %c0_1 = arith.constant 0 : index
    %3 = vector.load %arg14[%c0, %c0_1] : memref<8x32xf32, #tpu.memory_space<vmem>>, vector<8x32xf32>
    %c0_2 = arith.constant 0 : index
    %c0_3 = arith.constant 0 : index
    %4 = vector.load %arg7[%c0_2, %c0_3] : memref<1x32xf32, #tpu.memory_space<vmem>>, vector<1x32xf32>
    %c0_4 = arith.constant 0 : index
    %c0_5 = arith.constant 0 : index
    %5 = vector.load %arg8[%c0_4, %c0_5] : memref<1x32xf32, #tpu.memory_space<vmem>>, vector<1x32xf32>
    %cst = arith.constant dense<0.000000e+00> : vector<8xf32>
    %6 = vector.multi_reduction <add>, %3, %cst [1] : vector<8x32xf32> to vector<8xf32>
    %7 = vector.shape_cast %6 : vector<8xf32> to vector<8x1xf32>
    %cst_6 = arith.constant 3.200000e+01 : f32
    %8 = vector.broadcast %cst_6 : f32 to vector<8x1xf32>
    %9 = arith.divf %7, %8 : vector<8x1xf32>
    %10 = vector.broadcast %9 : vector<8x1xf32> to vector<8x32xf32>
    %11 = arith.subf %3, %10 : vector<8x32xf32>
    %12 = vector.broadcast %9 : vector<8x1xf32> to vector<8x32xf32>
    %13 = arith.subf %3, %12 : vector<8x32xf32>
    %14 = arith.mulf %11, %13 : vector<8x32xf32>
    %cst_7 = arith.constant dense<0.000000e+00> : vector<8xf32>
    %15 = vector.multi_reduction <add>, %14, %cst_7 [1] : vector<8x32xf32> to vector<8xf32>
    %16 = vector.shape_cast %15 : vector<8xf32> to vector<8x1xf32>
    %cst_8 = arith.constant 3.200000e+01 : f32
    %17 = vector.broadcast %cst_8 : f32 to vector<8x1xf32>
    %18 = arith.divf %16, %17 : vector<8x1xf32>
    %19 = vector.broadcast %9 : vector<8x1xf32> to vector<8x32xf32>
    %20 = arith.subf %3, %19 : vector<8x32xf32>
    %cst_9 = arith.constant 9.99999974E-6 : f32
    %21 = vector.broadcast %cst_9 : f32 to vector<8x1xf32>
    %22 = arith.addf %18, %21 : vector<8x1xf32>
    %23 = math.rsqrt %22 : vector<8x1xf32>
    %24 = vector.broadcast %23 : vector<8x1xf32> to vector<8x32xf32>
    %25 = arith.mulf %20, %24 : vector<8x32xf32>
    %26 = vector.broadcast %4 : vector<1x32xf32> to vector<8x32xf32>
    %27 = arith.mulf %25, %26 : vector<8x32xf32>
    %28 = vector.broadcast %5 : vector<1x32xf32> to vector<8x32xf32>
    %29 = arith.addf %27, %28 : vector<8x32xf32>
    %c0_10 = arith.constant 0 : index
    %c0_11 = arith.constant 0 : index
    %30 = vector.load %arg9[%c0_10, %c0_11] : memref<32x64xf32, #tpu.memory_space<vmem>>, vector<32x64xf32>
    %cst_12 = arith.constant dense<0.000000e+00> : vector<8x64xf32>
    %31 = tpu.matmul %29, %30, %cst_12 {dimension_numbers = #tpu.dot_dimension_numbers<[1], [0], [0], [1], [0, 0, 1, 1], [], []>} : vector<8x32xf32>, vector<32x64xf32>, vector<8x64xf32> -> vector<8x64xf32>
    %c0_13 = arith.constant 0 : index
    %c0_14 = arith.constant 0 : index
    %32 = vector.load %arg10[%c0_13, %c0_14] : memref<1x64xf32, #tpu.memory_space<vmem>>, vector<1x64xf32>
    %33 = vector.broadcast %32 : vector<1x64xf32> to vector<8x64xf32>
    %34 = arith.addf %31, %33 : vector<8x64xf32>
    %cst_15 = arith.constant 5.000000e-01 : f32
    %35 = vector.broadcast %cst_15 : f32 to vector<8x64xf32>
    %36 = arith.mulf %35, %34 : vector<8x64xf32>
    %cst_16 = arith.constant 0.707106769 : f32
    %37 = vector.broadcast %cst_16 : f32 to vector<8x64xf32>
    %38 = arith.mulf %34, %37 : vector<8x64xf32>
    %39 = math.erf %38 : vector<8x64xf32>
    %cst_17 = arith.constant 1.000000e+00 : f32
    %40 = vector.broadcast %cst_17 : f32 to vector<8x64xf32>
    %41 = arith.addf %40, %39 : vector<8x64xf32>
    %42 = arith.mulf %36, %41 : vector<8x64xf32>
    %c0_18 = arith.constant 0 : index
    %c0_19 = arith.constant 0 : index
    %43 = vector.load %arg11[%c0_18, %c0_19] : memref<64x32xf32, #tpu.memory_space<vmem>>, vector<64x32xf32>
    %cst_20 = arith.constant dense<0.000000e+00> : vector<8x32xf32>
    %44 = tpu.matmul %42, %43, %cst_20 {dimension_numbers = #tpu.dot_dimension_numbers<[1], [0], [0], [1], [0, 0, 1, 1], [], []>} : vector<8x64xf32>, vector<64x32xf32>, vector<8x32xf32> -> vector<8x32xf32>
    %c0_21 = arith.constant 0 : index
    %c0_22 = arith.constant 0 : index
    %45 = vector.load %arg12[%c0_21, %c0_22] : memref<1x32xf32, #tpu.memory_space<vmem>>, vector<1x32xf32>
    %46 = vector.broadcast %45 : vector<1x32xf32> to vector<8x32xf32>
    %47 = arith.addf %44, %46 : vector<8x32xf32>
    %48 = arith.addf %3, %47 : vector<8x32xf32>
    %c0_23 = arith.constant 0 : index
    %c0_24 = arith.constant 0 : index
    %c0_25 = arith.constant 0 : index
    %49 = vector.load %arg13[%c0_23, %c0_24, %c0_25] : memref<1x8x32xf32, #tpu.memory_space<vmem>>, vector<1x8x32xf32>
    %50 = vector.shape_cast %49 : vector<1x8x32xf32> to vector<8x32xf32>
    %51 = vector.shape_cast %48 : vector<8x32xf32> to vector<1x8x32xf32>
    tpu.vector_store %arg13[%c0_23, %c0_24, %c0_25], %51 {strides = array<i32>} : memref<1x8x32xf32, #tpu.memory_space<vmem>>, vector<1x8x32xf32>,
    return
  }
  func.func @transform_0(%arg0: i32, %arg1: i32) -> (i32, i32, i32) {
    %c0_i32 = arith.constant 0 : i32
    %c0_i32_0 = arith.constant 0 : i32
    %c0_i32_1 = arith.constant 0 : i32
    return %arg0, %c0_i32, %c0_i32_0 : i32, i32, i32
  }
  func.func @transform_1(%arg0: i32, %arg1: i32) -> (i32, i32) {
    %c0_i32 = arith.constant 0 : i32
    %c0_i32_0 = arith.constant 0 : i32
    %c0_i32_1 = arith.constant 0 : i32
    return %c0_i32, %c0_i32_0 : i32, i32
  }
  func.func @transform_2(%arg0: i32, %arg1: i32) -> (i32, i32) {
    %c0_i32 = arith.constant 0 : i32
    %c0_i32_0 = arith.constant 0 : i32
    %c0_i32_1 = arith.constant 0 : i32
    return %c0_i32, %c0_i32_0 : i32, i32
  }
  func.func @transform_3(%arg0: i32, %arg1: i32) -> (i32, i32) {
    %c0_i32 = arith.constant 0 : i32
    %c0_i32_0 = arith.constant 0 : i32
    %c0_i32_1 = arith.constant 0 : i32
    return %c0_i32, %c0_i32_0 : i32, i32
  }
  func.func @transform_4(%arg0: i32, %arg1: i32) -> (i32, i32) {
    %c0_i32 = arith.constant 0 : i32
    %c0_i32_0 = arith.constant 0 : i32
    %c0_i32_1 = arith.constant 0 : i32
    return %c0_i32, %c0_i32_0 : i32, i32
  }
  func.func @transform_5(%arg0: i32, %arg1: i32) -> (i32, i32) {
    %c0_i32 = arith.constant 0 : i32
    %c0_i32_0 = arith.constant 0 : i32
    %c0_i32_1 = arith.constant 0 : i32
    return %c0_i32, %c0_i32_0 : i32, i32
  }
  func.func @transform_6(%arg0: i32, %arg1: i32) -> (i32, i32) {
    %c0_i32 = arith.constant 0 : i32
    %c0_i32_0 = arith.constant 0 : i32
    %c0_i32_1 = arith.constant 0 : i32
    return %c0_i32, %c0_i32_0 : i32, i32
  }
  func.func @transform_7(%arg0: i32, %arg1: i32) -> (i32, i32) {
    %c0_i32 = arith.constant 0 : i32
    %c0_i32_0 = arith.constant 0 : i32
    %c0_i32_1 = arith.constant 0 : i32
    return %c0_i32, %c0_i32_0 : i32, i32
  }
  func.func @transform_8(%arg0: i32, %arg1: i32) -> (i32, i32) {
    %c0_i32 = arith.constant 0 : i32
    %c0_i32_0 = arith.constant 0 : i32
    %c0_i32_1 = arith.constant 0 : i32
    return %c0_i32, %c0_i32_0 : i32, i32
  }
  func.func @transform_9(%arg0: i32, %arg1: i32) -> (i32, i32) {
    %c0_i32 = arith.constant 0 : i32
    %c0_i32_0 = arith.constant 0 : i32
    %c0_i32_1 = arith.constant 0 : i32
    return %c0_i32, %c0_i32_0 : i32, i32
  }
  func.func @transform_10(%arg0: i32, %arg1: i32) -> (i32, i32) {
    %c0_i32 = arith.constant 0 : i32
    %c0_i32_0 = arith.constant 0 : i32
    %c0_i32_1 = arith.constant 0 : i32
    return %c0_i32, %c0_i32_0 : i32, i32
  }
  func.func @transform_11(%arg0: i32, %arg1: i32) -> (i32, i32, i32) {
    %c0_i32 = arith.constant 0 : i32
    %c0_i32_0 = arith.constant 0 : i32
    return %arg0, %arg1, %c0_i32 : i32, i32, i32
  }
}

</mosaic_0001>

<llo_original>
// kernel: tpu_custom_call.1
$region0: #{tpu_custom_call.1}
  #allocation0 [shape = 'u32[]', space=smem, size = 0x4, offset = 0x4, fixed_abs, tag = 'smem constant byte address 0x4 - core index']
  #allocation1 [shape = 'u32[72,128]{1,0:T(1,128)}', space=vmem, size = 0x9000, scoped, tag = 'internal scratch']
  #allocation2 [shape = 'f32[4,8,8]{2,1,0:T(8,128)}', space=vmem, size = 0x4000, scoped, tag = 'scratch operand']
  #allocation3 [shape = 'f32[4,8,8]{2,1,0:T(8,128)}', space=vmem, size = 0x4000, scoped, tag = 'scratch operand']
  #allocation4 [shape = 'f32[4,8,8]{2,1,0:T(8,128)}', space=vmem, size = 0x4000, scoped, tag = 'scratch operand']
  %s0 = inlined_call_operand.vmem [shape: f32[2,8,32], index: 0, kind: input, shape index: {}]
  %s1 = inlined_call_operand.vmem [shape: f32[1,32], index: 1, kind: input, shape index: {}]
  %s2 = inlined_call_operand.vmem [shape: f32[1,32], index: 2, kind: input, shape index: {}]
  %s3 = inlined_call_operand.vmem [shape: f32[96,32], index: 3, kind: input, shape index: {}]
  %s4 = inlined_call_operand.vmem [shape: f32[96,1], index: 4, kind: input, shape index: {}]
  %s5 = inlined_call_operand.vmem [shape: f32[1,32], index: 5, kind: input, shape index: {}]
  %s6 = inlined_call_operand.vmem [shape: f32[1,32], index: 6, kind: input, shape index: {}]
  %s7 = inlined_call_operand.vmem [shape: f32[32,64], index: 7, kind: input, shape index: {}]
  %s8 = inlined_call_operand.vmem [shape: f32[1,64], index: 8, kind: input, shape index: {}]
  %s9 = inlined_call_operand.vmem [shape: f32[64,32], index: 9, kind: input, shape index: {}]
  %s10 = inlined_call_operand.vmem [shape: f32[1,32], index: 10, kind: input, shape index: {}]
  %s11 = inlined_call_operand.hbm [shape: f32[2,8,32], index: 11, kind: output, shape index: {}]
  %s12 = sld [smem:[#allocation0]]
  $region81: #{tpu_custom_call.1} parent=0
    _
  %s14 = ssub.s32 1, %s12
  %s15 = scalar_select 0, %s14, %s12
  $region1: #{tpu_custom_call.1} parent=0
    #allocation5 [shape = 'u8[8192]{0}', space=vmem, size = 0x2000, scoped, tag = 'output window, operand 0']
    #allocation6 [shape = 's32[2]{0}', space=sflag, size = 0x8, scoped, tag = 'scoped memory for tpu_custom_call.1']
    %16 = vsyncpa [#allocation6], 0
    %s17 = scalar_lea.sflag [#allocation6], 1
    %18 = vsyncpa %s17, 0
    loop: start=0, step=1, limit=4
    $region2: #{tpu_custom_call.1} parent=1 // loop_pre_header
      _
    $region3: #{tpu_custom_call.1} parent=1 // loop_header
      %s20 = sphi 0, %s24
      %p21 = scmp.ge.s32.totalorder %s20, 4
      %s27 = sphi 0, %s39
      %s28 = sphi 0, %s35
      %s29 = sphi 0, %s27
      %s30 = sphi 0, %s28
      %s31 = sphi 0, %s29
      %s32 = sphi 0, %s30
      %s42 = sphi 0, %s44
      %s45 = sphi 0, %s42
      %s46 = sphi 0, %s45
      %s62 = sphi 0, %s46
      %s66 = sphi 0, %s66
      %s68 = sphi 0, %s66
      %s69 = sphi 0, %s68
      %s83 = sphi 0, %s69
      %s87 = sphi 0, %s87
      %s89 = sphi 0, %s87
      %s90 = sphi 0, %s89
      %s104 = sphi 0, %s90
      %s108 = sphi 0, %s108
      %s110 = sphi 0, %s108
      %s111 = sphi 0, %s110
      %s125 = sphi 0, %s111
      %s129 = sphi 0, %s129
      %s131 = sphi 0, %s129
      %s132 = sphi 0, %s131
      %s146 = sphi 0, %s132
      %s150 = sphi 0, %s150
      %s152 = sphi 0, %s150
      %s153 = sphi 0, %s152
      %s167 = sphi 0, %s153
      %s171 = sphi 0, %s171
      %s173 = sphi 0, %s171
      %s174 = sphi 0, %s173
      %s188 = sphi 0, %s174
      %s192 = sphi 0, %s192
      %s194 = sphi 0, %s192
      %s195 = sphi 0, %s194
      %s209 = sphi 0, %s195
      %s213 = sphi 0, %s213
      %s215 = sphi 0, %s213
      %s216 = sphi 0, %s215
      %s230 = sphi 0, %s216
      %s234 = sphi 0, %s234
      %s236 = sphi 0, %s234
      %s237 = sphi 0, %s236
      %s251 = sphi 0, %s237
      %s255 = sphi 0, %s255
      %s257 = sphi 0, %s255
      %s258 = sphi 0, %s257
      %s272 = sphi 0, %s258
      %s280 = sphi 0, %s282
      %s283 = sphi 0, %s280
      %s284 = sphi 0, %s283
      %s300 = sphi 0, %s284
    $region4: #{tpu_custom_call.1} parent=1 // loop_header_branch
      %23 = sbr.rel (%p21) target = $region8
    $region5: #{tpu_custom_call.1} parent=1 // loop_body
      %s25 = ssub.s32 %s20, 1
      %s26 = ssub.s32 %s20, 2
      %s33 = sadd.s32 1, %s28
      %p34 = scmp.ge.s32.totalorder %s33, 1
      %s35 = scalar_select %p34, 0, %s33
      %s36 = sadd.s32 1, %s27
      %s37 = scalar_select %p34, %s36, %s27
      %p38 = scmp.ge.s32.totalorder %s37, 2
      %s39 = scalar_select %p38, 0, %s37
      %s40 = ssub.s32 %s27, %s39
      %p41 = scmp.eq.s32.totalorder %s40, 0
      %s43 = sadd.s32 %s42, 1
      %s44 = scalar_select %p41, %s42, %s43
      %p47 = pneg %p41
      %p48 = scmp.eq.s32.totalorder %s20, 1
      %p49 = por %p47, %p48
      %p50 = scmp.ne.s32.totalorder %s42, %s45
      %p51 = scmp.eq.s32.totalorder %s20, 0
      %p52 = por %p50, %p51
      %p53 = scmp.ne.s32.totalorder %s42, %s45
      %p54 = scmp.eq.s32.totalorder %s25, 1
      %p55 = por %p53, %p54
      %p56 = scmp.ne.s32.totalorder %s45, %s46
      %p57 = scmp.eq.s32.totalorder %s25, 0
      %p58 = por %p56, %p57
      %p59 = scmp.ne.s32.totalorder %s45, %s46
      %p60 = scmp.eq.s32.totalorder %s26, 1
      %p61 = por %p59, %p60
      %p63 = scmp.ne.s32.totalorder %s46, %s62
      %p64 = scmp.eq.s32.totalorder %s26, 0
      %p65 = por %p63, %p64
      %s67 = sadd.s32 %s66, 1
      %p70 = scmp.eq.s32.totalorder %s20, 1
      %p71 = scmp.ne.s32.totalorder %s66, %s68
      %p72 = scmp.eq.s32.totalorder %s20, 0
      %p73 = por %p71, %p72
      %p74 = scmp.ne.s32.totalorder %s66, %s68
      %p75 = scmp.eq.s32.totalorder %s25, 1
      %p76 = por %p74, %p75
      %p77 = scmp.ne.s32.totalorder %s68, %s69
      %p78 = scmp.eq.s32.totalorder %s25, 0
      %p79 = por %p77, %p78
      %p80 = scmp.ne.s32.totalorder %s68, %s69
      %p81 = scmp.eq.s32.totalorder %s26, 1
      %p82 = por %p80, %p81
      %p84 = scmp.ne.s32.totalorder %s69, %s83
      %p85 = scmp.eq.s32.totalorder %s26, 0
      %p86 = por %p84, %p85
      %s88 = sadd.s32 %s87, 1
      %p91 = scmp.eq.s32.totalorder %s20, 1
      %p92 = scmp.ne.s32.totalorder %s87, %s89
      %p93 = scmp.eq.s32.totalorder %s20, 0
      %p94 = por %p92, %p93
      %p95 = scmp.ne.s32.totalorder %s87, %s89
      %p96 = scmp.eq.s32.totalorder %s25, 1
      %p97 = por %p95, %p96
      %p98 = scmp.ne.s32.totalorder %s89, %s90
      %p99 = scmp.eq.s32.totalorder %s25, 0
      %p100 = por %p98, %p99
      %p101 = scmp.ne.s32.totalorder %s89, %s90
      %p102 = scmp.eq.s32.totalorder %s26, 1
      %p103 = por %p101, %p102
      %p105 = scmp.ne.s32.totalorder %s90, %s104
      %p106 = scmp.eq.s32.totalorder %s26, 0
      %p107 = por %p105, %p106
      %s109 = sadd.s32 %s108, 1
      %p112 = scmp.eq.s32.totalorder %s20, 1
      %p113 = scmp.ne.s32.totalorder %s108, %s110
      %p114 = scmp.eq.s32.totalorder %s20, 0
      %p115 = por %p113, %p114
      %p116 = scmp.ne.s32.totalorder %s108, %s110
      %p117 = scmp.eq.s32.totalorder %s25, 1
      %p118 = por %p116, %p117
      %p119 = scmp.ne.s32.totalorder %s110, %s111
      %p120 = scmp.eq.s32.totalorder %s25, 0
      %p121 = por %p119, %p120
      %p122 = scmp.ne.s32.totalorder %s110, %s111
      %p123 = scmp.eq.s32.totalorder %s26, 1
      %p124 = por %p122, %p123
      %p126 = scmp.ne.s32.totalorder %s111, %s125
      %p127 = scmp.eq.s32.totalorder %s26, 0
      %p128 = por %p126, %p127
      %s130 = sadd.s32 %s129, 1
      %p133 = scmp.eq.s32.totalorder %s20, 1
      %p134 = scmp.ne.s32.totalorder %s129, %s131
      %p135 = scmp.eq.s32.totalorder %s20, 0
      %p136 = por %p134, %p135
      %p137 = scmp.ne.s32.totalorder %s129, %s131
      %p138 = scmp.eq.s32.totalorder %s25, 1
      %p139 = por %p137, %p138
      %p140 = scmp.ne.s32.totalorder %s131, %s132
      %p141 = scmp.eq.s32.totalorder %s25, 0
      %p142 = por %p140, %p141
      %p143 = scmp.ne.s32.totalorder %s131, %s132
      %p144 = scmp.eq.s32.totalorder %s26, 1
      %p145 = por %p143, %p144
      %p147 = scmp.ne.s32.totalorder %s132, %s146
      %p148 = scmp.eq.s32.totalorder %s26, 0
      %p149 = por %p147, %p148
      %s151 = sadd.s32 %s150, 1
      %p154 = scmp.eq.s32.totalorder %s20, 1
      %p155 = scmp.ne.s32.totalorder %s150, %s152
      %p156 = scmp.eq.s32.totalorder %s20, 0
      %p157 = por %p155, %p156
      %p158 = scmp.ne.s32.totalorder %s150, %s152
      %p159 = scmp.eq.s32.totalorder %s25, 1
      %p160 = por %p158, %p159
      %p161 = scmp.ne.s32.totalorder %s152, %s153
      %p162 = scmp.eq.s32.totalorder %s25, 0
      %p163 = por %p161, %p162
      %p164 = scmp.ne.s32.totalorder %s152, %s153
      %p165 = scmp.eq.s32.totalorder %s26, 1
      %p166 = por %p164, %p165
      %p168 = scmp.ne.s32.totalorder %s153, %s167
      %p169 = scmp.eq.s32.totalorder %s26, 0
      %p170 = por %p168, %p169
      %s172 = sadd.s32 %s171, 1
      %p175 = scmp.eq.s32.totalorder %s20, 1
      %p176 = scmp.ne.s32.totalorder %s171, %s173
      %p177 = scmp.eq.s32.totalorder %s20, 0
      %p178 = por %p176, %p177
      %p179 = scmp.ne.s32.totalorder %s171, %s173
      %p180 = scmp.eq.s32.totalorder %s25, 1
      %p181 = por %p179, %p180
      %p182 = scmp.ne.s32.totalorder %s173, %s174
      %p183 = scmp.eq.s32.totalorder %s25, 0
      %p184 = por %p182, %p183
      %p185 = scmp.ne.s32.totalorder %s173, %s174
      %p186 = scmp.eq.s32.totalorder %s26, 1
      %p187 = por %p185, %p186
      %p189 = scmp.ne.s32.totalorder %s174, %s188
      %p190 = scmp.eq.s32.totalorder %s26, 0
      %p191 = por %p189, %p190
      %s193 = sadd.s32 %s192, 1
      %p196 = scmp.eq.s32.totalorder %s20, 1
      %p197 = scmp.ne.s32.totalorder %s192, %s194
      %p198 = scmp.eq.s32.totalorder %s20, 0
      %p199 = por %p197, %p198
      %p200 = scmp.ne.s32.totalorder %s192, %s194
      %p201 = scmp.eq.s32.totalorder %s25, 1
      %p202 = por %p200, %p201
      %p203 = scmp.ne.s32.totalorder %s194, %s195
      %p204 = scmp.eq.s32.totalorder %s25, 0
      %p205 = por %p203, %p204
      %p206 = scmp.ne.s32.totalorder %s194, %s195
      %p207 = scmp.eq.s32.totalorder %s26, 1
      %p208 = por %p206, %p207
      %p210 = scmp.ne.s32.totalorder %s195, %s209
      %p211 = scmp.eq.s32.totalorder %s26, 0
      %p212 = por %p210, %p211
      %s214 = sadd.s32 %s213, 1
      %p217 = scmp.eq.s32.totalorder %s20, 1
      %p218 = scmp.ne.s32.totalorder %s213, %s215
      %p219 = scmp.eq.s32.totalorder %s20, 0
      %p220 = por %p218, %p219
      %p221 = scmp.ne.s32.totalorder %s213, %s215
      %p222 = scmp.eq.s32.totalorder %s25, 1
      %p223 = por %p221, %p222
      %p224 = scmp.ne.s32.totalorder %s215, %s216
      %p225 = scmp.eq.s32.totalorder %s25, 0
      %p226 = por %p224, %p225
      %p227 = scmp.ne.s32.totalorder %s215, %s216
      %p228 = scmp.eq.s32.totalorder %s26, 1
      %p229 = por %p227, %p228
      %p231 = scmp.ne.s32.totalorder %s216, %s230
      %p232 = scmp.eq.s32.totalorder %s26, 0
      %p233 = por %p231, %p232
      %s235 = sadd.s32 %s234, 1
      %p238 = scmp.eq.s32.totalorder %s20, 1
      %p239 = scmp.ne.s32.totalorder %s234, %s236
      %p240 = scmp.eq.s32.totalorder %s20, 0
      %p241 = por %p239, %p240
      %p242 = scmp.ne.s32.totalorder %s234, %s236
      %p243 = scmp.eq.s32.totalorder %s25, 1
      %p244 = por %p242, %p243
      %p245 = scmp.ne.s32.totalorder %s236, %s237
      %p246 = scmp.eq.s32.totalorder %s25, 0
      %p247 = por %p245, %p246
      %p248 = scmp.ne.s32.totalorder %s236, %s237
      %p249 = scmp.eq.s32.totalorder %s26, 1
      %p250 = por %p248, %p249
      %p252 = scmp.ne.s32.totalorder %s237, %s251
      %p253 = scmp.eq.s32.totalorder %s26, 0
      %p254 = por %p252, %p253
      %s256 = sadd.s32 %s255, 1
      %p259 = scmp.eq.s32.totalorder %s20, 1
      %p260 = scmp.ne.s32.totalorder %s255, %s257
      %p261 = scmp.eq.s32.totalorder %s20, 0
      %p262 = por %p260, %p261
      %p263 = scmp.ne.s32.totalorder %s255, %s257
      %p264 = scmp.eq.s32.totalorder %s25, 1
      %p265 = por %p263, %p264
      %p266 = scmp.ne.s32.totalorder %s257, %s258
      %p267 = scmp.eq.s32.totalorder %s25, 0
      %p268 = por %p266, %p267
      %p269 = scmp.ne.s32.totalorder %s257, %s258
      %p270 = scmp.eq.s32.totalorder %s26, 1
      %p271 = por %p269, %p270
      %p273 = scmp.ne.s32.totalorder %s258, %s272
      %p274 = scmp.eq.s32.totalorder %s26, 0
      %p275 = por %p273, %p274
      %s276 = ssub.s32 %s27, %s39
      %s277 = ssub.s32 %s28, %s35
      %s278 = sor.u32 %s276, %s277
      %p279 = scmp.eq.s32.totalorder %s278, 0
      %s281 = sadd.s32 %s280, 1
      %s282 = scalar_select %p279, %s280, %s281
      %p285 = pneg %p279
      %p286 = scmp.eq.s32.totalorder %s20, 1
      %p287 = por %p285, %p286
      %p288 = scmp.ne.s32.totalorder %s280, %s283
      %p289 = scmp.eq.s32.totalorder %s20, 0
      %p290 = por %p288, %p289
      %p291 = scmp.ne.s32.totalorder %s280, %s283
      %p292 = scmp.eq.s32.totalorder %s25, 1
      %p293 = por %p291, %p292
      %p294 = scmp.ne.s32.totalorder %s283, %s284
      %p295 = scmp.eq.s32.totalorder %s25, 0
      %p296 = por %p294, %p295
      %p297 = scmp.ne.s32.totalorder %s283, %s284
      %p298 = scmp.eq.s32.totalorder %s26, 1
      %p299 = por %p297, %p298
      %p301 = scmp.ne.s32.totalorder %s284, %s300
      %p302 = scmp.eq.s32.totalorder %s26, 0
      %p303 = por %p301, %p302
      %p304 = scmp.le.s32.totalorder 1, %s20
      %p305 = scmp.lt.s32.totalorder %s20, 3
      %p306 = pnand %p304, %p305
      %p307 = pneg %p306
      // Predicated region
      $region9: #{tpu_custom_call.1} parent=5 // pred_check
        _
      $region10: #{tpu_custom_call.1} parent=5 // pred_check_branch
        %309 = sbr.rel (%p306) target = $region12
      $region11: #{tpu_custom_call.1} parent=5 // pred_region
        %s310 = ssub.s32 %s20, 1
        // Predicated region
        $region13: #{tpu_custom_call.1} parent=11 // pred_check
          %p311 = pneg %p79
        $region14: #{tpu_custom_call.1} parent=11 // pred_check_branch
          %313 = sbr.rel (%p311) target = $region16
        $region15: #{tpu_custom_call.1} parent=11 // pred_region
          _
        $region16: #{tpu_custom_call.1} parent=11 // pred_fallthru
          _
        // Predicated region
        $region17: #{tpu_custom_call.1} parent=11 // pred_check
          %p314 = pneg %p100
        $region18: #{tpu_custom_call.1} parent=11 // pred_check_branch
          %316 = sbr.rel (%p314) target = $region20
        $region19: #{tpu_custom_call.1} parent=11 // pred_region
          _
        $region20: #{tpu_custom_call.1} parent=11 // pred_fallthru
          _
        // Predicated region
        $region21: #{tpu_custom_call.1} parent=11 // pred_check
          %p317 = pneg %p121
        $region22: #{tpu_custom_call.1} parent=11 // pred_check_branch
          %319 = sbr.rel (%p317) target = $region24
        $region23: #{tpu_custom_call.1} parent=11 // pred_region
          _
        $region24: #{tpu_custom_call.1} parent=11 // pred_fallthru
          _
        // Predicated region
        $region25: #{tpu_custom_call.1} parent=11 // pred_check
          %p320 = pneg %p142
        $region26: #{tpu_custom_call.1} parent=11 // pred_check_branch
          %322 = sbr.rel (%p320) target = $region28
        $region27: #{tpu_custom_call.1} parent=11 // pred_region
          _
        $region28: #{tpu_custom_call.1} parent=11 // pred_fallthru
          _
        // Predicated region
        $region29: #{tpu_custom_call.1} parent=11 // pred_check
          %p323 = pneg %p163
        $region30: #{tpu_custom_call.1} parent=11 // pred_check_branch
          %325 = sbr.rel (%p323) target = $region32
        $region31: #{tpu_custom_call.1} parent=11 // pred_region
          _
        $region32: #{tpu_custom_call.1} parent=11 // pred_fallthru
          _
        // Predicated region
        $region33: #{tpu_custom_call.1} parent=11 // pred_check
          %p326 = pneg %p184
        $region34: #{tpu_custom_call.1} parent=11 // pred_check_branch
          %328 = sbr.rel (%p326) target = $region36
        $region35: #{tpu_custom_call.1} parent=11 // pred_region
          _
        $region36: #{tpu_custom_call.1} parent=11 // pred_fallthru
          _
        // Predicated region
        $region37: #{tpu_custom_call.1} parent=11 // pred_check
          %p329 = pneg %p205
        $region38: #{tpu_custom_call.1} parent=11 // pred_check_branch
          %331 = sbr.rel (%p329) target = $region40
        $region39: #{tpu_custom_call.1} parent=11 // pred_region
          _
        $region40: #{tpu_custom_call.1} parent=11 // pred_fallthru
          _
        // Predicated region
        $region41: #{tpu_custom_call.1} parent=11 // pred_check
          %p332 = pneg %p226
        $region42: #{tpu_custom_call.1} parent=11 // pred_check_branch
          %334 = sbr.rel (%p332) target = $region44
        $region43: #{tpu_custom_call.1} parent=11 // pred_region
          _
        $region44: #{tpu_custom_call.1} parent=11 // pred_fallthru
          _
        // Predicated region
        $region45: #{tpu_custom_call.1} parent=11 // pred_check
          %p335 = pneg %p247
        $region46: #{tpu_custom_call.1} parent=11 // pred_check_branch
          %337 = sbr.rel (%p335) target = $region48
        $region47: #{tpu_custom_call.1} parent=11 // pred_region
          _
        $region48: #{tpu_custom_call.1} parent=11 // pred_fallthru
          _
        // Predicated region
        $region49: #{tpu_custom_call.1} parent=11 // pred_check
          %p338 = pneg %p268
        $region50: #{tpu_custom_call.1} parent=11 // pred_check_branch
          %340 = sbr.rel (%p338) target = $region52
        $region51: #{tpu_custom_call.1} parent=11 // pred_region
          _
        $region52: #{tpu_custom_call.1} parent=11 // pred_fallthru
          _
      $region12: #{tpu_custom_call.1} parent=5 // pred_fallthru
        _
      %p341 = scmp.lt.s32.totalorder %s20, 2
      // Predicated region
      $region53: #{tpu_custom_call.1} parent=5 // pred_check
        %p342 = pneg %p341
      $region54: #{tpu_custom_call.1} parent=5 // pred_check_branch
        %344 = sbr.rel (%p342) target = $region56
      $region55: #{tpu_custom_call.1} parent=5 // pred_region
        // Predicated region
        $region57: #{tpu_custom_call.1} parent=55 // pred_check
          %p345 = pneg %p52
        $region58: #{tpu_custom_call.1} parent=55 // pred_check_branch
          %347 = sbr.rel (%p345) target = $region60
        $region59: #{tpu_custom_call.1} parent=55 // pred_region
          %p348 = scmp.lt.s32.totalorder %s27, 1
          %s349 = scalar_select %p348, %s27, 1
          %s350 = smul.addr %s349, 8
          %s351 = scalar_lea.vmem %s0, %s350
        $region60: #{tpu_custom_call.1} parent=55 // pred_fallthru
          _
      $region56: #{tpu_custom_call.1} parent=5 // pred_fallthru
        _
      %p352 = scmp.le.s32.totalorder 1, %s20
      %p353 = scmp.lt.s32.totalorder %s20, 3
      %p354 = pnand %p352, %p353
      %p355 = pneg %p354
      // Predicated region
      $region61: #{tpu_custom_call.1} parent=5 // pred_check
        _
      $region62: #{tpu_custom_call.1} parent=5 // pred_check_branch
        %357 = sbr.rel (%p354) target = $region64
      $region63: #{tpu_custom_call.1} parent=5 // pred_region
        %s358 = ssub.s32 %s20, 1
        %p359 = scmp.lt.s32.totalorder %s29, 1
        %s360 = scalar_select %p359, %s29, 1
        %s361 = smul.addr %s360, 8
        %s362 = scalar_lea.vmem %s0, %s361
        %p363 = pneg %p58
        %p364 = pneg %p55
        %p365 = pneg %p79
        %p366 = pneg %p76
        %p367 = pneg %p100
        %p368 = pneg %p97
        %p369 = pneg %p121
        %p370 = pneg %p118
        %p371 = pneg %p142
        %p372 = pneg %p139
        %p373 = pneg %p163
        %p374 = pneg %p160
        %p375 = pneg %p184
        %p376 = pneg %p181
        %p377 = pneg %p205
        %p378 = pneg %p202
        %p379 = pneg %p226
        %p380 = pneg %p223
        %p381 = pneg %p247
        %p382 = pneg %p244
        %p383 = pneg %p268
        %p384 = pneg %p265
        %p385 = pneg %p296
        %p386 = pneg %p293
        %s387 = sand.u32 %s283, 1
        %s388 = scalar_lea.sflag [#allocation6], %s387
        %s389 = sand.u32 %s283, 1
        %s390 = smul.addr %s389, 8
        %s391 = scalar_lea.vmem [#allocation5], %s390
        %p392 = scmp.lt.s32.totalorder %s29, 1
        %s393 = scalar_select %p392, %s29, 1
        %s394 = smul.addr %s393, 8
        %s395 = scalar_lea.vmem %s0, %s394
        %p396 = scmp.eq.s32.totalorder %s30, 0
        // Predicated region
        $region65: #{tpu_custom_call.1} parent=63 // pred_check
          %p397 = pneg %p396
        $region66: #{tpu_custom_call.1} parent=63 // pred_check_branch
          %399 = sbr.rel (%p397) target = $region68
        $region67: #{tpu_custom_call.1} parent=63 // pred_region
          %v400 = vld [vmem:[%s395] sm:$0xff]
          %v401 = vld [vmem:[%s1] sm:$0x1]
          %v402 = vld [vmem:[%s2] sm:$0x1]
          %vm403 = vcmask 261120
          %v404 = vsel %vm403, %v400, 0.0
          %405 = vadd.xlane.f32.xlu0 %v404
          %v406 = vpop.xlane.xlu0 %405
          %v407 = vrcp.pop 32.0
          %v408 = vmul.f32 32.0, %v407
          %v409 = vsub.f32 1.0, %v408
          %v410 = vmul.f32 %v407, %v409
          %v411 = vadd.f32 %v407, %v410
          %vm412 = vweird.f32 %v407
          %v413 = vsel %vm412, %v407, %v411
          %v414 = vmul.f32 %v406, %v413
          %v415 = vsub.f32 %v400, %v414
          %v416 = vmul.f32 %v415, %v415
          %v417 = vsel %vm403, %v416, 0.0
          %418 = vadd.xlane.f32.xlu0 %v417
          %v419 = vpop.xlane.xlu0 %418
          %v420 = vmul.f32 %v419, %v413
          %v421 = vadd.f32 %v420, 1e-05
          %v422 = vrsqrt.pop %v421
          %v423 = vmul.f32 %v422, %v421
          %v424 = vmul.f32 %v423, %v422
          %v425 = vmul.f32 0.5, %v424
          %v426 = vsub.f32 1.5, %v425
          %v427 = vmul.f32 %v422, %v426
          %vm428 = vweird.f32 %v421
          %vm429 = vweird.f32 %v422
          %vm430 = vmor %vm428, %vm429
          %v431 = vsel %vm430, %v422, %v427
          %v432 = vmul.f32 %v415, %v431
          %v434 = vperm.slane %v401, 0
          %v436 = vmul.f32 %v432, %v434
          %v438 = vperm.slane %v402, 0
          %v440 = vadd.f32 %v436, %v438
          %v441 = vld [vmem:[%s3] sm:$0xff]
          %v442 = vld [vmem:[%s3 + $0x8] sm:$0xff]
          %v443 = vld [vmem:[%s3 + $0x10] sm:$0xff]
          %v444 = vld [vmem:[%s3 + $0x18] sm:$0xff]
          %v445 = vld [vmem:[%s3 + $0x20] sm:$0xff]
          %v446 = vld [vmem:[%s3 + $0x28] sm:$0xff]
          %v447 = vld [vmem:[%s3 + $0x30] sm:$0xff]
          %v448 = vld [vmem:[%s3 + $0x38] sm:$0xff]
          %v449 = vld [vmem:[%s3 + $0x40] sm:$0xff]
          %v450 = vld [vmem:[%s3 + $0x48] sm:$0xff]
          %v451 = vld [vmem:[%s3 + $0x50] sm:$0xff]
          %v452 = vld [vmem:[%s3 + $0x58] sm:$0xff]
          %v453 = vld [vmem:[%s4] sm:$0xff]
          %v454 = vld [vmem:[%s4 + $0x8] sm:$0xff]
          %v455 = vld [vmem:[%s4 + $0x10] sm:$0xff]
          %v456 = vld [vmem:[%s4 + $0x18] sm:$0xff]
          %v457 = vld [vmem:[%s4 + $0x20] sm:$0xff]
          %v458 = vld [vmem:[%s4 + $0x28] sm:$0xff]
          %v459 = vld [vmem:[%s4 + $0x30] sm:$0xff]
          %v460 = vld [vmem:[%s4 + $0x38] sm:$0xff]
          %v461 = vld [vmem:[%s4 + $0x40] sm:$0xff]
          %v462 = vld [vmem:[%s4 + $0x48] sm:$0xff]
          %v463 = vld [vmem:[%s4 + $0x50] sm:$0xff]
          %v464 = vld [vmem:[%s4 + $0x58] sm:$0xff]
          %466 = vset.pattern.permute.xlu0 0
          %467 = vperm.xlu0 %466, %v453
          %v468 = vpop.permute.xlu0 %467
          %471 = vset.pattern.permute.xlu0 0
          %472 = vperm.xlu0 %471, %v454
          %v473 = vpop.permute.xlu0 %472
          %476 = vset.pattern.permute.xlu0 0
          %477 = vperm.xlu0 %476, %v455
          %v478 = vpop.permute.xlu0 %477
          %481 = vset.pattern.permute.xlu0 0
          %482 = vperm.xlu0 %481, %v456
          %v483 = vpop.permute.xlu0 %482
          %486 = vset.pattern.permute.xlu0 0
          %487 = vperm.xlu0 %486, %v457
          %v488 = vpop.permute.xlu0 %487
          %491 = vset.pattern.permute.xlu0 0
          %492 = vperm.xlu0 %491, %v458
          %v493 = vpop.permute.xlu0 %492
          %496 = vset.pattern.permute.xlu0 0
          %497 = vperm.xlu0 %496, %v459
          %v498 = vpop.permute.xlu0 %497
          %501 = vset.pattern.permute.xlu0 0
          %502 = vperm.xlu0 %501, %v460
          %v503 = vpop.permute.xlu0 %502
          %506 = vset.pattern.permute.xlu0 0
          %507 = vperm.xlu0 %506, %v461
          %v508 = vpop.permute.xlu0 %507
          %511 = vset.pattern.permute.xlu0 0
          %512 = vperm.xlu0 %511, %v462
          %v513 = vpop.permute.xlu0 %512
          %516 = vset.pattern.permute.xlu0 0
          %517 = vperm.xlu0 %516, %v463
          %v518 = vpop.permute.xlu0 %517
          %521 = vset.pattern.permute.xlu0 0
          %522 = vperm.xlu0 %521, %v464
          %v523 = vpop.permute.xlu0 %522
          %v526 = vsel %vm403, %v441, 0
          %v529 = vsel %vm403, %v442, 0
          %v532 = vsel %vm403, %v443, 0
          %v535 = vsel %vm403, %v444, 0
          %v538 = vsel %vm403, %v445, 0
          %v541 = vsel %vm403, %v446, 0
          %v544 = vsel %vm403, %v447, 0
          %v547 = vsel %vm403, %v448, 0
          %v550 = vsel %vm403, %v449, 0
          %v553 = vsel %vm403, %v450, 0
          %v556 = vsel %vm403, %v451, 0
          %v559 = vsel %vm403, %v452, 0
          %v562 = vsel %vm403, %v440, 0
          %564 = vmatpush.xpose.msra.mxu0 0.0
          %565 = vmatpush.xpose.msra.mxu0 0.0
          %566 = vmatpush.xpose.msra.mxu0 0.0
          %567 = vmatpush.xpose.msra.mxu0 0.0
          %568 = vmatpush.xpose.msra.mxu0 0.0
          %569 = vmatpush.xpose.msra.mxu0 0.0
          %570 = vmatpush.xpose.msra.mxu0 0.0
          %571 = vmatpush.xpose.msra.mxu0 0.0
          %572 = vmatpush.xpose.msra.mxu0 0.0
          %573 = vmatpush.xpose.msra.mxu0 0.0
          %574 = vmatpush.xpose.msra.mxu0 0.0
          %575 = vmatpush.xpose.msra.mxu0 0.0
          %576 = vmatpush.xpose.msra.mxu0 0.0
          %577 = vmatpush.xpose.msra.mxu0 0.0
          %578 = vmatpush.xpose.msra.mxu0 0.0
          %579 = vmatpush.xpose.msra.mxu0 %v562
          %580 = vmatmul.f32.gmra.mxu0 %v526
          %v581 = vpop.f32.mrf.mxu0
          %v582 = vadd.f32 %v468, %v581
          %583 = vmatmul.f32.gmra.mxu0 %v529
          %v584 = vpop.f32.mrf.mxu0
          %v585 = vadd.f32 %v473, %v584
          %586 = vmatmul.f32.gmra.mxu0 %v532
          %v587 = vpop.f32.mrf.mxu0
          %v588 = vadd.f32 %v478, %v587
          %589 = vmatmul.f32.gmra.mxu0 %v535
          %v590 = vpop.f32.mrf.mxu0
          %v591 = vadd.f32 %v483, %v590
          %592 = vmatmul.f32.gmra.mxu0 %v538
          %v593 = vpop.f32.mrf.mxu0
          %v594 = vadd.f32 %v488, %v593
          %595 = vmatmul.f32.gmra.mxu0 %v541
          %v596 = vpop.f32.mrf.mxu0
          %v597 = vadd.f32 %v493, %v596
          %598 = vmatmul.f32.gmra.mxu0 %v544
          %v599 = vpop.f32.mrf.mxu0
          %v600 = vadd.f32 %v498, %v599
          %601 = vmatmul.f32.gmra.mxu0 %v547
          %v602 = vpop.f32.mrf.mxu0
          %v603 = vadd.f32 %v503, %v602
          %604 = vmatmul.f32.gmra.mxu0 %v550
          %v605 = vpop.f32.mrf.mxu0
          %v606 = vadd.f32 %v508, %v605
          %607 = vmatmul.f32.gmra.mxu0 %v553
          %v608 = vpop.f32.mrf.mxu0
          %v609 = vadd.f32 %v513, %v608
          %610 = vmatmul.f32.gmra.mxu0 %v556
          %v611 = vpop.f32.mrf.mxu0
          %v612 = vadd.f32 %v518, %v611
          %613 = vmatmul.f32.gmra.mxu0 %v559
          %v614 = vpop.f32.mrf.mxu0
          %v615 = vadd.f32 %v523, %v614
          %616 = vdwg.mxu0
          %617 = vxpose.xlu0.b32.start [1/16] %v582, 128
          %618 = vxpose.xlu0.b32.cont [2/16] 0.0, 128
          %619 = vxpose.xlu0.b32.cont [3/16] 0.0, 128
          %620 = vxpose.xlu0.b32.cont [4/16] 0.0, 128
          %621 = vxpose.xlu0.b32.cont [5/16] 0.0, 128
          %622 = vxpose.xlu0.b32.cont [6/16] 0.0, 128
          %623 = vxpose.xlu0.b32.cont [7/16] 0.0, 128
          %624 = vxpose.xlu0.b32.cont [8/16] 0.0, 128
          %625 = vxpose.xlu0.b32.cont [9/16] 0.0, 128
          %626 = vxpose.xlu0.b32.cont [10/16] 0.0, 128
          %627 = vxpose.xlu0.b32.cont [11/16] 0.0, 128
          %628 = vxpose.xlu0.b32.cont [12/16] 0.0, 128
          %629 = vxpose.xlu0.b32.cont [13/16] 0.0, 128
          %630 = vxpose.xlu0.b32.cont [14/16] 0.0, 128
          %631 = vxpose.xlu0.b32.cont [15/16] 0.0, 128
          %632 = vxpose.xlu0.b32.end [16/16] 0.0, 128
          %v633 = vpop.trf.xlu0
          %v634 = vpop.trf.xlu0
          %v635 = vpop.trf.xlu0
          %v636 = vpop.trf.xlu0
          %v637 = vpop.trf.xlu0
          %v638 = vpop.trf.xlu0
          %v639 = vpop.trf.xlu0
          %v640 = vpop.trf.xlu0
          %v641 = vpop.trf.xlu0
          %v642 = vpop.trf.xlu0
          %v643 = vpop.trf.xlu0
          %v644 = vpop.trf.xlu0
          %v645 = vpop.trf.xlu0
          %v646 = vpop.trf.xlu0
          %v647 = vpop.trf.xlu0
          %v648 = vpop.trf.xlu0
          %649 = vxpose.xlu0.b32.start [1/16] %v585, 128
          %650 = vxpose.xlu0.b32.cont [2/16] 0.0, 128
          %651 = vxpose.xlu0.b32.cont [3/16] 0.0, 128
          %652 = vxpose.xlu0.b32.cont [4/16] 0.0, 128
          %653 = vxpose.xlu0.b32.cont [5/16] 0.0, 128
          %654 = vxpose.xlu0.b32.cont [6/16] 0.0, 128
          %655 = vxpose.xlu0.b32.cont [7/16] 0.0, 128
          %656 = vxpose.xlu0.b32.cont [8/16] 0.0, 128
          %657 = vxpose.xlu0.b32.cont [9/16] 0.0, 128
          %658 = vxpose.xlu0.b32.cont [10/16] 0.0, 128
          %659 = vxpose.xlu0.b32.cont [11/16] 0.0, 128
          %660 = vxpose.xlu0.b32.cont [12/16] 0.0, 128
          %661 = vxpose.xlu0.b32.cont [13/16] 0.0, 128
          %662 = vxpose.xlu0.b32.cont [14/16] 0.0, 128
          %663 = vxpose.xlu0.b32.cont [15/16] 0.0, 128
          %664 = vxpose.xlu0.b32.end [16/16] 0.0, 128
          %v665 = vpop.trf.xlu0
          %v666 = vpop.trf.xlu0
          %v667 = vpop.trf.xlu0
          %v668 = vpop.trf.xlu0
          %v669 = vpop.trf.xlu0
          %v670 = vpop.trf.xlu0
          %v671 = vpop.trf.xlu0
          %v672 = vpop.trf.xlu0
          %v673 = vpop.trf.xlu0
          %v674 = vpop.trf.xlu0
          %v675 = vpop.trf.xlu0
          %v676 = vpop.trf.xlu0
          %v677 = vpop.trf.xlu0
          %v678 = vpop.trf.xlu0
          %v679 = vpop.trf.xlu0
          %v680 = vpop.trf.xlu0
          %681 = vxpose.xlu0.b32.start [1/16] %v588, 128
          %682 = vxpose.xlu0.b32.cont [2/16] 0.0, 128
          %683 = vxpose.xlu0.b32.cont [3/16] 0.0, 128
          %684 = vxpose.xlu0.b32.cont [4/16] 0.0, 128
          %685 = vxpose.xlu0.b32.cont [5/16] 0.0, 128
          %686 = vxpose.xlu0.b32.cont [6/16] 0.0, 128
          %687 = vxpose.xlu0.b32.cont [7/16] 0.0, 128
          %688 = vxpose.xlu0.b32.cont [8/16] 0.0, 128
          %689 = vxpose.xlu0.b32.cont [9/16] 0.0, 128
          %690 = vxpose.xlu0.b32.cont [10/16] 0.0, 128
          %691 = vxpose.xlu0.b32.cont [11/16] 0.0, 128
          %692 = vxpose.xlu0.b32.cont [12/16] 0.0, 128
          %693 = vxpose.xlu0.b32.cont [13/16] 0.0, 128
          %694 = vxpose.xlu0.b32.cont [14/16] 0.0, 128
          %695 = vxpose.xlu0.b32.cont [15/16] 0.0, 128
          %696 = vxpose.xlu0.b32.end [16/16] 0.0, 128
          %v697 = vpop.trf.xlu0
          %v698 = vpop.trf.xlu0
          %v699 = vpop.trf.xlu0
          %v700 = vpop.trf.xlu0
          %v701 = vpop.trf.xlu0
          %v702 = vpop.trf.xlu0
          %v703 = vpop.trf.xlu0
          %v704 = vpop.trf.xlu0
          %v705 = vpop.trf.xlu0
          %v706 = vpop.trf.xlu0
          %v707 = vpop.trf.xlu0
          %v708 = vpop.trf.xlu0
          %v709 = vpop.trf.xlu0
          %v710 = vpop.trf.xlu0
          %v711 = vpop.trf.xlu0
          %v712 = vpop.trf.xlu0
          %713 = vxpose.xlu0.b32.start [1/16] %v591, 128
          %714 = vxpose.xlu0.b32.cont [2/16] 0.0, 128
          %715 = vxpose.xlu0.b32.cont [3/16] 0.0, 128
          %716 = vxpose.xlu0.b32.cont [4/16] 0.0, 128
          %717 = vxpose.xlu0.b32.cont [5/16] 0.0, 128
          %718 = vxpose.xlu0.b32.cont [6/16] 0.0, 128
          %719 = vxpose.xlu0.b32.cont [7/16] 0.0, 128
          %720 = vxpose.xlu0.b32.cont [8/16] 0.0, 128
          %721 = vxpose.xlu0.b32.cont [9/16] 0.0, 128
          %722 = vxpose.xlu0.b32.cont [10/16] 0.0, 128
          %723 = vxpose.xlu0.b32.cont [11/16] 0.0, 128
          %724 = vxpose.xlu0.b32.cont [12/16] 0.0, 128
          %725 = vxpose.xlu0.b32.cont [13/16] 0.0, 128
          %726 = vxpose.xlu0.b32.cont [14/16] 0.0, 128
          %727 = vxpose.xlu0.b32.cont [15/16] 0.0, 128
          %728 = vxpose.xlu0.b32.end [16/16] 0.0, 128
          %v729 = vpop.trf.xlu0
          %v730 = vpop.trf.xlu0
          %v731 = vpop.trf.xlu0
          %v732 = vpop.trf.xlu0
          %v733 = vpop.trf.xlu0
          %v734 = vpop.trf.xlu0
          %v735 = vpop.trf.xlu0
          %v736 = vpop.trf.xlu0
          %v737 = vpop.trf.xlu0
          %v738 = vpop.trf.xlu0
          %v739 = vpop.trf.xlu0
          %v740 = vpop.trf.xlu0
          %v741 = vpop.trf.xlu0
          %v742 = vpop.trf.xlu0
          %v743 = vpop.trf.xlu0
          %v744 = vpop.trf.xlu0
          %vm745 = vcmask 64512
          %746 = vst.msk [vmem:[#allocation2] sm:$0xff] %vm745, %v633
          %747 = vst.msk [vmem:[#allocation2 + $0x8] sm:$0xff] %vm745, %v665
          %748 = vst.msk [vmem:[#allocation2 + $0x10] sm:$0xff] %vm745, %v697
          %749 = vst.msk [vmem:[#allocation2 + $0x18] sm:$0xff] %vm745, %v729
          %750 = vst.msk [vmem:[#allocation3] sm:$0xff] %vm745, %v594
          %751 = vst.msk [vmem:[#allocation3 + $0x8] sm:$0xff] %vm745, %v597
          %752 = vst.msk [vmem:[#allocation3 + $0x10] sm:$0xff] %vm745, %v600
          %753 = vst.msk [vmem:[#allocation3 + $0x18] sm:$0xff] %vm745, %v603
          %754 = vst.msk [vmem:[#allocation4] sm:$0xff] %vm745, %v606
          %755 = vst.msk [vmem:[#allocation4 + $0x8] sm:$0xff] %vm745, %v609
          %756 = vst.msk [vmem:[#allocation4 + $0x10] sm:$0xff] %vm745, %v612
          %757 = vst.msk [vmem:[#allocation4 + $0x18] sm:$0xff] %vm745, %v615
        $region68: #{tpu_custom_call.1} parent=63 // pred_fallthru
          _
        %v758 = vld [vmem:[%s395] sm:$0xff]
        %v759 = vld [vmem:[#allocation2] sm:$0xff]
        %v760 = vld [vmem:[#allocation2 + $0x8] sm:$0xff]
        %v761 = vld [vmem:[#allocation2 + $0x10] sm:$0xff]
        %v762 = vld [vmem:[#allocation2 + $0x18] sm:$0xff]
        %v763 = vld [vmem:[#allocation3] sm:$0xff]
        %v764 = vld [vmem:[#allocation3 + $0x8] sm:$0xff]
        %v765 = vld [vmem:[#allocation3 + $0x10] sm:$0xff]
        %v766 = vld [vmem:[#allocation3 + $0x18] sm:$0xff]
        %v767 = vld [vmem:[#allocation4] sm:$0xff]
        %v768 = vld [vmem:[#allocation4 + $0x8] sm:$0xff]
        %v769 = vld [vmem:[#allocation4 + $0x10] sm:$0xff]
        %v770 = vld [vmem:[#allocation4 + $0x18] sm:$0xff]
        %vm771 = vcmask 64512
        %v773 = vsel %vm771, %v759, 0
        %775 = vmatpush.msra.mxu0 0.0
        %776 = vmatpush.msra.mxu0 0.0
        %777 = vmatpush.msra.mxu0 0.0
        %778 = vmatpush.msra.mxu0 0.0
        %779 = vmatpush.msra.mxu0 0.0
        %780 = vmatpush.msra.mxu0 0.0
        %781 = vmatpush.msra.mxu0 0.0
        %782 = vmatpush.msra.mxu0 0.0
        %783 = vmatpush.msra.mxu0 0.0
        %784 = vmatpush.msra.mxu0 0.0
        %785 = vmatpush.msra.mxu0 0.0
        %786 = vmatpush.msra.mxu0 0.0
        %787 = vmatpush.msra.mxu0 0.0
        %788 = vmatpush.msra.mxu0 0.0
        %789 = vmatpush.msra.mxu0 0.0
        %790 = vmatpush.msra.mxu0 %v763
        %791 = vmatmul.f32.gmra.mxu0 %v773
        %v792 = vpop.f32.mrf.mxu0
        %v793 = vadd.f32 0.0, %v792
        %794 = vdwg.mxu0
        %v796 = vsel %vm771, %v760, 0
        %798 = vmatpush.msra.mxu0 0.0
        %799 = vmatpush.msra.mxu0 0.0
        %800 = vmatpush.msra.mxu0 0.0
        %801 = vmatpush.msra.mxu0 0.0
        %802 = vmatpush.msra.mxu0 0.0
        %803 = vmatpush.msra.mxu0 0.0
        %804 = vmatpush.msra.mxu0 0.0
        %805 = vmatpush.msra.mxu0 0.0
        %806 = vmatpush.msra.mxu0 0.0
        %807 = vmatpush.msra.mxu0 0.0
        %808 = vmatpush.msra.mxu0 0.0
        %809 = vmatpush.msra.mxu0 0.0
        %810 = vmatpush.msra.mxu0 0.0
        %811 = vmatpush.msra.mxu0 0.0
        %812 = vmatpush.msra.mxu0 0.0
        %813 = vmatpush.msra.mxu0 %v764
        %814 = vmatmul.f32.gmra.mxu0 %v796
        %v815 = vpop.f32.mrf.mxu0
        %v816 = vadd.f32 0.0, %v815
        %817 = vdwg.mxu0
        %v819 = vsel %vm771, %v761, 0
        %821 = vmatpush.msra.mxu0 0.0
        %822 = vmatpush.msra.mxu0 0.0
        %823 = vmatpush.msra.mxu0 0.0
        %824 = vmatpush.msra.mxu0 0.0
        %825 = vmatpush.msra.mxu0 0.0
        %826 = vmatpush.msra.mxu0 0.0
        %827 = vmatpush.msra.mxu0 0.0
        %828 = vmatpush.msra.mxu0 0.0
        %829 = vmatpush.msra.mxu0 0.0
        %830 = vmatpush.msra.mxu0 0.0
        %831 = vmatpush.msra.mxu0 0.0
        %832 = vmatpush.msra.mxu0 0.0
        %833 = vmatpush.msra.mxu0 0.0
        %834 = vmatpush.msra.mxu0 0.0
        %835 = vmatpush.msra.mxu0 0.0
        %836 = vmatpush.msra.mxu0 %v765
        %837 = vmatmul.f32.gmra.mxu0 %v819
        %v838 = vpop.f32.mrf.mxu0
        %v839 = vadd.f32 0.0, %v838
        %840 = vdwg.mxu0
        %v842 = vsel %vm771, %v762, 0
        %844 = vmatpush.msra.mxu0 0.0
        %845 = vmatpush.msra.mxu0 0.0
        %846 = vmatpush.msra.mxu0 0.0
        %847 = vmatpush.msra.mxu0 0.0
        %848 = vmatpush.msra.mxu0 0.0
        %849 = vmatpush.msra.mxu0 0.0
        %850 = vmatpush.msra.mxu0 0.0
        %851 = vmatpush.msra.mxu0 0.0
        %852 = vmatpush.msra.mxu0 0.0
        %853 = vmatpush.msra.mxu0 0.0
        %854 = vmatpush.msra.mxu0 0.0
        %855 = vmatpush.msra.mxu0 0.0
        %856 = vmatpush.msra.mxu0 0.0
        %857 = vmatpush.msra.mxu0 0.0
        %858 = vmatpush.msra.mxu0 0.0
        %859 = vmatpush.msra.mxu0 %v766
        %860 = vmatmul.f32.gmra.mxu0 %v842
        %v861 = vpop.f32.mrf.mxu0
        %v862 = vadd.f32 0.0, %v861
        %863 = vdwg.mxu0
        %v864 = vmul.f32 %v793, 0.35355338
        %v865 = vmul.f32 %v816, 0.35355338
        %v866 = vmul.f32 %v839, 0.35355338
        %v867 = vmul.f32 %v862, 0.35355338
        %v868 = vsel %vm771, %v864, -inf
        %869 = vmax.xlane.f32.xlu0 %v868
        %v870 = vpop.xlane.xlu0 %869
        %v871 = vsel %vm771, %v865, -inf
        %872 = vmax.xlane.f32.xlu0 %v871
        %v873 = vpop.xlane.xlu0 %872
        %v874 = vsel %vm771, %v866, -inf
        %875 = vmax.xlane.f32.xlu0 %v874
        %v876 = vpop.xlane.xlu0 %875
        %v877 = vsel %vm771, %v867, -inf
        %878 = vmax.xlane.f32.xlu0 %v877
        %v879 = vpop.xlane.xlu0 %878
        %v880 = vsub.f32 %v864, %v870
        %v881 = vsub.f32 %v865, %v873
        %v882 = vsub.f32 %v866, %v876
        %v883 = vsub.f32 %v867, %v879
        %v884 = vmul.f32 %v880, 1.442695
        %v885 = vpow.pop %v884
        %v886 = vmul.f32 %v881, 1.442695
        %v887 = vpow.pop %v886
        %v888 = vmul.f32 %v882, 1.442695
        %v889 = vpow.pop %v888
        %v890 = vmul.f32 %v883, 1.442695
        %v891 = vpow.pop %v890
        %v892 = vsel %vm771, %v885, 0.0
        %893 = vadd.xlane.f32.xlu0 %v892
        %v894 = vpop.xlane.xlu0 %893
        %v895 = vsel %vm771, %v887, 0.0
        %896 = vadd.xlane.f32.xlu0 %v895
        %v897 = vpop.xlane.xlu0 %896
        %v898 = vsel %vm771, %v889, 0.0
        %899 = vadd.xlane.f32.xlu0 %v898
        %v900 = vpop.xlane.xlu0 %899
        %v901 = vsel %vm771, %v891, 0.0
        %902 = vadd.xlane.f32.xlu0 %v901
        %v903 = vpop.xlane.xlu0 %902
        %v904 = vrcp.pop %v894
        %v905 = vmul.f32 %v894, %v904
        %v906 = vsub.f32 1.0, %v905
        %v907 = vmul.f32 %v904, %v906
        %v908 = vadd.f32 %v904, %v907
        %vm909 = vweird.f32 %v894
        %vm910 = vweird.f32 %v904
        %vm911 = vmor %vm909, %vm910
        %v912 = vsel %vm911, %v904, %v908
        %v913 = vand.u32 2147483647, %v894
        %vm914 = vcmp.eq.f32.partialorder %v913, 8.507059e+37
        %v915 = vand.u32 %v894, 2147483648
        %v916 = vor.u32 1.1754944e-38, %v915
        %v917 = vsel %vm914, %v916, %v912
        %v918 = vmul.f32 %v885, %v917
        %v919 = vrcp.pop %v897
        %v920 = vmul.f32 %v897, %v919
        %v921 = vsub.f32 1.0, %v920
        %v922 = vmul.f32 %v919, %v921
        %v923 = vadd.f32 %v919, %v922
        %vm924 = vweird.f32 %v897
        %vm925 = vweird.f32 %v919
        %vm926 = vmor %vm924, %vm925
        %v927 = vsel %vm926, %v919, %v923
        %v928 = vand.u32 2147483647, %v897
        %vm929 = vcmp.eq.f32.partialorder %v928, 8.507059e+37
        %v930 = vand.u32 %v897, 2147483648
        %v931 = vor.u32 1.1754944e-38, %v930
        %v932 = vsel %vm929, %v931, %v927
        %v933 = vmul.f32 %v887, %v932
        %v934 = vrcp.pop %v900
        %v935 = vmul.f32 %v900, %v934
        %v936 = vsub.f32 1.0, %v935
        %v937 = vmul.f32 %v934, %v936
        %v938 = vadd.f32 %v934, %v937
        %vm939 = vweird.f32 %v900
        %vm940 = vweird.f32 %v934
        %vm941 = vmor %vm939, %vm940
        %v942 = vsel %vm941, %v934, %v938
        %v943 = vand.u32 2147483647, %v900
        %vm944 = vcmp.eq.f32.partialorder %v943, 8.507059e+37
        %v945 = vand.u32 %v900, 2147483648
        %v946 = vor.u32 1.1754944e-38, %v945
        %v947 = vsel %vm944, %v946, %v942
        %v948 = vmul.f32 %v889, %v947
        %v949 = vrcp.pop %v903
        %v950 = vmul.f32 %v903, %v949
        %v951 = vsub.f32 1.0, %v950
        %v952 = vmul.f32 %v949, %v951
        %v953 = vadd.f32 %v949, %v952
        %vm954 = vweird.f32 %v903
        %vm955 = vweird.f32 %v949
        %vm956 = vmor %vm954, %vm955
        %v957 = vsel %vm956, %v949, %v953
        %v958 = vand.u32 2147483647, %v903
        %vm959 = vcmp.eq.f32.partialorder %v958, 8.507059e+37
        %v960 = vand.u32 %v903, 2147483648
        %v961 = vor.u32 1.1754944e-38, %v960
        %v962 = vsel %vm959, %v961, %v957
        %v963 = vmul.f32 %v891, %v962
        %v965 = vsel %vm771, %v767, 0
        %v968 = vsel %vm771, %v918, 0
        %970 = vmatpush.xpose.msra.mxu0 0.0
        %971 = vmatpush.xpose.msra.mxu0 0.0
        %972 = vmatpush.xpose.msra.mxu0 0.0
        %973 = vmatpush.xpose.msra.mxu0 0.0
        %974 = vmatpush.xpose.msra.mxu0 0.0
        %975 = vmatpush.xpose.msra.mxu0 0.0
        %976 = vmatpush.xpose.msra.mxu0 0.0
        %977 = vmatpush.xpose.msra.mxu0 0.0
        %978 = vmatpush.xpose.msra.mxu0 0.0
        %979 = vmatpush.xpose.msra.mxu0 0.0
        %980 = vmatpush.xpose.msra.mxu0 0.0
        %981 = vmatpush.xpose.msra.mxu0 0.0
        %982 = vmatpush.xpose.msra.mxu0 0.0
        %983 = vmatpush.xpose.msra.mxu0 0.0
        %984 = vmatpush.xpose.msra.mxu0 0.0
        %985 = vmatpush.xpose.msra.mxu0 %v968
        %986 = vmatmul.f32.gmra.mxu0 %v965
        %v987 = vpop.f32.mrf.mxu0
        %v988 = vadd.f32 0.0, %v987
        %989 = vdwg.mxu0
        %v991 = vsel %vm771, %v768, 0
        %v994 = vsel %vm771, %v933, 0
        %996 = vmatpush.xpose.msra.mxu0 0.0
        %997 = vmatpush.xpose.msra.mxu0 0.0
        %998 = vmatpush.xpose.msra.mxu0 0.0
        %999 = vmatpush.xpose.msra.mxu0 0.0
        %1000 = vmatpush.xpose.msra.mxu0 0.0
        %1001 = vmatpush.xpose.msra.mxu0 0.0
        %1002 = vmatpush.xpose.msra.mxu0 0.0
        %1003 = vmatpush.xpose.msra.mxu0 0.0
        %1004 = vmatpush.xpose.msra.mxu0 0.0
        %1005 = vmatpush.xpose.msra.mxu0 0.0
        %1006 = vmatpush.xpose.msra.mxu0 0.0
        %1007 = vmatpush.xpose.msra.mxu0 0.0
        %1008 = vmatpush.xpose.msra.mxu0 0.0
        %1009 = vmatpush.xpose.msra.mxu0 0.0
        %1010 = vmatpush.xpose.msra.mxu0 0.0
        %1011 = vmatpush.xpose.msra.mxu0 %v994
        %1012 = vmatmul.f32.gmra.mxu0 %v991
        %v1013 = vpop.f32.mrf.mxu0
        %v1014 = vadd.f32 0.0, %v1013
        %1015 = vdwg.mxu0
        %v1017 = vsel %vm771, %v769, 0
        %v1020 = vsel %vm771, %v948, 0
        %1022 = vmatpush.xpose.msra.mxu0 0.0
        %1023 = vmatpush.xpose.msra.mxu0 0.0
        %1024 = vmatpush.xpose.msra.mxu0 0.0
        %1025 = vmatpush.xpose.msra.mxu0 0.0
        %1026 = vmatpush.xpose.msra.mxu0 0.0
        %1027 = vmatpush.xpose.msra.mxu0 0.0
        %1028 = vmatpush.xpose.msra.mxu0 0.0
        %1029 = vmatpush.xpose.msra.mxu0 0.0
        %1030 = vmatpush.xpose.msra.mxu0 0.0
        %1031 = vmatpush.xpose.msra.mxu0 0.0
        %1032 = vmatpush.xpose.msra.mxu0 0.0
        %1033 = vmatpush.xpose.msra.mxu0 0.0
        %1034 = vmatpush.xpose.msra.mxu0 0.0
        %1035 = vmatpush.xpose.msra.mxu0 0.0
        %1036 = vmatpush.xpose.msra.mxu0 0.0
        %1037 = vmatpush.xpose.msra.mxu0 %v1020
        %1038 = vmatmul.f32.gmra.mxu0 %v1017
        %v1039 = vpop.f32.mrf.mxu0
        %v1040 = vadd.f32 0.0, %v1039
        %1041 = vdwg.mxu0
        %v1043 = vsel %vm771, %v770, 0
        %v1046 = vsel %vm771, %v963, 0
        %1048 = vmatpush.xpose.msra.mxu0 0.0
        %1049 = vmatpush.xpose.msra.mxu0 0.0
        %1050 = vmatpush.xpose.msra.mxu0 0.0
        %1051 = vmatpush.xpose.msra.mxu0 0.0
        %1052 = vmatpush.xpose.msra.mxu0 0.0
        %1053 = vmatpush.xpose.msra.mxu0 0.0
        %1054 = vmatpush.xpose.msra.mxu0 0.0
        %1055 = vmatpush.xpose.msra.mxu0 0.0
        %1056 = vmatpush.xpose.msra.mxu0 0.0
        %1057 = vmatpush.xpose.msra.mxu0 0.0
        %1058 = vmatpush.xpose.msra.mxu0 0.0
        %1059 = vmatpush.xpose.msra.mxu0 0.0
        %1060 = vmatpush.xpose.msra.mxu0 0.0
        %1061 = vmatpush.xpose.msra.mxu0 0.0
        %1062 = vmatpush.xpose.msra.mxu0 0.0
        %1063 = vmatpush.xpose.msra.mxu0 %v1046
        %1064 = vmatmul.f32.gmra.mxu0 %v1043
        %v1065 = vpop.f32.mrf.mxu0
        %v1066 = vadd.f32 0.0, %v1065
        %1067 = vdwg.mxu0
        %1068 = vxpose.xlu0.b32.start [1/16] %v988, 128
        %1069 = vxpose.xlu0.b32.cont [2/16] %v1014, 128
        %1070 = vxpose.xlu0.b32.cont [3/16] %v1040, 128
        %1071 = vxpose.xlu0.b32.cont [4/16] %v1066, 128
        %1072 = vxpose.xlu0.b32.cont [5/16] 0.0, 128
        %1073 = vxpose.xlu0.b32.cont [6/16] 0.0, 128
        %1074 = vxpose.xlu0.b32.cont [7/16] 0.0, 128
        %1075 = vxpose.xlu0.b32.cont [8/16] 0.0, 128
        %1076 = vxpose.xlu0.b32.cont [9/16] 0.0, 128
        %1077 = vxpose.xlu0.b32.cont [10/16] 0.0, 128
        %1078 = vxpose.xlu0.b32.cont [11/16] 0.0, 128
        %1079 = vxpose.xlu0.b32.cont [12/16] 0.0, 128
        %1080 = vxpose.xlu0.b32.cont [13/16] 0.0, 128
        %1081 = vxpose.xlu0.b32.cont [14/16] 0.0, 128
        %1082 = vxpose.xlu0.b32.cont [15/16] 0.0, 128
        %1083 = vxpose.xlu0.b32.end [16/16] 0.0, 128
        %v1084 = vpop.trf.xlu0
        %v1085 = vpop.trf.xlu0
        %v1086 = vpop.trf.xlu0
        %v1087 = vpop.trf.xlu0
        %v1088 = vpop.trf.xlu0
        %v1089 = vpop.trf.xlu0
        %v1090 = vpop.trf.xlu0
        %v1091 = vpop.trf.xlu0
        %v1092 = vpop.trf.xlu0
        %v1093 = vpop.trf.xlu0
        %v1094 = vpop.trf.xlu0
        %v1095 = vpop.trf.xlu0
        %v1096 = vpop.trf.xlu0
        %v1097 = vpop.trf.xlu0
        %v1098 = vpop.trf.xlu0
        %v1099 = vpop.trf.xlu0
        %v1100 = vadd.f32 %v758, %v1084
        %v1101 = vld [vmem:[%s5] sm:$0x1]
        %v1102 = vld [vmem:[%s6] sm:$0x1]
        %vm1103 = vcmask 261120
        %v1104 = vsel %vm1103, %v1100, 0.0
        %1105 = vadd.xlane.f32.xlu0 %v1104
        %v1106 = vpop.xlane.xlu0 %1105
        %v1107 = vrcp.pop 32.0
        %v1108 = vmul.f32 32.0, %v1107
        %v1109 = vsub.f32 1.0, %v1108
        %v1110 = vmul.f32 %v1107, %v1109
        %v1111 = vadd.f32 %v1107, %v1110
        %vm1112 = vweird.f32 %v1107
        %v1113 = vsel %vm1112, %v1107, %v1111
        %v1114 = vmul.f32 %v1106, %v1113
        %v1115 = vsub.f32 %v1100, %v1114
        %v1116 = vmul.f32 %v1115, %v1115
        %v1117 = vsel %vm1103, %v1116, 0.0
        %1118 = vadd.xlane.f32.xlu0 %v1117
        %v1119 = vpop.xlane.xlu0 %1118
        %v1120 = vmul.f32 %v1119, %v1113
        %v1121 = vadd.f32 %v1120, 1e-05
        %v1122 = vrsqrt.pop %v1121
        %v1123 = vmul.f32 %v1122, %v1121
        %v1124 = vmul.f32 %v1123, %v1122
        %v1125 = vmul.f32 0.5, %v1124
        %v1126 = vsub.f32 1.5, %v1125
        %v1127 = vmul.f32 %v1122, %v1126
        %vm1128 = vweird.f32 %v1121
        %vm1129 = vweird.f32 %v1122
        %vm1130 = vmor %vm1128, %vm1129
        %v1131 = vsel %vm1130, %v1122, %v1127
        %v1132 = vmul.f32 %v1115, %v1131
        %v1134 = vperm.slane %v1101, 0
        %v1136 = vmul.f32 %v1132, %v1134
        %v1138 = vperm.slane %v1102, 0
        %v1140 = vadd.f32 %v1136, %v1138
        %v1141 = vld [vmem:[%s7] sm:$0xff]
        %v1142 = vld [vmem:[%s7 + $0x8] sm:$0xff]
        %v1143 = vld [vmem:[%s7 + $0x10] sm:$0xff]
        %v1144 = vld [vmem:[%s7 + $0x18] sm:$0xff]
        %v1145 = vld [vmem:[%s8] sm:$0x1]
        %v1147 = vperm.slane %v1145, 0
        %v1150 = vsel %vm1103, %v1140, 0
        %1152 = vmatpush.msra.mxu0 0.0
        %1153 = vmatpush.msra.mxu0 0.0
        %1154 = vmatpush.msra.mxu0 0.0
        %1155 = vmatpush.msra.mxu0 0.0
        %1156 = vmatpush.msra.mxu0 0.0
        %1157 = vmatpush.msra.mxu0 0.0
        %1158 = vmatpush.msra.mxu0 0.0
        %1159 = vmatpush.msra.mxu0 0.0
        %1160 = vmatpush.msra.mxu0 0.0
        %1161 = vmatpush.msra.mxu0 0.0
        %1162 = vmatpush.msra.mxu0 0.0
        %1163 = vmatpush.msra.mxu0 0.0
        %1164 = vmatpush.msra.mxu0 %v1144
        %1165 = vmatpush.msra.mxu0 %v1143
        %1166 = vmatpush.msra.mxu0 %v1142
        %1167 = vmatpush.msra.mxu0 %v1141
        %1168 = vmatmul.f32.gmra.mxu0 %v1150
        %v1169 = vpop.f32.mrf.mxu0
        %v1170 = vadd.f32 %v1147, %v1169
        %1171 = vdwg.mxu0
        %v1172 = vmul.f32 %v1170, 0.5
        %v1173 = vmul.f32 %v1170, 0.70710677
        %v1174 = vmul.f32 %v1173, %v1173
        %v1175 = vmin.f32 16.0, %v1174
        %v1176 = vmul.f32 %v1175, 2.1237322e-06
        %v1177 = vadd.f32 %v1176, 0.00028619796
        %v1178 = vmul.f32 %v1175, %v1177
        %v1179 = vadd.f32 %v1178, 0.0036580483
        %v1180 = vmul.f32 %v1175, %v1179
        %v1181 = vadd.f32 %v1180, 0.05243302
        %v1182 = vmul.f32 %v1175, %v1181
        %v1183 = vadd.f32 %v1182, 0.18741608
        %v1184 = vmul.f32 %v1175, %v1183
        %v1185 = vadd.f32 %v1184, 1.1283791
        %v1186 = vmul.f32 %v1173, %v1185
        %v1187 = vmul.f32 %v1175, 3.8918573e-05
        %v1188 = vadd.f32 %v1187, 0.001143296
        %v1189 = vmul.f32 %v1175, %v1188
        %v1190 = vadd.f32 %v1189, 0.014752088
        %v1191 = vmul.f32 %v1175, %v1190
        %v1192 = vadd.f32 %v1191, 0.112945676
        %v1193 = vmul.f32 %v1175, %v1192
        %v1194 = vadd.f32 %v1193, 0.4994258
        %v1195 = vmul.f32 %v1175, %v1194
        %v1196 = vadd.f32 %v1195, 1.0
        %v1197 = vrcp.pop %v1196
        %v1198 = vmul.f32 %v1196, %v1197
        %v1199 = vsub.f32 1.0, %v1198
        %v1200 = vmul.f32 %v1197, %v1199
        %v1201 = vadd.f32 %v1197, %v1200
        %vm1202 = vweird.f32 %v1196
        %vm1203 = vweird.f32 %v1197
        %vm1204 = vmor %vm1202, %vm1203
        %v1205 = vsel %vm1204, %v1197, %v1201
        %v1206 = vand.u32 2147483647, %v1196
        %vm1207 = vcmp.eq.f32.partialorder %v1206, 8.507059e+37
        %v1208 = vand.u32 %v1196, 2147483648
        %v1209 = vor.u32 1.1754944e-38, %v1208
        %v1210 = vsel %vm1207, %v1209, %v1205
        %v1211 = vmul.f32 %v1186, %v1210
        %v1212 = vmin.f32 %v1211, 1.0
        %v1213 = vmax.f32 %v1212, -1.0
        %v1214 = vadd.f32 %v1213, 1.0
        %v1215 = vmul.f32 %v1172, %v1214
        %v1216 = vld [vmem:[%s9] sm:$0xff]
        %v1217 = vld [vmem:[%s9 + $0x8] sm:$0xff]
        %v1218 = vld [vmem:[%s9 + $0x10] sm:$0xff]
        %v1219 = vld [vmem:[%s9 + $0x18] sm:$0xff]
        %v1220 = vld [vmem:[%s9 + $0x20] sm:$0xff]
        %v1221 = vld [vmem:[%s9 + $0x28] sm:$0xff]
        %v1222 = vld [vmem:[%s9 + $0x30] sm:$0xff]
        %v1223 = vld [vmem:[%s9 + $0x38] sm:$0xff]
        %v1224 = vld [vmem:[%s10] sm:$0x1]
        %v1226 = vperm.slane %v1224, 0
        %vm1228 = vcmask 523264
        %v1230 = vsel %vm1228, %v1215, 0
        %1232 = vmatpush.msra.mxu0 0.0
        %1233 = vmatpush.msra.mxu0 0.0
        %1234 = vmatpush.msra.mxu0 0.0
        %1235 = vmatpush.msra.mxu0 0.0
        %1236 = vmatpush.msra.mxu0 0.0
        %1237 = vmatpush.msra.mxu0 0.0
        %1238 = vmatpush.msra.mxu0 0.0
        %1239 = vmatpush.msra.mxu0 0.0
        %1240 = vmatpush.msra.mxu0 %v1223
        %1241 = vmatpush.msra.mxu0 %v1222
        %1242 = vmatpush.msra.mxu0 %v1221
        %1243 = vmatpush.msra.mxu0 %v1220
        %1244 = vmatpush.msra.mxu0 %v1219
        %1245 = vmatpush.msra.mxu0 %v1218
        %1246 = vmatpush.msra.mxu0 %v1217
        %1247 = vmatpush.msra.mxu0 %v1216
        %1248 = vmatmul.f32.gmra.mxu0 %v1230
        %v1249 = vpop.f32.mrf.mxu0
        %v1250 = vadd.f32 %v1226, %v1249
        %1251 = vdwg.mxu0
        %v1252 = vadd.f32 %v1100, %v1250
        %1253 = vst.msk [vmem:[%s391] sm:$0xff] %vm1103, %v1252
        %s1254 = sand.u32 %s283, 1
        %s1255 = scalar_lea.sflag [#allocation6], %s1254
        %s1256 = sand.u32 %s283, 1
        %s1257 = smul.addr %s1256, 8
        %s1258 = scalar_lea.vmem [#allocation5], %s1257
        // Predicated region
        $region69: #{tpu_custom_call.1} parent=63 // pred_check
          %p1259 = pneg %p293
        $region70: #{tpu_custom_call.1} parent=63 // pred_check_branch
          %1261 = sbr.rel (%p1259) target = $region72
        $region71: #{tpu_custom_call.1} parent=63 // pred_region
          %1263 = vsyncadd %s1255, 0
          %s1264 = sadd.s32 %s30, %s29
          %s1265 = smul.addr %s1264, 8
          %s1266 = scalar_lea.hbm %s11, %s1265
          %s1268 = sshll.u32 %s1258, 4
          %s1269 = int_to_ptr.vmem [resolvable:$true] %s1268
          %s1270 = sshll.u32 %s1266, 4
          %s1271 = int_to_ptr.hbm [resolvable:$true] %s1270
          %1273 = dma.vmem_to_hbm [thread:$0]  %s1269, 128, %s1271, %s1255
        $region72: #{tpu_custom_call.1} parent=63 // pred_fallthru
          _
      $region64: #{tpu_custom_call.1} parent=5 // pred_fallthru
        _
      %p1274 = scmp.le.s32.totalorder 2, %s20
      // Predicated region
      $region73: #{tpu_custom_call.1} parent=5 // pred_check
        %p1275 = pneg %p1274
      $region74: #{tpu_custom_call.1} parent=5 // pred_check_branch
        %1277 = sbr.rel (%p1275) target = $region76
      $region75: #{tpu_custom_call.1} parent=5 // pred_region
        %s1278 = ssub.s32 %s20, 2
        // Predicated region
        $region77: #{tpu_custom_call.1} parent=75 // pred_check
          %p1279 = pneg %p299
        $region78: #{tpu_custom_call.1} parent=75 // pred_check_branch
          %1281 = sbr.rel (%p1279) target = $region80
        $region79: #{tpu_custom_call.1} parent=75 // pred_region
          %s1282 = sand.u32 %s284, 1
          %s1283 = scalar_lea.sflag [#allocation6], %s1282
          %s1284 = sand.u32 %s284, 1
          %s1285 = smul.addr %s1284, 8
          %s1286 = scalar_lea.vmem [#allocation5], %s1285
          %1288 = dma.done %s1283, 128
        $region80: #{tpu_custom_call.1} parent=75 // pred_fallthru
          _
      $region76: #{tpu_custom_call.1} parent=5 // pred_fallthru
        _
    $region6: #{tpu_custom_call.1} parent=1 // loop_footer
      %s24 = sadd.s32 1, %s20
    $region7: #{tpu_custom_call.1} parent=1 // loop_footer_branch
      %19 = sbr.rel target = $region3
    $region8: #{tpu_custom_call.1} parent=1 // loop_exit
      _
    %1289 = vsyncpa [#allocation6], 1
    %s1290 = scalar_lea.sflag [#allocation6], 1
    %1291 = vsyncpa %s1290, 1

// kernel: tpu_custom_call.1
$region0: #{tpu_custom_call.1}
  #allocation0 [shape = 'u32[]', space=smem, size = 0x4, offset = 0x4, fixed_abs, tag = 'smem constant byte address 0x4 - core index']
  #allocation1 [shape = 'u32[72,128]{1,0:T(1,128)}', space=vmem, size = 0x9000, scoped, tag = 'internal scratch']
  #allocation2 [shape = 'f32[4,8,8]{2,1,0:T(8,128)}', space=vmem, size = 0x4000, scoped, tag = 'scratch operand']
  #allocation3 [shape = 'f32[4,8,8]{2,1,0:T(8,128)}', space=vmem, size = 0x4000, scoped, tag = 'scratch operand']
  #allocation4 [shape = 'f32[4,8,8]{2,1,0:T(8,128)}', space=vmem, size = 0x4000, scoped, tag = 'scratch operand']
  %s0 = inlined_call_operand.vmem [shape: f32[2,8,32], index: 0, kind: input, shape index: {}]
  %s1 = inlined_call_operand.vmem [shape: f32[1,32], index: 1, kind: input, shape index: {}]
  %s2 = inlined_call_operand.vmem [shape: f32[1,32], index: 2, kind: input, shape index: {}]
  %s3 = inlined_call_operand.vmem [shape: f32[96,32], index: 3, kind: input, shape index: {}]
  %s4 = inlined_call_operand.vmem [shape: f32[96,1], index: 4, kind: input, shape index: {}]
  %s5 = inlined_call_operand.vmem [shape: f32[1,32], index: 5, kind: input, shape index: {}]
  %s6 = inlined_call_operand.vmem [shape: f32[1,32], index: 6, kind: input, shape index: {}]
  %s7 = inlined_call_operand.vmem [shape: f32[32,64], index: 7, kind: input, shape index: {}]
  %s8 = inlined_call_operand.vmem [shape: f32[1,64], index: 8, kind: input, shape index: {}]
  %s9 = inlined_call_operand.vmem [shape: f32[64,32], index: 9, kind: input, shape index: {}]
  %s10 = inlined_call_operand.vmem [shape: f32[1,32], index: 10, kind: input, shape index: {}]
  %s11 = inlined_call_operand.hbm [shape: f32[2,8,32], index: 11, kind: output, shape index: {}]
  %s12 = sld [smem:[#allocation0]]
  $region81: #{tpu_custom_call.1} parent=0
    _
  %s14 = ssub.s32 1, %s12
  %s15 = scalar_select 0, %s14, %s12
  $region1: #{tpu_custom_call.1} parent=0
    #allocation5 [shape = 'u8[8192]{0}', space=vmem, size = 0x2000, scoped, tag = 'output window, operand 0']
    #allocation6 [shape = 's32[2]{0}', space=sflag, size = 0x8, scoped, tag = 'scoped memory for tpu_custom_call.1']
    %16 = vsyncpa [#allocation6], 0
    %s17 = scalar_lea.sflag [#allocation6], 1
    %18 = vsyncpa %s17, 0
    loop: start=0, step=1, limit=4
    $region2: #{tpu_custom_call.1} parent=1 // loop_pre_header
      _
    $region3: #{tpu_custom_call.1} parent=1 // loop_header
      %s20 = sphi 0, %s24
      %p21 = scmp.ge.s32.totalorder %s20, 4
      %s27 = sphi 0, %s39
      %s28 = sphi 0, %s35
      %s29 = sphi 0, %s27
      %s30 = sphi 0, %s28
      %s31 = sphi 0, %s29
      %s32 = sphi 0, %s30
      %s42 = sphi 0, %s44
      %s45 = sphi 0, %s42
      %s46 = sphi 0, %s45
      %s62 = sphi 0, %s46
      %s66 = sphi 0, %s66
      %s68 = sphi 0, %s66
      %s69 = sphi 0, %s68
      %s83 = sphi 0, %s69
      %s87 = sphi 0, %s87
      %s89 = sphi 0, %s87
      %s90 = sphi 0, %s89
      %s104 = sphi 0, %s90
      %s108 = sphi 0, %s108
      %s110 = sphi 0, %s108
      %s111 = sphi 0, %s110
      %s125 = sphi 0, %s111
      %s129 = sphi 0, %s129
      %s131 = sphi 0, %s129
      %s132 = sphi 0, %s131
      %s146 = sphi 0, %s132
      %s150 = sphi 0, %s150
      %s152 = sphi 0, %s150
      %s153 = sphi 0, %s152
      %s167 = sphi 0, %s153
      %s171 = sphi 0, %s171
      %s173 = sphi 0, %s171
      %s174 = sphi 0, %s173
      %s188 = sphi 0, %s174
      %s192 = sphi 0, %s192
      %s194 = sphi 0, %s192
      %s195 = sphi 0, %s194
      %s209 = sphi 0, %s195
      %s213 = sphi 0, %s213
      %s215 = sphi 0, %s213
      %s216 = sphi 0, %s215
      %s230 = sphi 0, %s216
      %s234 = sphi 0, %s234
      %s236 = sphi 0, %s234
      %s237 = sphi 0, %s236
      %s251 = sphi 0, %s237
      %s255 = sphi 0, %s255
      %s257 = sphi 0, %s255
      %s258 = sphi 0, %s257
      %s272 = sphi 0, %s258
      %s280 = sphi 0, %s282
      %s283 = sphi 0, %s280
      %s284 = sphi 0, %s283
      %s300 = sphi 0, %s284
    $region4: #{tpu_custom_call.1} parent=1 // loop_header_branch
      %23 = sbr.rel (%p21) target = $region8
    $region5: #{tpu_custom_call.1} parent=1 // loop_body
      %s25 = ssub.s32 %s20, 1
      %s26 = ssub.s32 %s20, 2
      %s33 = sadd.s32 1, %s28
      %p34 = scmp.ge.s32.totalorder %s33, 1
      %s35 = scalar_select %p34, 0, %s33
      %s36 = sadd.s32 1, %s27
      %s37 = scalar_select %p34, %s36, %s27
      %p38 = scmp.ge.s32.totalorder %s37, 2
      %s39 = scalar_select %p38, 0, %s37
      %s40 = ssub.s32 %s27, %s39
      %p41 = scmp.eq.s32.totalorder %s40, 0
      %s43 = sadd.s32 %s42, 1
      %s44 = scalar_select %p41, %s42, %s43
      %p47 = pneg %p41
      %p48 = scmp.eq.s32.totalorder %s20, 1
      %p49 = por %p47, %p48
      %p50 = scmp.ne.s32.totalorder %s42, %s45
      %p51 = scmp.eq.s32.totalorder %s20, 0
      %p52 = por %p50, %p51
      %p53 = scmp.ne.s32.totalorder %s42, %s45
      %p54 = scmp.eq.s32.totalorder %s25, 1
      %p55 = por %p53, %p54
      %p56 = scmp.ne.s32.totalorder %s45, %s46
      %p57 = scmp.eq.s32.totalorder %s25, 0
      %p58 = por %p56, %p57
      %p59 = scmp.ne.s32.totalorder %s45, %s46
      %p60 = scmp.eq.s32.totalorder %s26, 1
      %p61 = por %p59, %p60
      %p63 = scmp.ne.s32.totalorder %s46, %s62
      %p64 = scmp.eq.s32.totalorder %s26, 0
      %p65 = por %p63, %p64
      %s67 = sadd.s32 %s66, 1
      %p70 = scmp.eq.s32.totalorder %s20, 1
      %p71 = scmp.ne.s32.totalorder %s66, %s68
      %p72 = scmp.eq.s32.totalorder %s20, 0
      %p73 = por %p71, %p72
      %p74 = scmp.ne.s32.totalorder %s66, %s68
      %p75 = scmp.eq.s32.totalorder %s25, 1
      %p76 = por %p74, %p75
      %p77 = scmp.ne.s32.totalorder %s68, %s69
      %p78 = scmp.eq.s32.totalorder %s25, 0
      %p79 = por %p77, %p78
      %p80 = scmp.ne.s32.totalorder %s68, %s69
      %p81 = scmp.eq.s32.totalorder %s26, 1
      %p82 = por %p80, %p81
      %p84 = scmp.ne.s32.totalorder %s69, %s83
      %p85 = scmp.eq.s32.totalorder %s26, 0
      %p86 = por %p84, %p85
      %s88 = sadd.s32 %s87, 1
      %p91 = scmp.eq.s32.totalorder %s20, 1
      %p92 = scmp.ne.s32.totalorder %s87, %s89
      %p93 = scmp.eq.s32.totalorder %s20, 0
      %p94 = por %p92, %p93
      %p95 = scmp.ne.s32.totalorder %s87, %s89
      %p96 = scmp.eq.s32.totalorder %s25, 1
      %p97 = por %p95, %p96
      %p98 = scmp.ne.s32.totalorder %s89, %s90
      %p99 = scmp.eq.s32.totalorder %s25, 0
      %p100 = por %p98, %p99
      %p101 = scmp.ne.s32.totalorder %s89, %s90
      %p102 = scmp.eq.s32.totalorder %s26, 1
      %p103 = por %p101, %p102
      %p105 = scmp.ne.s32.totalorder %s90, %s104
      %p106 = scmp.eq.s32.totalorder %s26, 0
      %p107 = por %p105, %p106
      %s109 = sadd.s32 %s108, 1
      %p112 = scmp.eq.s32.totalorder %s20, 1
      %p113 = scmp.ne.s32.totalorder %s108, %s110
      %p114 = scmp.eq.s32.totalorder %s20, 0
      %p115 = por %p113, %p114
      %p116 = scmp.ne.s32.totalorder %s108, %s110
      %p117 = scmp.eq.s32.totalorder %s25, 1
      %p118 = por %p116, %p117
      %p119 = scmp.ne.s32.totalorder %s110, %s111
      %p120 = scmp.eq.s32.totalorder %s25, 0
      %p121 = por %p119, %p120
      %p122 = scmp.ne.s32.totalorder %s110, %s111
      %p123 = scmp.eq.s32.totalorder %s26, 1
      %p124 = por %p122, %p123
      %p126 = scmp.ne.s32.totalorder %s111, %s125
      %p127 = scmp.eq.s32.totalorder %s26, 0
      %p128 = por %p126, %p127
      %s130 = sadd.s32 %s129, 1
      %p133 = scmp.eq.s32.totalorder %s20, 1
      %p134 = scmp.ne.s32.totalorder %s129, %s131
      %p135 = scmp.eq.s32.totalorder %s20, 0
      %p136 = por %p134, %p135
      %p137 = scmp.ne.s32.totalorder %s129, %s131
      %p138 = scmp.eq.s32.totalorder %s25, 1
      %p139 = por %p137, %p138
      %p140 = scmp.ne.s32.totalorder %s131, %s132
      %p141 = scmp.eq.s32.totalorder %s25, 0
      %p142 = por %p140, %p141
      %p143 = scmp.ne.s32.totalorder %s131, %s132
      %p144 = scmp.eq.s32.totalorder %s26, 1
      %p145 = por %p143, %p144
      %p147 = scmp.ne.s32.totalorder %s132, %s146
      %p148 = scmp.eq.s32.totalorder %s26, 0
      %p149 = por %p147, %p148
      %s151 = sadd.s32 %s150, 1
      %p154 = scmp.eq.s32.totalorder %s20, 1
      %p155 = scmp.ne.s32.totalorder %s150, %s152
      %p156 = scmp.eq.s32.totalorder %s20, 0
      %p157 = por %p155, %p156
      %p158 = scmp.ne.s32.totalorder %s150, %s152
      %p159 = scmp.eq.s32.totalorder %s25, 1
      %p160 = por %p158, %p159
      %p161 = scmp.ne.s32.totalorder %s152, %s153
      %p162 = scmp.eq.s32.totalorder %s25, 0
      %p163 = por %p161, %p162
      %p164 = scmp.ne.s32.totalorder %s152, %s153
      %p165 = scmp.eq.s32.totalorder %s26, 1
      %p166 = por %p164, %p165
      %p168 = scmp.ne.s32.totalorder %s153, %s167
      %p169 = scmp.eq.s32.totalorder %s26, 0
      %p170 = por %p168, %p169
      %s172 = sadd.s32 %s171, 1
      %p175 = scmp.eq.s32.totalorder %s20, 1
      %p176 = scmp.ne.s32.totalorder %s171, %s173
      %p177 = scmp.eq.s32.totalorder %s20, 0
      %p178 = por %p176, %p177
      %p179 = scmp.ne.s32.totalorder %s171, %s173
      %p180 = scmp.eq.s32.totalorder %s25, 1
      %p181 = por %p179, %p180
      %p182 = scmp.ne.s32.totalorder %s173, %s174
      %p183 = scmp.eq.s32.totalorder %s25, 0
      %p184 = por %p182, %p183
      %p185 = scmp.ne.s32.totalorder %s173, %s174
      %p186 = scmp.eq.s32.totalorder %s26, 1
      %p187 = por %p185, %p186
      %p189 = scmp.ne.s32.totalorder %s174, %s188
      %p190 = scmp.eq.s32.totalorder %s26, 0
      %p191 = por %p189, %p190
      %s193 = sadd.s32 %s192, 1
      %p196 = scmp.eq.s32.totalorder %s20, 1
      %p197 = scmp.ne.s32.totalorder %s192, %s194
      %p198 = scmp.eq.s32.totalorder %s20, 0
      %p199 = por %p197, %p198
      %p200 = scmp.ne.s32.totalorder %s192, %s194
      %p201 = scmp.eq.s32.totalorder %s25, 1
      %p202 = por %p200, %p201
      %p203 = scmp.ne.s32.totalorder %s194, %s195
      %p204 = scmp.eq.s32.totalorder %s25, 0
      %p205 = por %p203, %p204
      %p206 = scmp.ne.s32.totalorder %s194, %s195
      %p207 = scmp.eq.s32.totalorder %s26, 1
      %p208 = por %p206, %p207
      %p210 = scmp.ne.s32.totalorder %s195, %s209
      %p211 = scmp.eq.s32.totalorder %s26, 0
      %p212 = por %p210, %p211
      %s214 = sadd.s32 %s213, 1
      %p217 = scmp.eq.s32.totalorder %s20, 1
      %p218 = scmp.ne.s32.totalorder %s213, %s215
      %p219 = scmp.eq.s32.totalorder %s20, 0
      %p220 = por %p218, %p219
      %p221 = scmp.ne.s32.totalorder %s213, %s215
      %p222 = scmp.eq.s32.totalorder %s25, 1
      %p223 = por %p221, %p222
      %p224 = scmp.ne.s32.totalorder %s215, %s216
      %p225 = scmp.eq.s32.totalorder %s25, 0
      %p226 = por %p224, %p225
      %p227 = scmp.ne.s32.totalorder %s215, %s216
      %p228 = scmp.eq.s32.totalorder %s26, 1
      %p229 = por %p227, %p228
      %p231 = scmp.ne.s32.totalorder %s216, %s230
      %p232 = scmp.eq.s32.totalorder %s26, 0
      %p233 = por %p231, %p232
      %s235 = sadd.s32 %s234, 1
      %p238 = scmp.eq.s32.totalorder %s20, 1
      %p239 = scmp.ne.s32.totalorder %s234, %s236
      %p240 = scmp.eq.s32.totalorder %s20, 0
      %p241 = por %p239, %p240
      %p242 = scmp.ne.s32.totalorder %s234, %s236
      %p243 = scmp.eq.s32.totalorder %s25, 1
      %p244 = por %p242, %p243
      %p245 = scmp.ne.s32.totalorder %s236, %s237
      %p246 = scmp.eq.s32.totalorder %s25, 0
      %p247 = por %p245, %p246
      %p248 = scmp.ne.s32.totalorder %s236, %s237
      %p249 = scmp.eq.s32.totalorder %s26, 1
      %p250 = por %p248, %p249
      %p252 = scmp.ne.s32.totalorder %s237, %s251
      %p253 = scmp.eq.s32.totalorder %s26, 0
      %p254 = por %p252, %p253
      %s256 = sadd.s32 %s255, 1
      %p259 = scmp.eq.s32.totalorder %s20, 1
      %p260 = scmp.ne.s32.totalorder %s255, %s257
      %p261 = scmp.eq.s32.totalorder %s20, 0
      %p262 = por %p260, %p261
      %p263 = scmp.ne.s32.totalorder %s255, %s257
      %p264 = scmp.eq.s32.totalorder %s25, 1
      %p265 = por %p263, %p264
      %p266 = scmp.ne.s32.totalorder %s257, %s258
      %p267 = scmp.eq.s32.totalorder %s25, 0
      %p268 = por %p266, %p267
      %p269 = scmp.ne.s32.totalorder %s257, %s258
      %p270 = scmp.eq.s32.totalorder %s26, 1
      %p271 = por %p269, %p270
      %p273 = scmp.ne.s32.totalorder %s258, %s272
      %p274 = scmp.eq.s32.totalorder %s26, 0
      %p275 = por %p273, %p274
      %s276 = ssub.s32 %s27, %s39
      %s277 = ssub.s32 %s28, %s35
      %s278 = sor.u32 %s276, %s277
      %p279 = scmp.eq.s32.totalorder %s278, 0
      %s281 = sadd.s32 %s280, 1
      %s282 = scalar_select %p279, %s280, %s281
      %p285 = pneg %p279
      %p286 = scmp.eq.s32.totalorder %s20, 1
      %p287 = por %p285, %p286
      %p288 = scmp.ne.s32.totalorder %s280, %s283
      %p289 = scmp.eq.s32.totalorder %s20, 0
      %p290 = por %p288, %p289
      %p291 = scmp.ne.s32.totalorder %s280, %s283
      %p292 = scmp.eq.s32.totalorder %s25, 1
      %p293 = por %p291, %p292
      %p294 = scmp.ne.s32.totalorder %s283, %s284
      %p295 = scmp.eq.s32.totalorder %s25, 0
      %p296 = por %p294, %p295
      %p297 = scmp.ne.s32.totalorder %s283, %s284
      %p298 = scmp.eq.s32.totalorder %s26, 1
      %p299 = por %p297, %p298
      %p301 = scmp.ne.s32.totalorder %s284, %s300
      %p302 = scmp.eq.s32.totalorder %s26, 0
      %p303 = por %p301, %p302
      %p304 = scmp.le.s32.totalorder 1, %s20
      %p305 = scmp.lt.s32.totalorder %s20, 3
      %p306 = pnand %p304, %p305
      %p307 = pneg %p306
      // Predicated region
      $region9: #{tpu_custom_call.1} parent=5 // pred_check
        _
      $region10: #{tpu_custom_call.1} parent=5 // pred_check_branch
        %309 = sbr.rel (%p306) target = $region12
      $region11: #{tpu_custom_call.1} parent=5 // pred_region
        %s310 = ssub.s32 %s20, 1
        // Predicated region
        $region13: #{tpu_custom_call.1} parent=11 // pred_check
          %p311 = pneg %p79
        $region14: #{tpu_custom_call.1} parent=11 // pred_check_branch
          %313 = sbr.rel (%p311) target = $region16
        $region15: #{tpu_custom_call.1} parent=11 // pred_region
          _
        $region16: #{tpu_custom_call.1} parent=11 // pred_fallthru
          _
        // Predicated region
        $region17: #{tpu_custom_call.1} parent=11 // pred_check
          %p314 = pneg %p100
        $region18: #{tpu_custom_call.1} parent=11 // pred_check_branch
          %316 = sbr.rel (%p314) target = $region20
        $region19: #{tpu_custom_call.1} parent=11 // pred_region
          _
        $region20: #{tpu_custom_call.1} parent=11 // pred_fallthru
          _
        // Predicated region
        $region21: #{tpu_custom_call.1} parent=11 // pred_check
          %p317 = pneg %p121
        $region22: #{tpu_custom_call.1} parent=11 // pred_check_branch
          %319 = sbr.rel (%p317) target = $region24
        $region23: #{tpu_custom_call.1} parent=11 // pred_region
          _
        $region24: #{tpu_custom_call.1} parent=11 // pred_fallthru
          _
        // Predicated region
        $region25: #{tpu_custom_call.1} parent=11 // pred_check
          %p320 = pneg %p142
        $region26: #{tpu_custom_call.1} parent=11 // pred_check_branch
          %322 = sbr.rel (%p320) target = $region28
        $region27: #{tpu_custom_call.1} parent=11 // pred_region
          _
        $region28: #{tpu_custom_call.1} parent=11 // pred_fallthru
          _
        // Predicated region
        $region29: #{tpu_custom_call.1} parent=11 // pred_check
          %p323 = pneg %p163
        $region30: #{tpu_custom_call.1} parent=11 // pred_check_branch
          %325 = sbr.rel (%p323) target = $region32
        $region31: #{tpu_custom_call.1} parent=11 // pred_region
          _
        $region32: #{tpu_custom_call.1} parent=11 // pred_fallthru
          _
        // Predicated region
        $region33: #{tpu_custom_call.1} parent=11 // pred_check
          %p326 = pneg %p184
        $region34: #{tpu_custom_call.1} parent=11 // pred_check_branch
          %328 = sbr.rel (%p326) target = $region36
        $region35: #{tpu_custom_call.1} parent=11 // pred_region
          _
        $region36: #{tpu_custom_call.1} parent=11 // pred_fallthru
          _
        // Predicated region
        $region37: #{tpu_custom_call.1} parent=11 // pred_check
          %p329 = pneg %p205
        $region38: #{tpu_custom_call.1} parent=11 // pred_check_branch
          %331 = sbr.rel (%p329) target = $region40
        $region39: #{tpu_custom_call.1} parent=11 // pred_region
          _
        $region40: #{tpu_custom_call.1} parent=11 // pred_fallthru
          _
        // Predicated region
        $region41: #{tpu_custom_call.1} parent=11 // pred_check
          %p332 = pneg %p226
        $region42: #{tpu_custom_call.1} parent=11 // pred_check_branch
          %334 = sbr.rel (%p332) target = $region44
        $region43: #{tpu_custom_call.1} parent=11 // pred_region
          _
        $region44: #{tpu_custom_call.1} parent=11 // pred_fallthru
          _
        // Predicated region
        $region45: #{tpu_custom_call.1} parent=11 // pred_check
          %p335 = pneg %p247
        $region46: #{tpu_custom_call.1} parent=11 // pred_check_branch
          %337 = sbr.rel (%p335) target = $region48
        $region47: #{tpu_custom_call.1} parent=11 // pred_region
          _
        $region48: #{tpu_custom_call.1} parent=11 // pred_fallthru
          _
        // Predicated region
        $region49: #{tpu_custom_call.1} parent=11 // pred_check
          %p338 = pneg %p268
        $region50: #{tpu_custom_call.1} parent=11 // pred_check_branch
          %340 = sbr.rel (%p338) target = $region52
        $region51: #{tpu_custom_call.1} parent=11 // pred_region
          _
        $region52: #{tpu_custom_call.1} parent=11 // pred_fallthru
          _
      $region12: #{tpu_custom_call.1} parent=5 // pred_fallthru
        _
      %p341 = scmp.lt.s32.totalorder %s20, 2
      // Predicated region
      $region53: #{tpu_custom_call.1} parent=5 // pred_check
        %p342 = pneg %p341
      $region54: #{tpu_custom_call.1} parent=5 // pred_check_branch
        %344 = sbr.rel (%p342) target = $region56
      $region55: #{tpu_custom_call.1} parent=5 // pred_region
        // Predicated region
        $region57: #{tpu_custom_call.1} parent=55 // pred_check
          %p345 = pneg %p52
        $region58: #{tpu_custom_call.1} parent=55 // pred_check_branch
          %347 = sbr.rel (%p345) target = $region60
        $region59: #{tpu_custom_call.1} parent=55 // pred_region
          %p348 = scmp.lt.s32.totalorder %s27, 1
          %s349 = scalar_select %p348, %s27, 1
          %s350 = smul.addr %s349, 8
          %s351 = scalar_lea.vmem %s0, %s350
        $region60: #{tpu_custom_call.1} parent=55 // pred_fallthru
          _
      $region56: #{tpu_custom_call.1} parent=5 // pred_fallthru
        _
      %p352 = scmp.le.s32.totalorder 1, %s20
      %p353 = scmp.lt.s32.totalorder %s20, 3
      %p354 = pnand %p352, %p353
      %p355 = pneg %p354
      // Predicated region
      $region61: #{tpu_custom_call.1} parent=5 // pred_check
        _
      $region62: #{tpu_custom_call.1} parent=5 // pred_check_branch
        %357 = sbr.rel (%p354) target = $region64
      $region63: #{tpu_custom_call.1} parent=5 // pred_region
        %s358 = ssub.s32 %s20, 1
        %p359 = scmp.lt.s32.totalorder %s29, 1
        %s360 = scalar_select %p359, %s29, 1
        %s361 = smul.addr %s360, 8
        %s362 = scalar_lea.vmem %s0, %s361
        %p363 = pneg %p58
        %p364 = pneg %p55
        %p365 = pneg %p79
        %p366 = pneg %p76
        %p367 = pneg %p100
        %p368 = pneg %p97
        %p369 = pneg %p121
        %p370 = pneg %p118
        %p371 = pneg %p142
        %p372 = pneg %p139
        %p373 = pneg %p163
        %p374 = pneg %p160
        %p375 = pneg %p184
        %p376 = pneg %p181
        %p377 = pneg %p205
        %p378 = pneg %p202
        %p379 = pneg %p226
        %p380 = pneg %p223
        %p381 = pneg %p247
        %p382 = pneg %p244
        %p383 = pneg %p268
        %p384 = pneg %p265
        %p385 = pneg %p296
        %p386 = pneg %p293
        %s387 = sand.u32 %s283, 1
        %s388 = scalar_lea.sflag [#allocation6], %s387
        %s389 = sand.u32 %s283, 1
        %s390 = smul.addr %s389, 8
        %s391 = scalar_lea.vmem [#allocation5], %s390
        %p392 = scmp.lt.s32.totalorder %s29, 1
        %s393 = scalar_select %p392, %s29, 1
        %s394 = smul.addr %s393, 8
        %s395 = scalar_lea.vmem %s0, %s394
        %p396 = scmp.eq.s32.totalorder %s30, 0
        // Predicated region
        $region65: #{tpu_custom_call.1} parent=63 // pred_check
          %p397 = pneg %p396
        $region66: #{tpu_custom_call.1} parent=63 // pred_check_branch
          %399 = sbr.rel (%p397) target = $region68
        $region67: #{tpu_custom_call.1} parent=63 // pred_region
          %v400 = vld [vmem:[%s395] sm:$0xff]
          %v401 = vld [vmem:[%s1] sm:$0x1]
          %v402 = vld [vmem:[%s2] sm:$0x1]
          %vm403 = vcmask 261120
          %v404 = vsel %vm403, %v400, 0.0
          %405 = vadd.xlane.f32.xlu0 %v404
          %v406 = vpop.xlane.xlu0 %405
          %v407 = vrcp.pop 32.0
          %v408 = vmul.f32 32.0, %v407
          %v409 = vsub.f32 1.0, %v408
          %v410 = vmul.f32 %v407, %v409
          %v411 = vadd.f32 %v407, %v410
          %vm412 = vweird.f32 %v407
          %v413 = vsel %vm412, %v407, %v411
          %v414 = vmul.f32 %v406, %v413
          %v415 = vsub.f32 %v400, %v414
          %v416 = vmul.f32 %v415, %v415
          %v417 = vsel %vm403, %v416, 0.0
          %418 = vadd.xlane.f32.xlu0 %v417
          %v419 = vpop.xlane.xlu0 %418
          %v420 = vmul.f32 %v419, %v413
          %v421 = vadd.f32 %v420, 1e-05
          %v422 = vrsqrt.pop %v421
          %v423 = vmul.f32 %v422, %v421
          %v424 = vmul.f32 %v423, %v422
          %v425 = vmul.f32 0.5, %v424
          %v426 = vsub.f32 1.5, %v425
          %v427 = vmul.f32 %v422, %v426
          %vm428 = vweird.f32 %v421
          %vm429 = vweird.f32 %v422
          %vm430 = vmor %vm428, %vm429
          %v431 = vsel %vm430, %v422, %v427
          %v432 = vmul.f32 %v415, %v431
          %v434 = vperm.slane %v401, 0
          %v436 = vmul.f32 %v432, %v434
          %v438 = vperm.slane %v402, 0
          %v440 = vadd.f32 %v436, %v438
          %v441 = vld [vmem:[%s3] sm:$0xff]
          %v442 = vld [vmem:[%s3 + $0x8] sm:$0xff]
          %v443 = vld [vmem:[%s3 + $0x10] sm:$0xff]
          %v444 = vld [vmem:[%s3 + $0x18] sm:$0xff]
          %v445 = vld [vmem:[%s3 + $0x20] sm:$0xff]
          %v446 = vld [vmem:[%s3 + $0x28] sm:$0xff]
          %v447 = vld [vmem:[%s3 + $0x30] sm:$0xff]
          %v448 = vld [vmem:[%s3 + $0x38] sm:$0xff]
          %v449 = vld [vmem:[%s3 + $0x40] sm:$0xff]
          %v450 = vld [vmem:[%s3 + $0x48] sm:$0xff]
          %v451 = vld [vmem:[%s3 + $0x50] sm:$0xff]
          %v452 = vld [vmem:[%s3 + $0x58] sm:$0xff]
          %v453 = vld [vmem:[%s4] sm:$0xff]
          %v454 = vld [vmem:[%s4 + $0x8] sm:$0xff]
          %v455 = vld [vmem:[%s4 + $0x10] sm:$0xff]
          %v456 = vld [vmem:[%s4 + $0x18] sm:$0xff]
          %v457 = vld [vmem:[%s4 + $0x20] sm:$0xff]
          %v458 = vld [vmem:[%s4 + $0x28] sm:$0xff]
          %v459 = vld [vmem:[%s4 + $0x30] sm:$0xff]
          %v460 = vld [vmem:[%s4 + $0x38] sm:$0xff]
          %v461 = vld [vmem:[%s4 + $0x40] sm:$0xff]
          %v462 = vld [vmem:[%s4 + $0x48] sm:$0xff]
          %v463 = vld [vmem:[%s4 + $0x50] sm:$0xff]
          %v464 = vld [vmem:[%s4 + $0x58] sm:$0xff]
          %466 = vset.pattern.permute.xlu0 0
          %467 = vperm.xlu0 %466, %v453
          %v468 = vpop.permute.xlu0 %467
          %471 = vset.pattern.permute.xlu0 0
          %472 = vperm.xlu0 %471, %v454
          %v473 = vpop.permute.xlu0 %472
          %476 = vset.pattern.permute.xlu0 0
          %477 = vperm.xlu0 %476, %v455
          %v478 = vpop.permute.xlu0 %477
          %481 = vset.pattern.permute.xlu0 0
          %482 = vperm.xlu0 %481, %v456
          %v483 = vpop.permute.xlu0 %482
          %486 = vset.pattern.permute.xlu0 0
          %487 = vperm.xlu0 %486, %v457
          %v488 = vpop.permute.xlu0 %487
          %491 = vset.pattern.permute.xlu0 0
          %492 = vperm.xlu0 %491, %v458
          %v493 = vpop.permute.xlu0 %492
          %496 = vset.pattern.permute.xlu0 0
          %497 = vperm.xlu0 %496, %v459
          %v498 = vpop.permute.xlu0 %497
          %501 = vset.pattern.permute.xlu0 0
          %502 = vperm.xlu0 %501, %v460
          %v503 = vpop.permute.xlu0 %502
          %506 = vset.pattern.permute.xlu0 0
          %507 = vperm.xlu0 %506, %v461
          %v508 = vpop.permute.xlu0 %507
          %511 = vset.pattern.permute.xlu0 0
          %512 = vperm.xlu0 %511, %v462
          %v513 = vpop.permute.xlu0 %512
          %516 = vset.pattern.permute.xlu0 0
          %517 = vperm.xlu0 %516, %v463
          %v518 = vpop.permute.xlu0 %517
          %521 = vset.pattern.permute.xlu0 0
          %522 = vperm.xlu0 %521, %v464
          %v523 = vpop.permute.xlu0 %522
          %v526 = vsel %vm403, %v441, 0
          %v529 = vsel %vm403, %v442, 0
          %v532 = vsel %vm403, %v443, 0
          %v535 = vsel %vm403, %v444, 0
          %v538 = vsel %vm403, %v445, 0
          %v541 = vsel %vm403, %v446, 0
          %v544 = vsel %vm403, %v447, 0
          %v547 = vsel %vm403, %v448, 0
          %v550 = vsel %vm403, %v449, 0
          %v553 = vsel %vm403, %v450, 0
          %v556 = vsel %vm403, %v451, 0
          %v559 = vsel %vm403, %v452, 0
          %v562 = vsel %vm403, %v440, 0
          %564 = vmatpush.xpose.msra.mxu0 0.0
          %565 = vmatpush.xpose.msra.mxu0 0.0
          %566 = vmatpush.xpose.msra.mxu0 0.0
          %567 = vmatpush.xpose.msra.mxu0 0.0
          %568 = vmatpush.xpose.msra.mxu0 0.0
          %569 = vmatpush.xpose.msra.mxu0 0.0
          %570 = vmatpush.xpose.msra.mxu0 0.0
          %571 = vmatpush.xpose.msra.mxu0 0.0
          %572 = vmatpush.xpose.msra.mxu0 0.0
          %573 = vmatpush.xpose.msra.mxu0 0.0
          %574 = vmatpush.xpose.msra.mxu0 0.0
          %575 = vmatpush.xpose.msra.mxu0 0.0
          %576 = vmatpush.xpose.msra.mxu0 0.0
          %577 = vmatpush.xpose.msra.mxu0 0.0
          %578 = vmatpush.xpose.msra.mxu0 0.0
          %579 = vmatpush.xpose.msra.mxu0 %v562
          %580 = vmatmul.f32.gmra.mxu0 %v526
          %v581 = vpop.f32.mrf.mxu0
          %v582 = vadd.f32 %v468, %v581
          %583 = vmatmul.f32.gmra.mxu0 %v529
          %v584 = vpop.f32.mrf.mxu0
          %v585 = vadd.f32 %v473, %v584
          %586 = vmatmul.f32.gmra.mxu0 %v532
          %v587 = vpop.f32.mrf.mxu0
          %v588 = vadd.f32 %v478, %v587
          %589 = vmatmul.f32.gmra.mxu0 %v535
          %v590 = vpop.f32.mrf.mxu0
          %v591 = vadd.f32 %v483, %v590
          %592 = vmatmul.f32.gmra.mxu0 %v538
          %v593 = vpop.f32.mrf.mxu0
          %v594 = vadd.f32 %v488, %v593
          %595 = vmatmul.f32.gmra.mxu0 %v541
          %v596 = vpop.f32.mrf.mxu0
          %v597 = vadd.f32 %v493, %v596
          %598 = vmatmul.f32.gmra.mxu0 %v544
          %v599 = vpop.f32.mrf.mxu0
          %v600 = vadd.f32 %v498, %v599
          %601 = vmatmul.f32.gmra.mxu0 %v547
          %v602 = vpop.f32.mrf.mxu0
          %v603 = vadd.f32 %v503, %v602
          %604 = vmatmul.f32.gmra.mxu0 %v550
          %v605 = vpop.f32.mrf.mxu0
          %v606 = vadd.f32 %v508, %v605
          %607 = vmatmul.f32.gmra.mxu0 %v553
          %v608 = vpop.f32.mrf.mxu0
          %v609 = vadd.f32 %v513, %v608
          %610 = vmatmul.f32.gmra.mxu0 %v556
          %v611 = vpop.f32.mrf.mxu0
          %v612 = vadd.f32 %v518, %v611
          %613 = vmatmul.f32.gmra.mxu0 %v559
          %v614 = vpop.f32.mrf.mxu0
          %v615 = vadd.f32 %v523, %v614
          %616 = vdwg.mxu0
          %617 = vxpose.xlu0.b32.start [1/16] %v582, 128
          %618 = vxpose.xlu0.b32.cont [2/16] 0.0, 128
          %619 = vxpose.xlu0.b32.cont [3/16] 0.0, 128
          %620 = vxpose.xlu0.b32.cont [4/16] 0.0, 128
          %621 = vxpose.xlu0.b32.cont [5/16] 0.0, 128
          %622 = vxpose.xlu0.b32.cont [6/16] 0.0, 128
          %623 = vxpose.xlu0.b32.cont [7/16] 0.0, 128
          %624 = vxpose.xlu0.b32.cont [8/16] 0.0, 128
          %625 = vxpose.xlu0.b32.cont [9/16] 0.0, 128
          %626 = vxpose.xlu0.b32.cont [10/16] 0.0, 128
          %627 = vxpose.xlu0.b32.cont [11/16] 0.0, 128
          %628 = vxpose.xlu0.b32.cont [12/16] 0.0, 128
          %629 = vxpose.xlu0.b32.cont [13/16] 0.0, 128
          %630 = vxpose.xlu0.b32.cont [14/16] 0.0, 128
          %631 = vxpose.xlu0.b32.cont [15/16] 0.0, 128
          %632 = vxpose.xlu0.b32.end [16/16] 0.0, 128
          %v633 = vpop.trf.xlu0
          %v634 = vpop.trf.xlu0
          %v635 = vpop.trf.xlu0
          %v636 = vpop.trf.xlu0
          %v637 = vpop.trf.xlu0
          %v638 = vpop.trf.xlu0
          %v639 = vpop.trf.xlu0
          %v640 = vpop.trf.xlu0
          %v641 = vpop.trf.xlu0
          %v642 = vpop.trf.xlu0
          %v643 = vpop.trf.xlu0
          %v644 = vpop.trf.xlu0
          %v645 = vpop.trf.xlu0
          %v646 = vpop.trf.xlu0
          %v647 = vpop.trf.xlu0
          %v648 = vpop.trf.xlu0
          %649 = vxpose.xlu0.b32.start [1/16] %v585, 128
          %650 = vxpose.xlu0.b32.cont [2/16] 0.0, 128
          %651 = vxpose.xlu0.b32.cont [3/16] 0.0, 128
          %652 = vxpose.xlu0.b32.cont [4/16] 0.0, 128
          %653 = vxpose.xlu0.b32.cont [5/16] 0.0, 128
          %654 = vxpose.xlu0.b32.cont [6/16] 0.0, 128
          %655 = vxpose.xlu0.b32.cont [7/16] 0.0, 128
          %656 = vxpose.xlu0.b32.cont [8/16] 0.0, 128
          %657 = vxpose.xlu0.b32.cont [9/16] 0.0, 128
          %658 = vxpose.xlu0.b32.cont [10/16] 0.0, 128
          %659 = vxpose.xlu0.b32.cont [11/16] 0.0, 128
          %660 = vxpose.xlu0.b32.cont [12/16] 0.0, 128
          %661 = vxpose.xlu0.b32.cont [13/16] 0.0, 128
          %662 = vxpose.xlu0.b32.cont [14/16] 0.0, 128
          %663 = vxpose.xlu0.b32.cont [15/16] 0.0, 128
          %664 = vxpose.xlu0.b32.end [16/16] 0.0, 128
          %v665 = vpop.trf.xlu0
          %v666 = vpop.trf.xlu0
          %v667 = vpop.trf.xlu0
          %v668 = vpop.trf.xlu0
          %v669 = vpop.trf.xlu0
          %v670 = vpop.trf.xlu0
          %v671 = vpop.trf.xlu0
          %v672 = vpop.trf.xlu0
          %v673 = vpop.trf.xlu0
          %v674 = vpop.trf.xlu0
          %v675 = vpop.trf.xlu0
          %v676 = vpop.trf.xlu0
          %v677 = vpop.trf.xlu0
          %v678 = vpop.trf.xlu0
          %v679 = vpop.trf.xlu0
          %v680 = vpop.trf.xlu0
          %681 = vxpose.xlu0.b32.start [1/16] %v588, 128
          %682 = vxpose.xlu0.b32.cont [2/16] 0.0, 128
          %683 = vxpose.xlu0.b32.cont [3/16] 0.0, 128
          %684 = vxpose.xlu0.b32.cont [4/16] 0.0, 128
          %685 = vxpose.xlu0.b32.cont [5/16] 0.0, 128
          %686 = vxpose.xlu0.b32.cont [6/16] 0.0, 128
          %687 = vxpose.xlu0.b32.cont [7/16] 0.0, 128
          %688 = vxpose.xlu0.b32.cont [8/16] 0.0, 128
          %689 = vxpose.xlu0.b32.cont [9/16] 0.0, 128
          %690 = vxpose.xlu0.b32.cont [10/16] 0.0, 128
          %691 = vxpose.xlu0.b32.cont [11/16] 0.0, 128
          %692 = vxpose.xlu0.b32.cont [12/16] 0.0, 128
          %693 = vxpose.xlu0.b32.cont [13/16] 0.0, 128
          %694 = vxpose.xlu0.b32.cont [14/16] 0.0, 128
          %695 = vxpose.xlu0.b32.cont [15/16] 0.0, 128
          %696 = vxpose.xlu0.b32.end [16/16] 0.0, 128
          %v697 = vpop.trf.xlu0
          %v698 = vpop.trf.xlu0
          %v699 = vpop.trf.xlu0
          %v700 = vpop.trf.xlu0
          %v701 = vpop.trf.xlu0
          %v702 = vpop.trf.xlu0
          %v703 = vpop.trf.xlu0
          %v704 = vpop.trf.xlu0
          %v705 = vpop.trf.xlu0
          %v706 = vpop.trf.xlu0
          %v707 = vpop.trf.xlu0
          %v708 = vpop.trf.xlu0
          %v709 = vpop.trf.xlu0
          %v710 = vpop.trf.xlu0
          %v711 = vpop.trf.xlu0
          %v712 = vpop.trf.xlu0
          %713 = vxpose.xlu0.b32.start [1/16] %v591, 128
          %714 = vxpose.xlu0.b32.cont [2/16] 0.0, 128
          %715 = vxpose.xlu0.b32.cont [3/16] 0.0, 128
          %716 = vxpose.xlu0.b32.cont [4/16] 0.0, 128
          %717 = vxpose.xlu0.b32.cont [5/16] 0.0, 128
          %718 = vxpose.xlu0.b32.cont [6/16] 0.0, 128
          %719 = vxpose.xlu0.b32.cont [7/16] 0.0, 128
          %720 = vxpose.xlu0.b32.cont [8/16] 0.0, 128
          %721 = vxpose.xlu0.b32.cont [9/16] 0.0, 128
          %722 = vxpose.xlu0.b32.cont [10/16] 0.0, 128
          %723 = vxpose.xlu0.b32.cont [11/16] 0.0, 128
          %724 = vxpose.xlu0.b32.cont [12/16] 0.0, 128
          %725 = vxpose.xlu0.b32.cont [13/16] 0.0, 128
          %726 = vxpose.xlu0.b32.cont [14/16] 0.0, 128
          %727 = vxpose.xlu0.b32.cont [15/16] 0.0, 128
          %728 = vxpose.xlu0.b32.end [16/16] 0.0, 128
          %v729 = vpop.trf.xlu0
          %v730 = vpop.trf.xlu0
          %v731 = vpop.trf.xlu0
          %v732 = vpop.trf.xlu0
          %v733 = vpop.trf.xlu0
          %v734 = vpop.trf.xlu0
          %v735 = vpop.trf.xlu0
          %v736 = vpop.trf.xlu0
          %v737 = vpop.trf.xlu0
          %v738 = vpop.trf.xlu0
          %v739 = vpop.trf.xlu0
          %v740 = vpop.trf.xlu0
          %v741 = vpop.trf.xlu0
          %v742 = vpop.trf.xlu0
          %v743 = vpop.trf.xlu0
          %v744 = vpop.trf.xlu0
          %vm745 = vcmask 64512
          %746 = vst.msk [vmem:[#allocation2] sm:$0xff] %vm745, %v633
          %747 = vst.msk [vmem:[#allocation2 + $0x8] sm:$0xff] %vm745, %v665
          %748 = vst.msk [vmem:[#allocation2 + $0x10] sm:$0xff] %vm745, %v697
          %749 = vst.msk [vmem:[#allocation2 + $0x18] sm:$0xff] %vm745, %v729
          %750 = vst.msk [vmem:[#allocation3] sm:$0xff] %vm745, %v594
          %751 = vst.msk [vmem:[#allocation3 + $0x8] sm:$0xff] %vm745, %v597
          %752 = vst.msk [vmem:[#allocation3 + $0x10] sm:$0xff] %vm745, %v600
          %753 = vst.msk [vmem:[#allocation3 + $0x18] sm:$0xff] %vm745, %v603
          %754 = vst.msk [vmem:[#allocation4] sm:$0xff] %vm745, %v606
          %755 = vst.msk [vmem:[#allocation4 + $0x8] sm:$0xff] %vm745, %v609
          %756 = vst.msk [vmem:[#allocation4 + $0x10] sm:$0xff] %vm745, %v612
          %757 = vst.msk [vmem:[#allocation4 + $0x18] sm:$0xff] %vm745, %v615
        $region68: #{tpu_custom_call.1} parent=63 // pred_fallthru
          _
        %v758 = vld [vmem:[%s395] sm:$0xff]
        %v759 = vld [vmem:[#allocation2] sm:$0xff]
        %v760 = vld [vmem:[#allocation2 + $0x8] sm:$0xff]
        %v761 = vld [vmem:[#allocation2 + $0x10] sm:$0xff]
        %v762 = vld [vmem:[#allocation2 + $0x18] sm:$0xff]
        %v763 = vld [vmem:[#allocation3] sm:$0xff]
        %v764 = vld [vmem:[#allocation3 + $0x8] sm:$0xff]
        %v765 = vld [vmem:[#allocation3 + $0x10] sm:$0xff]
        %v766 = vld [vmem:[#allocation3 + $0x18] sm:$0xff]
        %v767 = vld [vmem:[#allocation4] sm:$0xff]
        %v768 = vld [vmem:[#allocation4 + $0x8] sm:$0xff]
        %v769 = vld [vmem:[#allocation4 + $0x10] sm:$0xff]
        %v770 = vld [vmem:[#allocation4 + $0x18] sm:$0xff]
        %vm771 = vcmask 64512
        %v773 = vsel %vm771, %v759, 0
        %775 = vmatpush.msra.mxu0 0.0
        %776 = vmatpush.msra.mxu0 0.0
        %777 = vmatpush.msra.mxu0 0.0
        %778 = vmatpush.msra.mxu0 0.0
        %779 = vmatpush.msra.mxu0 0.0
        %780 = vmatpush.msra.mxu0 0.0
        %781 = vmatpush.msra.mxu0 0.0
        %782 = vmatpush.msra.mxu0 0.0
        %783 = vmatpush.msra.mxu0 0.0
        %784 = vmatpush.msra.mxu0 0.0
        %785 = vmatpush.msra.mxu0 0.0
        %786 = vmatpush.msra.mxu0 0.0
        %787 = vmatpush.msra.mxu0 0.0
        %788 = vmatpush.msra.mxu0 0.0
        %789 = vmatpush.msra.mxu0 0.0
        %790 = vmatpush.msra.mxu0 %v763
        %791 = vmatmul.f32.gmra.mxu0 %v773
        %v792 = vpop.f32.mrf.mxu0
        %v793 = vadd.f32 0.0, %v792
        %794 = vdwg.mxu0
        %v796 = vsel %vm771, %v760, 0
        %798 = vmatpush.msra.mxu0 0.0
        %799 = vmatpush.msra.mxu0 0.0
        %800 = vmatpush.msra.mxu0 0.0
        %801 = vmatpush.msra.mxu0 0.0
        %802 = vmatpush.msra.mxu0 0.0
        %803 = vmatpush.msra.mxu0 0.0
        %804 = vmatpush.msra.mxu0 0.0
        %805 = vmatpush.msra.mxu0 0.0
        %806 = vmatpush.msra.mxu0 0.0
        %807 = vmatpush.msra.mxu0 0.0
        %808 = vmatpush.msra.mxu0 0.0
        %809 = vmatpush.msra.mxu0 0.0
        %810 = vmatpush.msra.mxu0 0.0
        %811 = vmatpush.msra.mxu0 0.0
        %812 = vmatpush.msra.mxu0 0.0
        %813 = vmatpush.msra.mxu0 %v764
        %814 = vmatmul.f32.gmra.mxu0 %v796
        %v815 = vpop.f32.mrf.mxu0
        %v816 = vadd.f32 0.0, %v815
        %817 = vdwg.mxu0
        %v819 = vsel %vm771, %v761, 0
        %821 = vmatpush.msra.mxu0 0.0
        %822 = vmatpush.msra.mxu0 0.0
        %823 = vmatpush.msra.mxu0 0.0
        %824 = vmatpush.msra.mxu0 0.0
        %825 = vmatpush.msra.mxu0 0.0
        %826 = vmatpush.msra.mxu0 0.0
        %827 = vmatpush.msra.mxu0 0.0
        %828 = vmatpush.msra.mxu0 0.0
        %829 = vmatpush.msra.mxu0 0.0
        %830 = vmatpush.msra.mxu0 0.0
        %831 = vmatpush.msra.mxu0 0.0
        %832 = vmatpush.msra.mxu0 0.0
        %833 = vmatpush.msra.mxu0 0.0
        %834 = vmatpush.msra.mxu0 0.0
        %835 = vmatpush.msra.mxu0 0.0
        %836 = vmatpush.msra.mxu0 %v765
        %837 = vmatmul.f32.gmra.mxu0 %v819
        %v838 = vpop.f32.mrf.mxu0
        %v839 = vadd.f32 0.0, %v838
        %840 = vdwg.mxu0
        %v842 = vsel %vm771, %v762, 0
        %844 = vmatpush.msra.mxu0 0.0
        %845 = vmatpush.msra.mxu0 0.0
        %846 = vmatpush.msra.mxu0 0.0
        %847 = vmatpush.msra.mxu0 0.0
        %848 = vmatpush.msra.mxu0 0.0
        %849 = vmatpush.msra.mxu0 0.0
        %850 = vmatpush.msra.mxu0 0.0
        %851 = vmatpush.msra.mxu0 0.0
        %852 = vmatpush.msra.mxu0 0.0
        %853 = vmatpush.msra.mxu0 0.0
        %854 = vmatpush.msra.mxu0 0.0
        %855 = vmatpush.msra.mxu0 0.0
        %856 = vmatpush.msra.mxu0 0.0
        %857 = vmatpush.msra.mxu0 0.0
        %858 = vmatpush.msra.mxu0 0.0
        %859 = vmatpush.msra.mxu0 %v766
        %860 = vmatmul.f32.gmra.mxu0 %v842
        %v861 = vpop.f32.mrf.mxu0
        %v862 = vadd.f32 0.0, %v861
        %863 = vdwg.mxu0
        %v864 = vmul.f32 %v793, 0.35355338
        %v865 = vmul.f32 %v816, 0.35355338
        %v866 = vmul.f32 %v839, 0.35355338
        %v867 = vmul.f32 %v862, 0.35355338
        %v868 = vsel %vm771, %v864, -inf
        %869 = vmax.xlane.f32.xlu0 %v868
        %v870 = vpop.xlane.xlu0 %869
        %v871 = vsel %vm771, %v865, -inf
        %872 = vmax.xlane.f32.xlu0 %v871
        %v873 = vpop.xlane.xlu0 %872
        %v874 = vsel %vm771, %v866, -inf
        %875 = vmax.xlane.f32.xlu0 %v874
        %v876 = vpop.xlane.xlu0 %875
        %v877 = vsel %vm771, %v867, -inf
        %878 = vmax.xlane.f32.xlu0 %v877
        %v879 = vpop.xlane.xlu0 %878
        %v880 = vsub.f32 %v864, %v870
        %v881 = vsub.f32 %v865, %v873
        %v882 = vsub.f32 %v866, %v876
        %v883 = vsub.f32 %v867, %v879
        %v884 = vmul.f32 %v880, 1.442695
        %v885 = vpow.pop %v884
        %v886 = vmul.f32 %v881, 1.442695
        %v887 = vpow.pop %v886
        %v888 = vmul.f32 %v882, 1.442695
        %v889 = vpow.pop %v888
        %v890 = vmul.f32 %v883, 1.442695
        %v891 = vpow.pop %v890
        %v892 = vsel %vm771, %v885, 0.0
        %893 = vadd.xlane.f32.xlu0 %v892
        %v894 = vpop.xlane.xlu0 %893
        %v895 = vsel %vm771, %v887, 0.0
        %896 = vadd.xlane.f32.xlu0 %v895
        %v897 = vpop.xlane.xlu0 %896
        %v898 = vsel %vm771, %v889, 0.0
        %899 = vadd.xlane.f32.xlu0 %v898
        %v900 = vpop.xlane.xlu0 %899
        %v901 = vsel %vm771, %v891, 0.0
        %902 = vadd.xlane.f32.xlu0 %v901
        %v903 = vpop.xlane.xlu0 %902
        %v904 = vrcp.pop %v894
        %v905 = vmul.f32 %v894, %v904
        %v906 = vsub.f32 1.0, %v905
        %v907 = vmul.f32 %v904, %v906
        %v908 = vadd.f32 %v904, %v907
        %vm909 = vweird.f32 %v894
        %vm910 = vweird.f32 %v904
        %vm911 = vmor %vm909, %vm910
        %v912 = vsel %vm911, %v904, %v908
        %v913 = vand.u32 2147483647, %v894
        %vm914 = vcmp.eq.f32.partialorder %v913, 8.507059e+37
        %v915 = vand.u32 %v894, 2147483648
        %v916 = vor.u32 1.1754944e-38, %v915
        %v917 = vsel %vm914, %v916, %v912
        %v918 = vmul.f32 %v885, %v917
        %v919 = vrcp.pop %v897
        %v920 = vmul.f32 %v897, %v919
        %v921 = vsub.f32 1.0, %v920
        %v922 = vmul.f32 %v919, %v921
        %v923 = vadd.f32 %v919, %v922
        %vm924 = vweird.f32 %v897
        %vm925 = vweird.f32 %v919
        %vm926 = vmor %vm924, %vm925
        %v927 = vsel %vm926, %v919, %v923
        %v928 = vand.u32 2147483647, %v897
        %vm929 = vcmp.eq.f32.partialorder %v928, 8.507059e+37
        %v930 = vand.u32 %v897, 2147483648
        %v931 = vor.u32 1.1754944e-38, %v930
        %v932 = vsel %vm929, %v931, %v927
        %v933 = vmul.f32 %v887, %v932
        %v934 = vrcp.pop %v900
        %v935 = vmul.f32 %v900, %v934
        %v936 = vsub.f32 1.0, %v935
        %v937 = vmul.f32 %v934, %v936
        %v938 = vadd.f32 %v934, %v937
        %vm939 = vweird.f32 %v900
        %vm940 = vweird.f32 %v934
        %vm941 = vmor %vm939, %vm940
        %v942 = vsel %vm941, %v934, %v938
        %v943 = vand.u32 2147483647, %v900
        %vm944 = vcmp.eq.f32.partialorder %v943, 8.507059e+37
        %v945 = vand.u32 %v900, 2147483648
        %v946 = vor.u32 1.1754944e-38, %v945
        %v947 = vsel %vm944, %v946, %v942
        %v948 = vmul.f32 %v889, %v947
        %v949 = vrcp.pop %v903
        %v950 = vmul.f32 %v903, %v949
        %v951 = vsub.f32 1.0, %v950
        %v952 = vmul.f32 %v949, %v951
        %v953 = vadd.f32 %v949, %v952
        %vm954 = vweird.f32 %v903
        %vm955 = vweird.f32 %v949
        %vm956 = vmor %vm954, %vm955
        %v957 = vsel %vm956, %v949, %v953
        %v958 = vand.u32 2147483647, %v903
        %vm959 = vcmp.eq.f32.partialorder %v958, 8.507059e+37
        %v960 = vand.u32 %v903, 2147483648
        %v961 = vor.u32 1.1754944e-38, %v960
        %v962 = vsel %vm959, %v961, %v957
        %v963 = vmul.f32 %v891, %v962
        %v965 = vsel %vm771, %v767, 0
        %v968 = vsel %vm771, %v918, 0
        %970 = vmatpush.xpose.msra.mxu0 0.0
        %971 = vmatpush.xpose.msra.mxu0 0.0
        %972 = vmatpush.xpose.msra.mxu0 0.0
        %973 = vmatpush.xpose.msra.mxu0 0.0
        %974 = vmatpush.xpose.msra.mxu0 0.0
        %975 = vmatpush.xpose.msra.mxu0 0.0
        %976 = vmatpush.xpose.msra.mxu0 0.0
        %977 = vmatpush.xpose.msra.mxu0 0.0
        %978 = vmatpush.xpose.msra.mxu0 0.0
        %979 = vmatpush.xpose.msra.mxu0 0.0
        %980 = vmatpush.xpose.msra.mxu0 0.0
        %981 = vmatpush.xpose.msra.mxu0 0.0
        %982 = vmatpush.xpose.msra.mxu0 0.0
        %983 = vmatpush.xpose.msra.mxu0 0.0
        %984 = vmatpush.xpose.msra.mxu0 0.0
        %985 = vmatpush.xpose.msra.mxu0 %v968
        %986 = vmatmul.f32.gmra.mxu0 %v965
        %v987 = vpop.f32.mrf.mxu0
        %v988 = vadd.f32 0.0, %v987
        %989 = vdwg.mxu0
        %v991 = vsel %vm771, %v768, 0
        %v994 = vsel %vm771, %v933, 0
        %996 = vmatpush.xpose.msra.mxu0 0.0
        %997 = vmatpush.xpose.msra.mxu0 0.0
        %998 = vmatpush.xpose.msra.mxu0 0.0
        %999 = vmatpush.xpose.msra.mxu0 0.0
        %1000 = vmatpush.xpose.msra.mxu0 0.0
        %1001 = vmatpush.xpose.msra.mxu0 0.0
        %1002 = vmatpush.xpose.msra.mxu0 0.0
        %1003 = vmatpush.xpose.msra.mxu0 0.0
        %1004 = vmatpush.xpose.msra.mxu0 0.0
        %1005 = vmatpush.xpose.msra.mxu0 0.0
        %1006 = vmatpush.xpose.msra.mxu0 0.0
        %1007 = vmatpush.xpose.msra.mxu0 0.0
        %1008 = vmatpush.xpose.msra.mxu0 0.0
        %1009 = vmatpush.xpose.msra.mxu0 0.0
        %1010 = vmatpush.xpose.msra.mxu0 0.0
        %1011 = vmatpush.xpose.msra.mxu0 %v994
        %1012 = vmatmul.f32.gmra.mxu0 %v991
        %v1013 = vpop.f32.mrf.mxu0
        %v1014 = vadd.f32 0.0, %v1013
        %1015 = vdwg.mxu0
        %v1017 = vsel %vm771, %v769, 0
        %v1020 = vsel %vm771, %v948, 0
        %1022 = vmatpush.xpose.msra.mxu0 0.0
        %1023 = vmatpush.xpose.msra.mxu0 0.0
        %1024 = vmatpush.xpose.msra.mxu0 0.0
        %1025 = vmatpush.xpose.msra.mxu0 0.0
        %1026 = vmatpush.xpose.msra.mxu0 0.0
        %1027 = vmatpush.xpose.msra.mxu0 0.0
        %1028 = vmatpush.xpose.msra.mxu0 0.0
        %1029 = vmatpush.xpose.msra.mxu0 0.0
        %1030 = vmatpush.xpose.msra.mxu0 0.0
        %1031 = vmatpush.xpose.msra.mxu0 0.0
        %1032 = vmatpush.xpose.msra.mxu0 0.0
        %1033 = vmatpush.xpose.msra.mxu0 0.0
        %1034 = vmatpush.xpose.msra.mxu0 0.0
        %1035 = vmatpush.xpose.msra.mxu0 0.0
        %1036 = vmatpush.xpose.msra.mxu0 0.0
        %1037 = vmatpush.xpose.msra.mxu0 %v1020
        %1038 = vmatmul.f32.gmra.mxu0 %v1017
        %v1039 = vpop.f32.mrf.mxu0
        %v1040 = vadd.f32 0.0, %v1039
        %1041 = vdwg.mxu0
        %v1043 = vsel %vm771, %v770, 0
        %v1046 = vsel %vm771, %v963, 0
        %1048 = vmatpush.xpose.msra.mxu0 0.0
        %1049 = vmatpush.xpose.msra.mxu0 0.0
        %1050 = vmatpush.xpose.msra.mxu0 0.0
        %1051 = vmatpush.xpose.msra.mxu0 0.0
        %1052 = vmatpush.xpose.msra.mxu0 0.0
        %1053 = vmatpush.xpose.msra.mxu0 0.0
        %1054 = vmatpush.xpose.msra.mxu0 0.0
        %1055 = vmatpush.xpose.msra.mxu0 0.0
        %1056 = vmatpush.xpose.msra.mxu0 0.0
        %1057 = vmatpush.xpose.msra.mxu0 0.0
        %1058 = vmatpush.xpose.msra.mxu0 0.0
        %1059 = vmatpush.xpose.msra.mxu0 0.0
        %1060 = vmatpush.xpose.msra.mxu0 0.0
        %1061 = vmatpush.xpose.msra.mxu0 0.0
        %1062 = vmatpush.xpose.msra.mxu0 0.0
        %1063 = vmatpush.xpose.msra.mxu0 %v1046
        %1064 = vmatmul.f32.gmra.mxu0 %v1043
        %v1065 = vpop.f32.mrf.mxu0
        %v1066 = vadd.f32 0.0, %v1065
        %1067 = vdwg.mxu0
        %1068 = vxpose.xlu0.b32.start [1/16] %v988, 128
        %1069 = vxpose.xlu0.b32.cont [2/16] %v1014, 128
        %1070 = vxpose.xlu0.b32.cont [3/16] %v1040, 128
        %1071 = vxpose.xlu0.b32.cont [4/16] %v1066, 128
        %1072 = vxpose.xlu0.b32.cont [5/16] 0.0, 128
        %1073 = vxpose.xlu0.b32.cont [6/16] 0.0, 128
        %1074 = vxpose.xlu0.b32.cont [7/16] 0.0, 128
        %1075 = vxpose.xlu0.b32.cont [8/16] 0.0, 128
        %1076 = vxpose.xlu0.b32.cont [9/16] 0.0, 128
        %1077 = vxpose.xlu0.b32.cont [10/16] 0.0, 128
        %1078 = vxpose.xlu0.b32.cont [11/16] 0.0, 128
        %1079 = vxpose.xlu0.b32.cont [12/16] 0.0, 128
        %1080 = vxpose.xlu0.b32.cont [13/16] 0.0, 128
        %1081 = vxpose.xlu0.b32.cont [14/16] 0.0, 128
        %1082 = vxpose.xlu0.b32.cont [15/16] 0.0, 128
        %1083 = vxpose.xlu0.b32.end [16/16] 0.0, 128
        %v1084 = vpop.trf.xlu0
        %v1085 = vpop.trf.xlu0
        %v1086 = vpop.trf.xlu0
        %v1087 = vpop.trf.xlu0
        %v1088 = vpop.trf.xlu0
        %v1089 = vpop.trf.xlu0
        %v1090 = vpop.trf.xlu0
        %v1091 = vpop.trf.xlu0
        %v1092 = vpop.trf.xlu0
        %v1093 = vpop.trf.xlu0
        %v1094 = vpop.trf.xlu0
        %v1095 = vpop.trf.xlu0
        %v1096 = vpop.trf.xlu0
        %v1097 = vpop.trf.xlu0
        %v1098 = vpop.trf.xlu0
        %v1099 = vpop.trf.xlu0
        %v1100 = vadd.f32 %v758, %v1084
        %v1101 = vld [vmem:[%s5] sm:$0x1]
        %v1102 = vld [vmem:[%s6] sm:$0x1]
        %vm1103 = vcmask 261120
        %v1104 = vsel %vm1103, %v1100, 0.0
        %1105 = vadd.xlane.f32.xlu0 %v1104
        %v1106 = vpop.xlane.xlu0 %1105
        %v1107 = vrcp.pop 32.0
        %v1108 = vmul.f32 32.0, %v1107
        %v1109 = vsub.f32 1.0, %v1108
        %v1110 = vmul.f32 %v1107, %v1109
        %v1111 = vadd.f32 %v1107, %v1110
        %vm1112 = vweird.f32 %v1107
        %v1113 = vsel %vm1112, %v1107, %v1111
        %v1114 = vmul.f32 %v1106, %v1113
        %v1115 = vsub.f32 %v1100, %v1114
        %v1116 = vmul.f32 %v1115, %v1115
        %v1117 = vsel %vm1103, %v1116, 0.0
        %1118 = vadd.xlane.f32.xlu0 %v1117
        %v1119 = vpop.xlane.xlu0 %1118
        %v1120 = vmul.f32 %v1119, %v1113
        %v1121 = vadd.f32 %v1120, 1e-05
        %v1122 = vrsqrt.pop %v1121
        %v1123 = vmul.f32 %v1122, %v1121
        %v1124 = vmul.f32 %v1123, %v1122
        %v1125 = vmul.f32 0.5, %v1124
        %v1126 = vsub.f32 1.5, %v1125
        %v1127 = vmul.f32 %v1122, %v1126
        %vm1128 = vweird.f32 %v1121
        %vm1129 = vweird.f32 %v1122
        %vm1130 = vmor %vm1128, %vm1129
        %v1131 = vsel %vm1130, %v1122, %v1127
        %v1132 = vmul.f32 %v1115, %v1131
        %v1134 = vperm.slane %v1101, 0
        %v1136 = vmul.f32 %v1132, %v1134
        %v1138 = vperm.slane %v1102, 0
        %v1140 = vadd.f32 %v1136, %v1138
        %v1141 = vld [vmem:[%s7] sm:$0xff]
        %v1142 = vld [vmem:[%s7 + $0x8] sm:$0xff]
        %v1143 = vld [vmem:[%s7 + $0x10] sm:$0xff]
        %v1144 = vld [vmem:[%s7 + $0x18] sm:$0xff]
        %v1145 = vld [vmem:[%s8] sm:$0x1]
        %v1147 = vperm.slane %v1145, 0
        %v1150 = vsel %vm1103, %v1140, 0
        %1152 = vmatpush.msra.mxu0 0.0
        %1153 = vmatpush.msra.mxu0 0.0
        %1154 = vmatpush.msra.mxu0 0.0
        %1155 = vmatpush.msra.mxu0 0.0
        %1156 = vmatpush.msra.mxu0 0.0
        %1157 = vmatpush.msra.mxu0 0.0
        %1158 = vmatpush.msra.mxu0 0.0
        %1159 = vmatpush.msra.mxu0 0.0
        %1160 = vmatpush.msra.mxu0 0.0
        %1161 = vmatpush.msra.mxu0 0.0
        %1162 = vmatpush.msra.mxu0 0.0
        %1163 = vmatpush.msra.mxu0 0.0
        %1164 = vmatpush.msra.mxu0 %v1144
        %1165 = vmatpush.msra.mxu0 %v1143
        %1166 = vmatpush.msra.mxu0 %v1142
        %1167 = vmatpush.msra.mxu0 %v1141
        %1168 = vmatmul.f32.gmra.mxu0 %v1150
        %v1169 = vpop.f32.mrf.mxu0
        %v1170 = vadd.f32 %v1147, %v1169
        %1171 = vdwg.mxu0
        %v1172 = vmul.f32 %v1170, 0.5
        %v1173 = vmul.f32 %v1170, 0.70710677
        %v1174 = vmul.f32 %v1173, %v1173
        %v1175 = vmin.f32 16.0, %v1174
        %v1176 = vmul.f32 %v1175, 2.1237322e-06
        %v1177 = vadd.f32 %v1176, 0.00028619796
        %v1178 = vmul.f32 %v1175, %v1177
        %v1179 = vadd.f32 %v1178, 0.0036580483
        %v1180 = vmul.f32 %v1175, %v1179
        %v1181 = vadd.f32 %v1180, 0.05243302
        %v1182 = vmul.f32 %v1175, %v1181
        %v1183 = vadd.f32 %v1182, 0.18741608
        %v1184 = vmul.f32 %v1175, %v1183
        %v1185 = vadd.f32 %v1184, 1.1283791
        %v1186 = vmul.f32 %v1173, %v1185
        %v1187 = vmul.f32 %v1175, 3.8918573e-05
        %v1188 = vadd.f32 %v1187, 0.001143296
        %v1189 = vmul.f32 %v1175, %v1188
        %v1190 = vadd.f32 %v1189, 0.014752088
        %v1191 = vmul.f32 %v1175, %v1190
        %v1192 = vadd.f32 %v1191, 0.112945676
        %v1193 = vmul.f32 %v1175, %v1192
        %v1194 = vadd.f32 %v1193, 0.4994258
        %v1195 = vmul.f32 %v1175, %v1194
        %v1196 = vadd.f32 %v1195, 1.0
        %v1197 = vrcp.pop %v1196
        %v1198 = vmul.f32 %v1196, %v1197
        %v1199 = vsub.f32 1.0, %v1198
        %v1200 = vmul.f32 %v1197, %v1199
        %v1201 = vadd.f32 %v1197, %v1200
        %vm1202 = vweird.f32 %v1196
        %vm1203 = vweird.f32 %v1197
        %vm1204 = vmor %vm1202, %vm1203
        %v1205 = vsel %vm1204, %v1197, %v1201
        %v1206 = vand.u32 2147483647, %v1196
        %vm1207 = vcmp.eq.f32.partialorder %v1206, 8.507059e+37
        %v1208 = vand.u32 %v1196, 2147483648
        %v1209 = vor.u32 1.1754944e-38, %v1208
        %v1210 = vsel %vm1207, %v1209, %v1205
        %v1211 = vmul.f32 %v1186, %v1210
        %v1212 = vmin.f32 %v1211, 1.0
        %v1213 = vmax.f32 %v1212, -1.0
        %v1214 = vadd.f32 %v1213, 1.0
        %v1215 = vmul.f32 %v1172, %v1214
        %v1216 = vld [vmem:[%s9] sm:$0xff]
        %v1217 = vld [vmem:[%s9 + $0x8] sm:$0xff]
        %v1218 = vld [vmem:[%s9 + $0x10] sm:$0xff]
        %v1219 = vld [vmem:[%s9 + $0x18] sm:$0xff]
        %v1220 = vld [vmem:[%s9 + $0x20] sm:$0xff]
        %v1221 = vld [vmem:[%s9 + $0x28] sm:$0xff]
        %v1222 = vld [vmem:[%s9 + $0x30] sm:$0xff]
        %v1223 = vld [vmem:[%s9 + $0x38] sm:$0xff]
        %v1224 = vld [vmem:[%s10] sm:$0x1]
        %v1226 = vperm.slane %v1224, 0
        %vm1228 = vcmask 523264
        %v1230 = vsel %vm1228, %v1215, 0
        %1232 = vmatpush.msra.mxu0 0.0
        %1233 = vmatpush.msra.mxu0 0.0
        %1234 = vmatpush.msra.mxu0 0.0
        %1235 = vmatpush.msra.mxu0 0.0
        %1236 = vmatpush.msra.mxu0 0.0
        %1237 = vmatpush.msra.mxu0 0.0
        %1238 = vmatpush.msra.mxu0 0.0
        %1239 = vmatpush.msra.mxu0 0.0
        %1240 = vmatpush.msra.mxu0 %v1223
        %1241 = vmatpush.msra.mxu0 %v1222
        %1242 = vmatpush.msra.mxu0 %v1221
        %1243 = vmatpush.msra.mxu0 %v1220
        %1244 = vmatpush.msra.mxu0 %v1219
        %1245 = vmatpush.msra.mxu0 %v1218
        %1246 = vmatpush.msra.mxu0 %v1217
        %1247 = vmatpush.msra.mxu0 %v1216
        %1248 = vmatmul.f32.gmra.mxu0 %v1230
        %v1249 = vpop.f32.mrf.mxu0
        %v1250 = vadd.f32 %v1226, %v1249
        %1251 = vdwg.mxu0
        %v1252 = vadd.f32 %v1100, %v1250
        %1253 = vst.msk [vmem:[%s391] sm:$0xff] %vm1103, %v1252
        %s1254 = sand.u32 %s283, 1
        %s1255 = scalar_lea.sflag [#allocation6], %s1254
        %s1256 = sand.u32 %s283, 1
        %s1257 = smul.addr %s1256, 8
        %s1258 = scalar_lea.vmem [#allocation5], %s1257
        // Predicated region
        $region69: #{tpu_custom_call.1} parent=63 // pred_check
          %p1259 = pneg %p293
        $region70: #{tpu_custom_call.1} parent=63 // pred_check_branch
          %1261 = sbr.rel (%p1259) target = $region72
        $region71: #{tpu_custom_call.1} parent=63 // pred_region
          %1263 = vsyncadd %s1255, 0
          %s1264 = sadd.s32 %s30, %s29
          %s1265 = smul.addr %s1264, 8
          %s1266 = scalar_lea.hbm %s11, %s1265
          %s1268 = sshll.u32 %s1258, 4
          %s1269 = int_to_ptr.vmem [resolvable:$true] %s1268
          %s1270 = sshll.u32 %s1266, 4
          %s1271 = int_to_ptr.hbm [resolvable:$true] %s1270
          %1273 = dma.vmem_to_hbm [thread:$0]  %s1269, 128, %s1271, %s1255
        $region72: #{tpu_custom_call.1} parent=63 // pred_fallthru
          _
      $region64: #{tpu_custom_call.1} parent=5 // pred_fallthru
        _
      %p1274 = scmp.le.s32.totalorder 2, %s20
      // Predicated region
      $region73: #{tpu_custom_call.1} parent=5 // pred_check
        %p1275 = pneg %p1274
      $region74: #{tpu_custom_call.1} parent=5 // pred_check_branch
        %1277 = sbr.rel (%p1275) target = $region76
      $region75: #{tpu_custom_call.1} parent=5 // pred_region
        %s1278 = ssub.s32 %s20, 2
        // Predicated region
        $region77: #{tpu_custom_call.1} parent=75 // pred_check
          %p1279 = pneg %p299
        $region78: #{tpu_custom_call.1} parent=75 // pred_check_branch
          %1281 = sbr.rel (%p1279) target = $region80
        $region79: #{tpu_custom_call.1} parent=75 // pred_region
          %s1282 = sand.u32 %s284, 1
          %s1283 = scalar_lea.sflag [#allocation6], %s1282
          %s1284 = sand.u32 %s284, 1
          %s1285 = smul.addr %s1284, 8
          %s1286 = scalar_lea.vmem [#allocation5], %s1285
          %1288 = dma.done %s1283, 128
        $region80: #{tpu_custom_call.1} parent=75 // pred_fallthru
          _
      $region76: #{tpu_custom_call.1} parent=5 // pred_fallthru
        _
    $region6: #{tpu_custom_call.1} parent=1 // loop_footer
      %s24 = sadd.s32 1, %s20
    $region7: #{tpu_custom_call.1} parent=1 // loop_footer_branch
      %19 = sbr.rel target = $region3
    $region8: #{tpu_custom_call.1} parent=1 // loop_exit
      _
    %1289 = vsyncpa [#allocation6], 1
    %s1290 = scalar_lea.sflag [#allocation6], 1
    %1291 = vsyncpa %s1290, 1

// kernel: tpu_custom_call.1
$region0: #{tpu_custom_call.1}
  #allocation0 [shape = 'u32[]', space=smem, size = 0x4, offset = 0x4, fixed_abs, tag = 'smem constant byte address 0x4 - core index']
  #allocation1 [shape = 'u32[72,128]{1,0:T(1,128)}', space=vmem, size = 0x9000, scoped, tag = 'internal scratch']
  #allocation2 [shape = 'f32[8,32]{1,0:T(8,128)}', space=vmem, size = 0x1000, scoped, tag = 'scratch operand']
  %s0 = inlined_call_operand.vmem [shape: f32[2,8,32], index: 0, kind: input, shape index: {}]
  %s1 = inlined_call_operand.vmem [shape: f32[1,32], index: 1, kind: input, shape index: {}]
  %s2 = inlined_call_operand.vmem [shape: f32[1,32], index: 2, kind: input, shape index: {}]
  %s3 = inlined_call_operand.vmem [shape: f32[96,32], index: 3, kind: input, shape index: {}]
  %s4 = inlined_call_operand.vmem [shape: f32[96,1], index: 4, kind: input, shape index: {}]
  %s5 = inlined_call_operand.vmem [shape: f32[1,32], index: 5, kind: input, shape index: {}]
  %s6 = inlined_call_operand.vmem [shape: f32[1,32], index: 6, kind: input, shape index: {}]
  %s7 = inlined_call_operand.vmem [shape: f32[32,64], index: 7, kind: input, shape index: {}]
  %s8 = inlined_call_operand.vmem [shape: f32[1,64], index: 8, kind: input, shape index: {}]
  %s9 = inlined_call_operand.vmem [shape: f32[64,32], index: 9, kind: input, shape index: {}]
  %s10 = inlined_call_operand.vmem [shape: f32[1,32], index: 10, kind: input, shape index: {}]
  %s11 = inlined_call_operand.hbm [shape: f32[2,8,32], index: 11, kind: output, shape index: {}]
  %s12 = sld [smem:[#allocation0]]
  $region81: #{tpu_custom_call.1} parent=0
    _
  %s14 = ssub.s32 1, %s12
  %s15 = scalar_select 0, %s14, %s12
  $region1: #{tpu_custom_call.1} parent=0
    #allocation3 [shape = 'u8[8192]{0}', space=vmem, size = 0x2000, scoped, tag = 'output window, operand 0']
    #allocation4 [shape = 's32[2]{0}', space=sflag, size = 0x8, scoped, tag = 'scoped memory for tpu_custom_call.1']
    %16 = vsyncpa [#allocation4], 0
    %s17 = scalar_lea.sflag [#allocation4], 1
    %18 = vsyncpa %s17, 0
    loop: start=0, step=1, limit=4
    $region2: #{tpu_custom_call.1} parent=1 // loop_pre_header
      _
    $region3: #{tpu_custom_call.1} parent=1 // loop_header
      %s20 = sphi 0, %s24
      %p21 = scmp.ge.s32.totalorder %s20, 4
      %s27 = sphi 0, %s39
      %s28 = sphi 0, %s35
      %s29 = sphi 0, %s27
      %s30 = sphi 0, %s28
      %s31 = sphi 0, %s29
      %s32 = sphi 0, %s30
      %s42 = sphi 0, %s44
      %s45 = sphi 0, %s42
      %s46 = sphi 0, %s45
      %s62 = sphi 0, %s46
      %s66 = sphi 0, %s66
      %s68 = sphi 0, %s66
      %s69 = sphi 0, %s68
      %s83 = sphi 0, %s69
      %s87 = sphi 0, %s87
      %s89 = sphi 0, %s87
      %s90 = sphi 0, %s89
      %s104 = sphi 0, %s90
      %s108 = sphi 0, %s108
      %s110 = sphi 0, %s108
      %s111 = sphi 0, %s110
      %s125 = sphi 0, %s111
      %s129 = sphi 0, %s129
      %s131 = sphi 0, %s129
      %s132 = sphi 0, %s131
      %s146 = sphi 0, %s132
      %s150 = sphi 0, %s150
      %s152 = sphi 0, %s150
      %s153 = sphi 0, %s152
      %s167 = sphi 0, %s153
      %s171 = sphi 0, %s171
      %s173 = sphi 0, %s171
      %s174 = sphi 0, %s173
      %s188 = sphi 0, %s174
      %s192 = sphi 0, %s192
      %s194 = sphi 0, %s192
      %s195 = sphi 0, %s194
      %s209 = sphi 0, %s195
      %s213 = sphi 0, %s213
      %s215 = sphi 0, %s213
      %s216 = sphi 0, %s215
      %s230 = sphi 0, %s216
      %s234 = sphi 0, %s234
      %s236 = sphi 0, %s234
      %s237 = sphi 0, %s236
      %s251 = sphi 0, %s237
      %s255 = sphi 0, %s255
      %s257 = sphi 0, %s255
      %s258 = sphi 0, %s257
      %s272 = sphi 0, %s258
      %s280 = sphi 0, %s282
      %s283 = sphi 0, %s280
      %s284 = sphi 0, %s283
      %s300 = sphi 0, %s284
    $region4: #{tpu_custom_call.1} parent=1 // loop_header_branch
      %23 = sbr.rel (%p21) target = $region8
    $region5: #{tpu_custom_call.1} parent=1 // loop_body
      %s25 = ssub.s32 %s20, 1
      %s26 = ssub.s32 %s20, 2
      %s33 = sadd.s32 1, %s28
      %p34 = scmp.ge.s32.totalorder %s33, 1
      %s35 = scalar_select %p34, 0, %s33
      %s36 = sadd.s32 1, %s27
      %s37 = scalar_select %p34, %s36, %s27
      %p38 = scmp.ge.s32.totalorder %s37, 2
      %s39 = scalar_select %p38, 0, %s37
      %s40 = ssub.s32 %s27, %s39
      %p41 = scmp.eq.s32.totalorder %s40, 0
      %s43 = sadd.s32 %s42, 1
      %s44 = scalar_select %p41, %s42, %s43
      %p47 = pneg %p41
      %p48 = scmp.eq.s32.totalorder %s20, 1
      %p49 = por %p47, %p48
      %p50 = scmp.ne.s32.totalorder %s42, %s45
      %p51 = scmp.eq.s32.totalorder %s20, 0
      %p52 = por %p50, %p51
      %p53 = scmp.ne.s32.totalorder %s42, %s45
      %p54 = scmp.eq.s32.totalorder %s25, 1
      %p55 = por %p53, %p54
      %p56 = scmp.ne.s32.totalorder %s45, %s46
      %p57 = scmp.eq.s32.totalorder %s25, 0
      %p58 = por %p56, %p57
      %p59 = scmp.ne.s32.totalorder %s45, %s46
      %p60 = scmp.eq.s32.totalorder %s26, 1
      %p61 = por %p59, %p60
      %p63 = scmp.ne.s32.totalorder %s46, %s62
      %p64 = scmp.eq.s32.totalorder %s26, 0
      %p65 = por %p63, %p64
      %s67 = sadd.s32 %s66, 1
      %p70 = scmp.eq.s32.totalorder %s20, 1
      %p71 = scmp.ne.s32.totalorder %s66, %s68
      %p72 = scmp.eq.s32.totalorder %s20, 0
      %p73 = por %p71, %p72
      %p74 = scmp.ne.s32.totalorder %s66, %s68
      %p75 = scmp.eq.s32.totalorder %s25, 1
      %p76 = por %p74, %p75
      %p77 = scmp.ne.s32.totalorder %s68, %s69
      %p78 = scmp.eq.s32.totalorder %s25, 0
      %p79 = por %p77, %p78
      %p80 = scmp.ne.s32.totalorder %s68, %s69
      %p81 = scmp.eq.s32.totalorder %s26, 1
      %p82 = por %p80, %p81
      %p84 = scmp.ne.s32.totalorder %s69, %s83
      %p85 = scmp.eq.s32.totalorder %s26, 0
      %p86 = por %p84, %p85
      %s88 = sadd.s32 %s87, 1
      %p91 = scmp.eq.s32.totalorder %s20, 1
      %p92 = scmp.ne.s32.totalorder %s87, %s89
      %p93 = scmp.eq.s32.totalorder %s20, 0
      %p94 = por %p92, %p93
      %p95 = scmp.ne.s32.totalorder %s87, %s89
      %p96 = scmp.eq.s32.totalorder %s25, 1
      %p97 = por %p95, %p96
      %p98 = scmp.ne.s32.totalorder %s89, %s90
      %p99 = scmp.eq.s32.totalorder %s25, 0
      %p100 = por %p98, %p99
      %p101 = scmp.ne.s32.totalorder %s89, %s90
      %p102 = scmp.eq.s32.totalorder %s26, 1
      %p103 = por %p101, %p102
      %p105 = scmp.ne.s32.totalorder %s90, %s104
      %p106 = scmp.eq.s32.totalorder %s26, 0
      %p107 = por %p105, %p106
      %s109 = sadd.s32 %s108, 1
      %p112 = scmp.eq.s32.totalorder %s20, 1
      %p113 = scmp.ne.s32.totalorder %s108, %s110
      %p114 = scmp.eq.s32.totalorder %s20, 0
      %p115 = por %p113, %p114
      %p116 = scmp.ne.s32.totalorder %s108, %s110
      %p117 = scmp.eq.s32.totalorder %s25, 1
      %p118 = por %p116, %p117
      %p119 = scmp.ne.s32.totalorder %s110, %s111
      %p120 = scmp.eq.s32.totalorder %s25, 0
      %p121 = por %p119, %p120
      %p122 = scmp.ne.s32.totalorder %s110, %s111
      %p123 = scmp.eq.s32.totalorder %s26, 1
      %p124 = por %p122, %p123
      %p126 = scmp.ne.s32.totalorder %s111, %s125
      %p127 = scmp.eq.s32.totalorder %s26, 0
      %p128 = por %p126, %p127
      %s130 = sadd.s32 %s129, 1
      %p133 = scmp.eq.s32.totalorder %s20, 1
      %p134 = scmp.ne.s32.totalorder %s129, %s131
      %p135 = scmp.eq.s32.totalorder %s20, 0
      %p136 = por %p134, %p135
      %p137 = scmp.ne.s32.totalorder %s129, %s131
      %p138 = scmp.eq.s32.totalorder %s25, 1
      %p139 = por %p137, %p138
      %p140 = scmp.ne.s32.totalorder %s131, %s132
      %p141 = scmp.eq.s32.totalorder %s25, 0
      %p142 = por %p140, %p141
      %p143 = scmp.ne.s32.totalorder %s131, %s132
      %p144 = scmp.eq.s32.totalorder %s26, 1
      %p145 = por %p143, %p144
      %p147 = scmp.ne.s32.totalorder %s132, %s146
      %p148 = scmp.eq.s32.totalorder %s26, 0
      %p149 = por %p147, %p148
      %s151 = sadd.s32 %s150, 1
      %p154 = scmp.eq.s32.totalorder %s20, 1
      %p155 = scmp.ne.s32.totalorder %s150, %s152
      %p156 = scmp.eq.s32.totalorder %s20, 0
      %p157 = por %p155, %p156
      %p158 = scmp.ne.s32.totalorder %s150, %s152
      %p159 = scmp.eq.s32.totalorder %s25, 1
      %p160 = por %p158, %p159
      %p161 = scmp.ne.s32.totalorder %s152, %s153
      %p162 = scmp.eq.s32.totalorder %s25, 0
      %p163 = por %p161, %p162
      %p164 = scmp.ne.s32.totalorder %s152, %s153
      %p165 = scmp.eq.s32.totalorder %s26, 1
      %p166 = por %p164, %p165
      %p168 = scmp.ne.s32.totalorder %s153, %s167
      %p169 = scmp.eq.s32.totalorder %s26, 0
      %p170 = por %p168, %p169
      %s172 = sadd.s32 %s171, 1
      %p175 = scmp.eq.s32.totalorder %s20, 1
      %p176 = scmp.ne.s32.totalorder %s171, %s173
      %p177 = scmp.eq.s32.totalorder %s20, 0
      %p178 = por %p176, %p177
      %p179 = scmp.ne.s32.totalorder %s171, %s173
      %p180 = scmp.eq.s32.totalorder %s25, 1
      %p181 = por %p179, %p180
      %p182 = scmp.ne.s32.totalorder %s173, %s174
      %p183 = scmp.eq.s32.totalorder %s25, 0
      %p184 = por %p182, %p183
      %p185 = scmp.ne.s32.totalorder %s173, %s174
      %p186 = scmp.eq.s32.totalorder %s26, 1
      %p187 = por %p185, %p186
      %p189 = scmp.ne.s32.totalorder %s174, %s188
      %p190 = scmp.eq.s32.totalorder %s26, 0
      %p191 = por %p189, %p190
      %s193 = sadd.s32 %s192, 1
      %p196 = scmp.eq.s32.totalorder %s20, 1
      %p197 = scmp.ne.s32.totalorder %s192, %s194
      %p198 = scmp.eq.s32.totalorder %s20, 0
      %p199 = por %p197, %p198
      %p200 = scmp.ne.s32.totalorder %s192, %s194
      %p201 = scmp.eq.s32.totalorder %s25, 1
      %p202 = por %p200, %p201
      %p203 = scmp.ne.s32.totalorder %s194, %s195
      %p204 = scmp.eq.s32.totalorder %s25, 0
      %p205 = por %p203, %p204
      %p206 = scmp.ne.s32.totalorder %s194, %s195
      %p207 = scmp.eq.s32.totalorder %s26, 1
      %p208 = por %p206, %p207
      %p210 = scmp.ne.s32.totalorder %s195, %s209
      %p211 = scmp.eq.s32.totalorder %s26, 0
      %p212 = por %p210, %p211
      %s214 = sadd.s32 %s213, 1
      %p217 = scmp.eq.s32.totalorder %s20, 1
      %p218 = scmp.ne.s32.totalorder %s213, %s215
      %p219 = scmp.eq.s32.totalorder %s20, 0
      %p220 = por %p218, %p219
      %p221 = scmp.ne.s32.totalorder %s213, %s215
      %p222 = scmp.eq.s32.totalorder %s25, 1
      %p223 = por %p221, %p222
      %p224 = scmp.ne.s32.totalorder %s215, %s216
      %p225 = scmp.eq.s32.totalorder %s25, 0
      %p226 = por %p224, %p225
      %p227 = scmp.ne.s32.totalorder %s215, %s216
      %p228 = scmp.eq.s32.totalorder %s26, 1
      %p229 = por %p227, %p228
      %p231 = scmp.ne.s32.totalorder %s216, %s230
      %p232 = scmp.eq.s32.totalorder %s26, 0
      %p233 = por %p231, %p232
      %s235 = sadd.s32 %s234, 1
      %p238 = scmp.eq.s32.totalorder %s20, 1
      %p239 = scmp.ne.s32.totalorder %s234, %s236
      %p240 = scmp.eq.s32.totalorder %s20, 0
      %p241 = por %p239, %p240
      %p242 = scmp.ne.s32.totalorder %s234, %s236
      %p243 = scmp.eq.s32.totalorder %s25, 1
      %p244 = por %p242, %p243
      %p245 = scmp.ne.s32.totalorder %s236, %s237
      %p246 = scmp.eq.s32.totalorder %s25, 0
      %p247 = por %p245, %p246
      %p248 = scmp.ne.s32.totalorder %s236, %s237
      %p249 = scmp.eq.s32.totalorder %s26, 1
      %p250 = por %p248, %p249
      %p252 = scmp.ne.s32.totalorder %s237, %s251
      %p253 = scmp.eq.s32.totalorder %s26, 0
      %p254 = por %p252, %p253
      %s256 = sadd.s32 %s255, 1
      %p259 = scmp.eq.s32.totalorder %s20, 1
      %p260 = scmp.ne.s32.totalorder %s255, %s257
      %p261 = scmp.eq.s32.totalorder %s20, 0
      %p262 = por %p260, %p261
      %p263 = scmp.ne.s32.totalorder %s255, %s257
      %p264 = scmp.eq.s32.totalorder %s25, 1
      %p265 = por %p263, %p264
      %p266 = scmp.ne.s32.totalorder %s257, %s258
      %p267 = scmp.eq.s32.totalorder %s25, 0
      %p268 = por %p266, %p267
      %p269 = scmp.ne.s32.totalorder %s257, %s258
      %p270 = scmp.eq.s32.totalorder %s26, 1
      %p271 = por %p269, %p270
      %p273 = scmp.ne.s32.totalorder %s258, %s272
      %p274 = scmp.eq.s32.totalorder %s26, 0
      %p275 = por %p273, %p274
      %s276 = ssub.s32 %s27, %s39
      %s277 = ssub.s32 %s28, %s35
      %s278 = sor.u32 %s276, %s277
      %p279 = scmp.eq.s32.totalorder %s278, 0
      %s281 = sadd.s32 %s280, 1
      %s282 = scalar_select %p279, %s280, %s281
      %p285 = pneg %p279
      %p286 = scmp.eq.s32.totalorder %s20, 1
      %p287 = por %p285, %p286
      %p288 = scmp.ne.s32.totalorder %s280, %s283
      %p289 = scmp.eq.s32.totalorder %s20, 0
      %p290 = por %p288, %p289
      %p291 = scmp.ne.s32.totalorder %s280, %s283
      %p292 = scmp.eq.s32.totalorder %s25, 1
      %p293 = por %p291, %p292
      %p294 = scmp.ne.s32.totalorder %s283, %s284
      %p295 = scmp.eq.s32.totalorder %s25, 0
      %p296 = por %p294, %p295
      %p297 = scmp.ne.s32.totalorder %s283, %s284
      %p298 = scmp.eq.s32.totalorder %s26, 1
      %p299 = por %p297, %p298
      %p301 = scmp.ne.s32.totalorder %s284, %s300
      %p302 = scmp.eq.s32.totalorder %s26, 0
      %p303 = por %p301, %p302
      %p304 = scmp.le.s32.totalorder 1, %s20
      %p305 = scmp.lt.s32.totalorder %s20, 3
      %p306 = pnand %p304, %p305
      %p307 = pneg %p306
      // Predicated region
      $region9: #{tpu_custom_call.1} parent=5 // pred_check
        _
      $region10: #{tpu_custom_call.1} parent=5 // pred_check_branch
        %309 = sbr.rel (%p306) target = $region12
      $region11: #{tpu_custom_call.1} parent=5 // pred_region
        %s310 = ssub.s32 %s20, 1
        // Predicated region
        $region13: #{tpu_custom_call.1} parent=11 // pred_check
          %p311 = pneg %p79
        $region14: #{tpu_custom_call.1} parent=11 // pred_check_branch
          %313 = sbr.rel (%p311) target = $region16
        $region15: #{tpu_custom_call.1} parent=11 // pred_region
          _
        $region16: #{tpu_custom_call.1} parent=11 // pred_fallthru
          _
        // Predicated region
        $region17: #{tpu_custom_call.1} parent=11 // pred_check
          %p314 = pneg %p100
        $region18: #{tpu_custom_call.1} parent=11 // pred_check_branch
          %316 = sbr.rel (%p314) target = $region20
        $region19: #{tpu_custom_call.1} parent=11 // pred_region
          _
        $region20: #{tpu_custom_call.1} parent=11 // pred_fallthru
          _
        // Predicated region
        $region21: #{tpu_custom_call.1} parent=11 // pred_check
          %p317 = pneg %p121
        $region22: #{tpu_custom_call.1} parent=11 // pred_check_branch
          %319 = sbr.rel (%p317) target = $region24
        $region23: #{tpu_custom_call.1} parent=11 // pred_region
          _
        $region24: #{tpu_custom_call.1} parent=11 // pred_fallthru
          _
        // Predicated region
        $region25: #{tpu_custom_call.1} parent=11 // pred_check
          %p320 = pneg %p142
        $region26: #{tpu_custom_call.1} parent=11 // pred_check_branch
          %322 = sbr.rel (%p320) target = $region28
        $region27: #{tpu_custom_call.1} parent=11 // pred_region
          _
        $region28: #{tpu_custom_call.1} parent=11 // pred_fallthru
          _
        // Predicated region
        $region29: #{tpu_custom_call.1} parent=11 // pred_check
          %p323 = pneg %p163
        $region30: #{tpu_custom_call.1} parent=11 // pred_check_branch
          %325 = sbr.rel (%p323) target = $region32
        $region31: #{tpu_custom_call.1} parent=11 // pred_region
          _
        $region32: #{tpu_custom_call.1} parent=11 // pred_fallthru
          _
        // Predicated region
        $region33: #{tpu_custom_call.1} parent=11 // pred_check
          %p326 = pneg %p184
        $region34: #{tpu_custom_call.1} parent=11 // pred_check_branch
          %328 = sbr.rel (%p326) target = $region36
        $region35: #{tpu_custom_call.1} parent=11 // pred_region
          _
        $region36: #{tpu_custom_call.1} parent=11 // pred_fallthru
          _
        // Predicated region
        $region37: #{tpu_custom_call.1} parent=11 // pred_check
          %p329 = pneg %p205
        $region38: #{tpu_custom_call.1} parent=11 // pred_check_branch
          %331 = sbr.rel (%p329) target = $region40
        $region39: #{tpu_custom_call.1} parent=11 // pred_region
          _
        $region40: #{tpu_custom_call.1} parent=11 // pred_fallthru
          _
        // Predicated region
        $region41: #{tpu_custom_call.1} parent=11 // pred_check
          %p332 = pneg %p226
        $region42: #{tpu_custom_call.1} parent=11 // pred_check_branch
          %334 = sbr.rel (%p332) target = $region44
        $region43: #{tpu_custom_call.1} parent=11 // pred_region
          _
        $region44: #{tpu_custom_call.1} parent=11 // pred_fallthru
          _
        // Predicated region
        $region45: #{tpu_custom_call.1} parent=11 // pred_check
          %p335 = pneg %p247
        $region46: #{tpu_custom_call.1} parent=11 // pred_check_branch
          %337 = sbr.rel (%p335) target = $region48
        $region47: #{tpu_custom_call.1} parent=11 // pred_region
          _
        $region48: #{tpu_custom_call.1} parent=11 // pred_fallthru
          _
        // Predicated region
        $region49: #{tpu_custom_call.1} parent=11 // pred_check
          %p338 = pneg %p268
        $region50: #{tpu_custom_call.1} parent=11 // pred_check_branch
          %340 = sbr.rel (%p338) target = $region52
        $region51: #{tpu_custom_call.1} parent=11 // pred_region
          _
        $region52: #{tpu_custom_call.1} parent=11 // pred_fallthru
          _
      $region12: #{tpu_custom_call.1} parent=5 // pred_fallthru
        _
      %p341 = scmp.lt.s32.totalorder %s20, 2
      // Predicated region
      $region53: #{tpu_custom_call.1} parent=5 // pred_check
        %p342 = pneg %p341
      $region54: #{tpu_custom_call.1} parent=5 // pred_check_branch
        %344 = sbr.rel (%p342) target = $region56
      $region55: #{tpu_custom_call.1} parent=5 // pred_region
        // Predicated region
        $region57: #{tpu_custom_call.1} parent=55 // pred_check
          %p345 = pneg %p52
        $region58: #{tpu_custom_call.1} parent=55 // pred_check_branch
          %347 = sbr.rel (%p345) target = $region60
        $region59: #{tpu_custom_call.1} parent=55 // pred_region
          %p348 = scmp.lt.s32.totalorder %s27, 1
          %s349 = scalar_select %p348, %s27, 1
          %s350 = smul.addr %s349, 8
          %s351 = scalar_lea.vmem %s0, %s350
        $region60: #{tpu_custom_call.1} parent=55 // pred_fallthru
          _
      $region56: #{tpu_custom_call.1} parent=5 // pred_fallthru
        _
      %p352 = scmp.le.s32.totalorder 1, %s20
      %p353 = scmp.lt.s32.totalorder %s20, 3
      %p354 = pnand %p352, %p353
      %p355 = pneg %p354
      // Predicated region
      $region61: #{tpu_custom_call.1} parent=5 // pred_check
        _
      $region62: #{tpu_custom_call.1} parent=5 // pred_check_branch
        %357 = sbr.rel (%p354) target = $region64
      $region63: #{tpu_custom_call.1} parent=5 // pred_region
        %s358 = ssub.s32 %s20, 1
        %p359 = scmp.lt.s32.totalorder %s29, 1
        %s360 = scalar_select %p359, %s29, 1
        %s361 = smul.addr %s360, 8
        %s362 = scalar_lea.vmem %s0, %s361
        %p363 = pneg %p58
        %p364 = pneg %p55
        %p365 = pneg %p79
        %p366 = pneg %p76
        %p367 = pneg %p100
        %p368 = pneg %p97
        %p369 = pneg %p121
        %p370 = pneg %p118
        %p371 = pneg %p142
        %p372 = pneg %p139
        %p373 = pneg %p163
        %p374 = pneg %p160
        %p375 = pneg %p184
        %p376 = pneg %p181
        %p377 = pneg %p205
        %p378 = pneg %p202
        %p379 = pneg %p226
        %p380 = pneg %p223
        %p381 = pneg %p247
        %p382 = pneg %p244
        %p383 = pneg %p268
        %p384 = pneg %p265
        %p385 = pneg %p296
        %p386 = pneg %p293
        %s387 = sand.u32 %s283, 1
        %s388 = scalar_lea.sflag [#allocation4], %s387
        %s389 = sand.u32 %s283, 1
        %s390 = smul.addr %s389, 8
        %s391 = scalar_lea.vmem [#allocation3], %s390
        %p392 = scmp.lt.s32.totalorder %s29, 1
        %s393 = scalar_select %p392, %s29, 1
        %s394 = smul.addr %s393, 8
        %s395 = scalar_lea.vmem %s0, %s394
        %p396 = scmp.eq.s32.totalorder %s30, 0
        // Predicated region
        $region65: #{tpu_custom_call.1} parent=63 // pred_check
          %p397 = pneg %p396
        $region66: #{tpu_custom_call.1} parent=63 // pred_check_branch
          %399 = sbr.rel (%p397) target = $region68
        $region67: #{tpu_custom_call.1} parent=63 // pred_region
          %v400 = vld [vmem:[%s395] sm:$0xff]
          %v401 = vld [vmem:[%s1] sm:$0x1]
          %v402 = vld [vmem:[%s2] sm:$0x1]
          %vm403 = vcmask 261120
          %v404 = vsel %vm403, %v400, 0.0
          %405 = vadd.xlane.f32.xlu0 %v404
          %v406 = vpop.xlane.xlu0 %405
          %v407 = vrcp.pop 32.0
          %v408 = vmul.f32 32.0, %v407
          %v409 = vsub.f32 1.0, %v408
          %v410 = vmul.f32 %v407, %v409
          %v411 = vadd.f32 %v407, %v410
          %vm412 = vweird.f32 %v407
          %v413 = vsel %vm412, %v407, %v411
          %v414 = vmul.f32 %v406, %v413
          %v415 = vsub.f32 %v400, %v414
          %v416 = vmul.f32 %v415, %v415
          %v417 = vsel %vm403, %v416, 0.0
          %418 = vadd.xlane.f32.xlu0 %v417
          %v419 = vpop.xlane.xlu0 %418
          %v420 = vmul.f32 %v419, %v413
          %v421 = vadd.f32 %v420, 1e-05
          %v422 = vrsqrt.pop %v421
          %v423 = vmul.f32 %v422, %v421
          %v424 = vmul.f32 %v423, %v422
          %v425 = vmul.f32 0.5, %v424
          %v426 = vsub.f32 1.5, %v425
          %v427 = vmul.f32 %v422, %v426
          %vm428 = vweird.f32 %v421
          %vm429 = vweird.f32 %v422
          %vm430 = vmor %vm428, %vm429
          %v431 = vsel %vm430, %v422, %v427
          %v432 = vmul.f32 %v415, %v431
          %v434 = vperm.slane %v401, 0
          %v436 = vmul.f32 %v432, %v434
          %v438 = vperm.slane %v402, 0
          %v440 = vadd.f32 %v436, %v438
          %v441 = vld [vmem:[%s3] sm:$0xff]
          %v442 = vld [vmem:[%s3 + $0x8] sm:$0xff]
          %v443 = vld [vmem:[%s3 + $0x10] sm:$0xff]
          %v444 = vld [vmem:[%s3 + $0x18] sm:$0xff]
          %v445 = vld [vmem:[%s3 + $0x20] sm:$0xff]
          %v446 = vld [vmem:[%s3 + $0x28] sm:$0xff]
          %v447 = vld [vmem:[%s3 + $0x30] sm:$0xff]
          %v448 = vld [vmem:[%s3 + $0x38] sm:$0xff]
          %v449 = vld [vmem:[%s3 + $0x40] sm:$0xff]
          %v450 = vld [vmem:[%s3 + $0x48] sm:$0xff]
          %v451 = vld [vmem:[%s3 + $0x50] sm:$0xff]
          %v452 = vld [vmem:[%s3 + $0x58] sm:$0xff]
          %v453 = vld [vmem:[%s4] sm:$0xff]
          %v454 = vld [vmem:[%s4 + $0x8] sm:$0xff]
          %v455 = vld [vmem:[%s4 + $0x10] sm:$0xff]
          %v456 = vld [vmem:[%s4 + $0x18] sm:$0xff]
          %v457 = vld [vmem:[%s4 + $0x20] sm:$0xff]
          %v458 = vld [vmem:[%s4 + $0x28] sm:$0xff]
          %v459 = vld [vmem:[%s4 + $0x30] sm:$0xff]
          %v460 = vld [vmem:[%s4 + $0x38] sm:$0xff]
          %v461 = vld [vmem:[%s4 + $0x40] sm:$0xff]
          %v462 = vld [vmem:[%s4 + $0x48] sm:$0xff]
          %v463 = vld [vmem:[%s4 + $0x50] sm:$0xff]
          %v464 = vld [vmem:[%s4 + $0x58] sm:$0xff]
          %466 = vset.pattern.permute.xlu0 0
          %467 = vperm.xlu0 %466, %v453
          %v468 = vpop.permute.xlu0 %467
          %471 = vset.pattern.permute.xlu0 0
          %472 = vperm.xlu0 %471, %v454
          %v473 = vpop.permute.xlu0 %472
          %476 = vset.pattern.permute.xlu0 0
          %477 = vperm.xlu0 %476, %v455
          %v478 = vpop.permute.xlu0 %477
          %481 = vset.pattern.permute.xlu0 0
          %482 = vperm.xlu0 %481, %v456
          %v483 = vpop.permute.xlu0 %482
          %486 = vset.pattern.permute.xlu0 0
          %487 = vperm.xlu0 %486, %v457
          %v488 = vpop.permute.xlu0 %487
          %491 = vset.pattern.permute.xlu0 0
          %492 = vperm.xlu0 %491, %v458
          %v493 = vpop.permute.xlu0 %492
          %496 = vset.pattern.permute.xlu0 0
          %497 = vperm.xlu0 %496, %v459
          %v498 = vpop.permute.xlu0 %497
          %501 = vset.pattern.permute.xlu0 0
          %502 = vperm.xlu0 %501, %v460
          %v503 = vpop.permute.xlu0 %502
          %506 = vset.pattern.permute.xlu0 0
          %507 = vperm.xlu0 %506, %v461
          %v508 = vpop.permute.xlu0 %507
          %511 = vset.pattern.permute.xlu0 0
          %512 = vperm.xlu0 %511, %v462
          %v513 = vpop.permute.xlu0 %512
          %516 = vset.pattern.permute.xlu0 0
          %517 = vperm.xlu0 %516, %v463
          %v518 = vpop.permute.xlu0 %517
          %521 = vset.pattern.permute.xlu0 0
          %522 = vperm.xlu0 %521, %v464
          %v523 = vpop.permute.xlu0 %522
          %v526 = vsel %vm403, %v441, 0
          %v529 = vsel %vm403, %v442, 0
          %v532 = vsel %vm403, %v443, 0
          %v535 = vsel %vm403, %v444, 0
          %v538 = vsel %vm403, %v445, 0
          %v541 = vsel %vm403, %v446, 0
          %v544 = vsel %vm403, %v447, 0
          %v547 = vsel %vm403, %v448, 0
          %v550 = vsel %vm403, %v449, 0
          %v553 = vsel %vm403, %v450, 0
          %v556 = vsel %vm403, %v451, 0
          %v559 = vsel %vm403, %v452, 0
          %v562 = vsel %vm403, %v440, 0
          %564 = vmatpush.xpose.msra.mxu0 0.0
          %565 = vmatpush.xpose.msra.mxu0 0.0
          %566 = vmatpush.xpose.msra.mxu0 0.0
          %567 = vmatpush.xpose.msra.mxu0 0.0
          %568 = vmatpush.xpose.msra.mxu0 0.0
          %569 = vmatpush.xpose.msra.mxu0 0.0
          %570 = vmatpush.xpose.msra.mxu0 0.0
          %571 = vmatpush.xpose.msra.mxu0 0.0
          %572 = vmatpush.xpose.msra.mxu0 0.0
          %573 = vmatpush.xpose.msra.mxu0 0.0
          %574 = vmatpush.xpose.msra.mxu0 0.0
          %575 = vmatpush.xpose.msra.mxu0 0.0
          %576 = vmatpush.xpose.msra.mxu0 0.0
          %577 = vmatpush.xpose.msra.mxu0 0.0
          %578 = vmatpush.xpose.msra.mxu0 0.0
          %579 = vmatpush.xpose.msra.mxu0 %v562
          %580 = vmatmul.f32.gmra.mxu0 %v526
          %v581 = vpop.f32.mrf.mxu0
          %v582 = vadd.f32 %v468, %v581
          %583 = vmatmul.f32.gmra.mxu0 %v529
          %v584 = vpop.f32.mrf.mxu0
          %v585 = vadd.f32 %v473, %v584
          %586 = vmatmul.f32.gmra.mxu0 %v532
          %v587 = vpop.f32.mrf.mxu0
          %v588 = vadd.f32 %v478, %v587
          %589 = vmatmul.f32.gmra.mxu0 %v535
          %v590 = vpop.f32.mrf.mxu0
          %v591 = vadd.f32 %v483, %v590
          %592 = vmatmul.f32.gmra.mxu0 %v538
          %v593 = vpop.f32.mrf.mxu0
          %v594 = vadd.f32 %v488, %v593
          %595 = vmatmul.f32.gmra.mxu0 %v541
          %v596 = vpop.f32.mrf.mxu0
          %v597 = vadd.f32 %v493, %v596
          %598 = vmatmul.f32.gmra.mxu0 %v544
          %v599 = vpop.f32.mrf.mxu0
          %v600 = vadd.f32 %v498, %v599
          %601 = vmatmul.f32.gmra.mxu0 %v547
          %v602 = vpop.f32.mrf.mxu0
          %v603 = vadd.f32 %v503, %v602
          %604 = vmatmul.f32.gmra.mxu0 %v550
          %v605 = vpop.f32.mrf.mxu0
          %v606 = vadd.f32 %v508, %v605
          %607 = vmatmul.f32.gmra.mxu0 %v553
          %v608 = vpop.f32.mrf.mxu0
          %v609 = vadd.f32 %v513, %v608
          %610 = vmatmul.f32.gmra.mxu0 %v556
          %v611 = vpop.f32.mrf.mxu0
          %v612 = vadd.f32 %v518, %v611
          %613 = vmatmul.f32.gmra.mxu0 %v559
          %v614 = vpop.f32.mrf.mxu0
          %v615 = vadd.f32 %v523, %v614
          %616 = vdwg.mxu0
          %617 = vxpose.xlu0.b32.start [1/16] %v582, 128
          %618 = vxpose.xlu0.b32.cont [2/16] 0.0, 128
          %619 = vxpose.xlu0.b32.cont [3/16] 0.0, 128
          %620 = vxpose.xlu0.b32.cont [4/16] 0.0, 128
          %621 = vxpose.xlu0.b32.cont [5/16] 0.0, 128
          %622 = vxpose.xlu0.b32.cont [6/16] 0.0, 128
          %623 = vxpose.xlu0.b32.cont [7/16] 0.0, 128
          %624 = vxpose.xlu0.b32.cont [8/16] 0.0, 128
          %625 = vxpose.xlu0.b32.cont [9/16] 0.0, 128
          %626 = vxpose.xlu0.b32.cont [10/16] 0.0, 128
          %627 = vxpose.xlu0.b32.cont [11/16] 0.0, 128
          %628 = vxpose.xlu0.b32.cont [12/16] 0.0, 128
          %629 = vxpose.xlu0.b32.cont [13/16] 0.0, 128
          %630 = vxpose.xlu0.b32.cont [14/16] 0.0, 128
          %631 = vxpose.xlu0.b32.cont [15/16] 0.0, 128
          %632 = vxpose.xlu0.b32.end [16/16] 0.0, 128
          %v633 = vpop.trf.xlu0
          %v634 = vpop.trf.xlu0
          %v635 = vpop.trf.xlu0
          %v636 = vpop.trf.xlu0
          %v637 = vpop.trf.xlu0
          %v638 = vpop.trf.xlu0
          %v639 = vpop.trf.xlu0
          %v640 = vpop.trf.xlu0
          %v641 = vpop.trf.xlu0
          %v642 = vpop.trf.xlu0
          %v643 = vpop.trf.xlu0
          %v644 = vpop.trf.xlu0
          %v645 = vpop.trf.xlu0
          %v646 = vpop.trf.xlu0
          %v647 = vpop.trf.xlu0
          %v648 = vpop.trf.xlu0
          %vm649 = vcmask 64512
          %v651 = vsel %vm649, %v633, 0
          %653 = vmatpush.msra.mxu0 0.0
          %654 = vmatpush.msra.mxu0 0.0
          %655 = vmatpush.msra.mxu0 0.0
          %656 = vmatpush.msra.mxu0 0.0
          %657 = vmatpush.msra.mxu0 0.0
          %658 = vmatpush.msra.mxu0 0.0
          %659 = vmatpush.msra.mxu0 0.0
          %660 = vmatpush.msra.mxu0 0.0
          %661 = vmatpush.msra.mxu0 0.0
          %662 = vmatpush.msra.mxu0 0.0
          %663 = vmatpush.msra.mxu0 0.0
          %664 = vmatpush.msra.mxu0 0.0
          %665 = vmatpush.msra.mxu0 0.0
          %666 = vmatpush.msra.mxu0 0.0
          %667 = vmatpush.msra.mxu0 0.0
          %668 = vmatpush.msra.mxu0 %v594
          %669 = vmatmul.f32.gmra.mxu0 %v651
          %v670 = vpop.f32.mrf.mxu0
          %v671 = vadd.f32 0.0, %v670
          %672 = vdwg.mxu0
          %v673 = vmul.f32 %v671, 0.35355338
          %v674 = vsel %vm649, %v673, -inf
          %675 = vmax.xlane.f32.xlu0 %v674
          %v676 = vpop.xlane.xlu0 %675
          %v677 = vsub.f32 %v673, %v676
          %v678 = vmul.f32 %v677, 1.442695
          %v679 = vpow.pop %v678
          %v680 = vsel %vm649, %v679, 0.0
          %681 = vadd.xlane.f32.xlu0 %v680
          %v682 = vpop.xlane.xlu0 %681
          %v683 = vrcp.pop %v682
          %v684 = vmul.f32 %v682, %v683
          %v685 = vsub.f32 1.0, %v684
          %v686 = vmul.f32 %v683, %v685
          %v687 = vadd.f32 %v683, %v686
          %vm688 = vweird.f32 %v682
          %vm689 = vweird.f32 %v683
          %vm690 = vmor %vm688, %vm689
          %v691 = vsel %vm690, %v683, %v687
          %v692 = vand.u32 2147483647, %v682
          %vm693 = vcmp.eq.f32.partialorder %v692, 8.507059e+37
          %v694 = vand.u32 %v682, 2147483648
          %v695 = vor.u32 1.1754944e-38, %v694
          %v696 = vsel %vm693, %v695, %v691
          %v697 = vmul.f32 %v679, %v696
          %v699 = vsel %vm649, %v606, 0
          %v702 = vsel %vm649, %v697, 0
          %704 = vmatpush.xpose.msra.mxu0 0.0
          %705 = vmatpush.xpose.msra.mxu0 0.0
          %706 = vmatpush.xpose.msra.mxu0 0.0
          %707 = vmatpush.xpose.msra.mxu0 0.0
          %708 = vmatpush.xpose.msra.mxu0 0.0
          %709 = vmatpush.xpose.msra.mxu0 0.0
          %710 = vmatpush.xpose.msra.mxu0 0.0
          %711 = vmatpush.xpose.msra.mxu0 0.0
          %712 = vmatpush.xpose.msra.mxu0 0.0
          %713 = vmatpush.xpose.msra.mxu0 0.0
          %714 = vmatpush.xpose.msra.mxu0 0.0
          %715 = vmatpush.xpose.msra.mxu0 0.0
          %716 = vmatpush.xpose.msra.mxu0 0.0
          %717 = vmatpush.xpose.msra.mxu0 0.0
          %718 = vmatpush.xpose.msra.mxu0 0.0
          %719 = vmatpush.xpose.msra.mxu0 %v702
          %720 = vmatmul.f32.gmra.mxu0 %v699
          %v721 = vpop.f32.mrf.mxu0
          %v722 = vadd.f32 0.0, %v721
          %723 = vdwg.mxu0
          %724 = vxpose.xlu0.b32.start [1/16] %v585, 128
          %725 = vxpose.xlu0.b32.cont [2/16] 0.0, 128
          %726 = vxpose.xlu0.b32.cont [3/16] 0.0, 128
          %727 = vxpose.xlu0.b32.cont [4/16] 0.0, 128
          %728 = vxpose.xlu0.b32.cont [5/16] 0.0, 128
          %729 = vxpose.xlu0.b32.cont [6/16] 0.0, 128
          %730 = vxpose.xlu0.b32.cont [7/16] 0.0, 128
          %731 = vxpose.xlu0.b32.cont [8/16] 0.0, 128
          %732 = vxpose.xlu0.b32.cont [9/16] 0.0, 128
          %733 = vxpose.xlu0.b32.cont [10/16] 0.0, 128
          %734 = vxpose.xlu0.b32.cont [11/16] 0.0, 128
          %735 = vxpose.xlu0.b32.cont [12/16] 0.0, 128
          %736 = vxpose.xlu0.b32.cont [13/16] 0.0, 128
          %737 = vxpose.xlu0.b32.cont [14/16] 0.0, 128
          %738 = vxpose.xlu0.b32.cont [15/16] 0.0, 128
          %739 = vxpose.xlu0.b32.end [16/16] 0.0, 128
          %v740 = vpop.trf.xlu0
          %v741 = vpop.trf.xlu0
          %v742 = vpop.trf.xlu0
          %v743 = vpop.trf.xlu0
          %v744 = vpop.trf.xlu0
          %v745 = vpop.trf.xlu0
          %v746 = vpop.trf.xlu0
          %v747 = vpop.trf.xlu0
          %v748 = vpop.trf.xlu0
          %v749 = vpop.trf.xlu0
          %v750 = vpop.trf.xlu0
          %v751 = vpop.trf.xlu0
          %v752 = vpop.trf.xlu0
          %v753 = vpop.trf.xlu0
          %v754 = vpop.trf.xlu0
          %v755 = vpop.trf.xlu0
          %v757 = vsel %vm649, %v740, 0
          %759 = vmatpush.msra.mxu0 0.0
          %760 = vmatpush.msra.mxu0 0.0
          %761 = vmatpush.msra.mxu0 0.0
          %762 = vmatpush.msra.mxu0 0.0
          %763 = vmatpush.msra.mxu0 0.0
          %764 = vmatpush.msra.mxu0 0.0
          %765 = vmatpush.msra.mxu0 0.0
          %766 = vmatpush.msra.mxu0 0.0
          %767 = vmatpush.msra.mxu0 0.0
          %768 = vmatpush.msra.mxu0 0.0
          %769 = vmatpush.msra.mxu0 0.0
          %770 = vmatpush.msra.mxu0 0.0
          %771 = vmatpush.msra.mxu0 0.0
          %772 = vmatpush.msra.mxu0 0.0
          %773 = vmatpush.msra.mxu0 0.0
          %774 = vmatpush.msra.mxu0 %v597
          %775 = vmatmul.f32.gmra.mxu0 %v757
          %v776 = vpop.f32.mrf.mxu0
          %v777 = vadd.f32 0.0, %v776
          %778 = vdwg.mxu0
          %v779 = vmul.f32 %v777, 0.35355338
          %v780 = vsel %vm649, %v779, -inf
          %781 = vmax.xlane.f32.xlu0 %v780
          %v782 = vpop.xlane.xlu0 %781
          %v783 = vsub.f32 %v779, %v782
          %v784 = vmul.f32 %v783, 1.442695
          %v785 = vpow.pop %v784
          %v786 = vsel %vm649, %v785, 0.0
          %787 = vadd.xlane.f32.xlu0 %v786
          %v788 = vpop.xlane.xlu0 %787
          %v789 = vrcp.pop %v788
          %v790 = vmul.f32 %v788, %v789
          %v791 = vsub.f32 1.0, %v790
          %v792 = vmul.f32 %v789, %v791
          %v793 = vadd.f32 %v789, %v792
          %vm794 = vweird.f32 %v788
          %vm795 = vweird.f32 %v789
          %vm796 = vmor %vm794, %vm795
          %v797 = vsel %vm796, %v789, %v793
          %v798 = vand.u32 2147483647, %v788
          %vm799 = vcmp.eq.f32.partialorder %v798, 8.507059e+37
          %v800 = vand.u32 %v788, 2147483648
          %v801 = vor.u32 1.1754944e-38, %v800
          %v802 = vsel %vm799, %v801, %v797
          %v803 = vmul.f32 %v785, %v802
          %v805 = vsel %vm649, %v609, 0
          %v808 = vsel %vm649, %v803, 0
          %810 = vmatpush.xpose.msra.mxu0 0.0
          %811 = vmatpush.xpose.msra.mxu0 0.0
          %812 = vmatpush.xpose.msra.mxu0 0.0
          %813 = vmatpush.xpose.msra.mxu0 0.0
          %814 = vmatpush.xpose.msra.mxu0 0.0
          %815 = vmatpush.xpose.msra.mxu0 0.0
          %816 = vmatpush.xpose.msra.mxu0 0.0
          %817 = vmatpush.xpose.msra.mxu0 0.0
          %818 = vmatpush.xpose.msra.mxu0 0.0
          %819 = vmatpush.xpose.msra.mxu0 0.0
          %820 = vmatpush.xpose.msra.mxu0 0.0
          %821 = vmatpush.xpose.msra.mxu0 0.0
          %822 = vmatpush.xpose.msra.mxu0 0.0
          %823 = vmatpush.xpose.msra.mxu0 0.0
          %824 = vmatpush.xpose.msra.mxu0 0.0
          %825 = vmatpush.xpose.msra.mxu0 %v808
          %826 = vmatmul.f32.gmra.mxu0 %v805
          %v827 = vpop.f32.mrf.mxu0
          %v828 = vadd.f32 0.0, %v827
          %829 = vdwg.mxu0
          %830 = vxpose.xlu0.b32.start [1/16] %v588, 128
          %831 = vxpose.xlu0.b32.cont [2/16] 0.0, 128
          %832 = vxpose.xlu0.b32.cont [3/16] 0.0, 128
          %833 = vxpose.xlu0.b32.cont [4/16] 0.0, 128
          %834 = vxpose.xlu0.b32.cont [5/16] 0.0, 128
          %835 = vxpose.xlu0.b32.cont [6/16] 0.0, 128
          %836 = vxpose.xlu0.b32.cont [7/16] 0.0, 128
          %837 = vxpose.xlu0.b32.cont [8/16] 0.0, 128
          %838 = vxpose.xlu0.b32.cont [9/16] 0.0, 128
          %839 = vxpose.xlu0.b32.cont [10/16] 0.0, 128
          %840 = vxpose.xlu0.b32.cont [11/16] 0.0, 128
          %841 = vxpose.xlu0.b32.cont [12/16] 0.0, 128
          %842 = vxpose.xlu0.b32.cont [13/16] 0.0, 128
          %843 = vxpose.xlu0.b32.cont [14/16] 0.0, 128
          %844 = vxpose.xlu0.b32.cont [15/16] 0.0, 128
          %845 = vxpose.xlu0.b32.end [16/16] 0.0, 128
          %v846 = vpop.trf.xlu0
          %v847 = vpop.trf.xlu0
          %v848 = vpop.trf.xlu0
          %v849 = vpop.trf.xlu0
          %v850 = vpop.trf.xlu0
          %v851 = vpop.trf.xlu0
          %v852 = vpop.trf.xlu0
          %v853 = vpop.trf.xlu0
          %v854 = vpop.trf.xlu0
          %v855 = vpop.trf.xlu0
          %v856 = vpop.trf.xlu0
          %v857 = vpop.trf.xlu0
          %v858 = vpop.trf.xlu0
          %v859 = vpop.trf.xlu0
          %v860 = vpop.trf.xlu0
          %v861 = vpop.trf.xlu0
          %v863 = vsel %vm649, %v846, 0
          %865 = vmatpush.msra.mxu0 0.0
          %866 = vmatpush.msra.mxu0 0.0
          %867 = vmatpush.msra.mxu0 0.0
          %868 = vmatpush.msra.mxu0 0.0
          %869 = vmatpush.msra.mxu0 0.0
          %870 = vmatpush.msra.mxu0 0.0
          %871 = vmatpush.msra.mxu0 0.0
          %872 = vmatpush.msra.mxu0 0.0
          %873 = vmatpush.msra.mxu0 0.0
          %874 = vmatpush.msra.mxu0 0.0
          %875 = vmatpush.msra.mxu0 0.0
          %876 = vmatpush.msra.mxu0 0.0
          %877 = vmatpush.msra.mxu0 0.0
          %878 = vmatpush.msra.mxu0 0.0
          %879 = vmatpush.msra.mxu0 0.0
          %880 = vmatpush.msra.mxu0 %v600
          %881 = vmatmul.f32.gmra.mxu0 %v863
          %v882 = vpop.f32.mrf.mxu0
          %v883 = vadd.f32 0.0, %v882
          %884 = vdwg.mxu0
          %v885 = vmul.f32 %v883, 0.35355338
          %v886 = vsel %vm649, %v885, -inf
          %887 = vmax.xlane.f32.xlu0 %v886
          %v888 = vpop.xlane.xlu0 %887
          %v889 = vsub.f32 %v885, %v888
          %v890 = vmul.f32 %v889, 1.442695
          %v891 = vpow.pop %v890
          %v892 = vsel %vm649, %v891, 0.0
          %893 = vadd.xlane.f32.xlu0 %v892
          %v894 = vpop.xlane.xlu0 %893
          %v895 = vrcp.pop %v894
          %v896 = vmul.f32 %v894, %v895
          %v897 = vsub.f32 1.0, %v896
          %v898 = vmul.f32 %v895, %v897
          %v899 = vadd.f32 %v895, %v898
          %vm900 = vweird.f32 %v894
          %vm901 = vweird.f32 %v895
          %vm902 = vmor %vm900, %vm901
          %v903 = vsel %vm902, %v895, %v899
          %v904 = vand.u32 2147483647, %v894
          %vm905 = vcmp.eq.f32.partialorder %v904, 8.507059e+37
          %v906 = vand.u32 %v894, 2147483648
          %v907 = vor.u32 1.1754944e-38, %v906
          %v908 = vsel %vm905, %v907, %v903
          %v909 = vmul.f32 %v891, %v908
          %v911 = vsel %vm649, %v612, 0
          %v914 = vsel %vm649, %v909, 0
          %916 = vmatpush.xpose.msra.mxu0 0.0
          %917 = vmatpush.xpose.msra.mxu0 0.0
          %918 = vmatpush.xpose.msra.mxu0 0.0
          %919 = vmatpush.xpose.msra.mxu0 0.0
          %920 = vmatpush.xpose.msra.mxu0 0.0
          %921 = vmatpush.xpose.msra.mxu0 0.0
          %922 = vmatpush.xpose.msra.mxu0 0.0
          %923 = vmatpush.xpose.msra.mxu0 0.0
          %924 = vmatpush.xpose.msra.mxu0 0.0
          %925 = vmatpush.xpose.msra.mxu0 0.0
          %926 = vmatpush.xpose.msra.mxu0 0.0
          %927 = vmatpush.xpose.msra.mxu0 0.0
          %928 = vmatpush.xpose.msra.mxu0 0.0
          %929 = vmatpush.xpose.msra.mxu0 0.0
          %930 = vmatpush.xpose.msra.mxu0 0.0
          %931 = vmatpush.xpose.msra.mxu0 %v914
          %932 = vmatmul.f32.gmra.mxu0 %v911
          %v933 = vpop.f32.mrf.mxu0
          %v934 = vadd.f32 0.0, %v933
          %935 = vdwg.mxu0
          %936 = vxpose.xlu0.b32.start [1/16] %v591, 128
          %937 = vxpose.xlu0.b32.cont [2/16] 0.0, 128
          %938 = vxpose.xlu0.b32.cont [3/16] 0.0, 128
          %939 = vxpose.xlu0.b32.cont [4/16] 0.0, 128
          %940 = vxpose.xlu0.b32.cont [5/16] 0.0, 128
          %941 = vxpose.xlu0.b32.cont [6/16] 0.0, 128
          %942 = vxpose.xlu0.b32.cont [7/16] 0.0, 128
          %943 = vxpose.xlu0.b32.cont [8/16] 0.0, 128
          %944 = vxpose.xlu0.b32.cont [9/16] 0.0, 128
          %945 = vxpose.xlu0.b32.cont [10/16] 0.0, 128
          %946 = vxpose.xlu0.b32.cont [11/16] 0.0, 128
          %947 = vxpose.xlu0.b32.cont [12/16] 0.0, 128
          %948 = vxpose.xlu0.b32.cont [13/16] 0.0, 128
          %949 = vxpose.xlu0.b32.cont [14/16] 0.0, 128
          %950 = vxpose.xlu0.b32.cont [15/16] 0.0, 128
          %951 = vxpose.xlu0.b32.end [16/16] 0.0, 128
          %v952 = vpop.trf.xlu0
          %v953 = vpop.trf.xlu0
          %v954 = vpop.trf.xlu0
          %v955 = vpop.trf.xlu0
          %v956 = vpop.trf.xlu0
          %v957 = vpop.trf.xlu0
          %v958 = vpop.trf.xlu0
          %v959 = vpop.trf.xlu0
          %v960 = vpop.trf.xlu0
          %v961 = vpop.trf.xlu0
          %v962 = vpop.trf.xlu0
          %v963 = vpop.trf.xlu0
          %v964 = vpop.trf.xlu0
          %v965 = vpop.trf.xlu0
          %v966 = vpop.trf.xlu0
          %v967 = vpop.trf.xlu0
          %v969 = vsel %vm649, %v952, 0
          %971 = vmatpush.msra.mxu0 0.0
          %972 = vmatpush.msra.mxu0 0.0
          %973 = vmatpush.msra.mxu0 0.0
          %974 = vmatpush.msra.mxu0 0.0
          %975 = vmatpush.msra.mxu0 0.0
          %976 = vmatpush.msra.mxu0 0.0
          %977 = vmatpush.msra.mxu0 0.0
          %978 = vmatpush.msra.mxu0 0.0
          %979 = vmatpush.msra.mxu0 0.0
          %980 = vmatpush.msra.mxu0 0.0
          %981 = vmatpush.msra.mxu0 0.0
          %982 = vmatpush.msra.mxu0 0.0
          %983 = vmatpush.msra.mxu0 0.0
          %984 = vmatpush.msra.mxu0 0.0
          %985 = vmatpush.msra.mxu0 0.0
          %986 = vmatpush.msra.mxu0 %v603
          %987 = vmatmul.f32.gmra.mxu0 %v969
          %v988 = vpop.f32.mrf.mxu0
          %v989 = vadd.f32 0.0, %v988
          %990 = vdwg.mxu0
          %v991 = vmul.f32 %v989, 0.35355338
          %v992 = vsel %vm649, %v991, -inf
          %993 = vmax.xlane.f32.xlu0 %v992
          %v994 = vpop.xlane.xlu0 %993
          %v995 = vsub.f32 %v991, %v994
          %v996 = vmul.f32 %v995, 1.442695
          %v997 = vpow.pop %v996
          %v998 = vsel %vm649, %v997, 0.0
          %999 = vadd.xlane.f32.xlu0 %v998
          %v1000 = vpop.xlane.xlu0 %999
          %v1001 = vrcp.pop %v1000
          %v1002 = vmul.f32 %v1000, %v1001
          %v1003 = vsub.f32 1.0, %v1002
          %v1004 = vmul.f32 %v1001, %v1003
          %v1005 = vadd.f32 %v1001, %v1004
          %vm1006 = vweird.f32 %v1000
          %vm1007 = vweird.f32 %v1001
          %vm1008 = vmor %vm1006, %vm1007
          %v1009 = vsel %vm1008, %v1001, %v1005
          %v1010 = vand.u32 2147483647, %v1000
          %vm1011 = vcmp.eq.f32.partialorder %v1010, 8.507059e+37
          %v1012 = vand.u32 %v1000, 2147483648
          %v1013 = vor.u32 1.1754944e-38, %v1012
          %v1014 = vsel %vm1011, %v1013, %v1009
          %v1015 = vmul.f32 %v997, %v1014
          %v1017 = vsel %vm649, %v615, 0
          %v1020 = vsel %vm649, %v1015, 0
          %1022 = vmatpush.xpose.msra.mxu0 0.0
          %1023 = vmatpush.xpose.msra.mxu0 0.0
          %1024 = vmatpush.xpose.msra.mxu0 0.0
          %1025 = vmatpush.xpose.msra.mxu0 0.0
          %1026 = vmatpush.xpose.msra.mxu0 0.0
          %1027 = vmatpush.xpose.msra.mxu0 0.0
          %1028 = vmatpush.xpose.msra.mxu0 0.0
          %1029 = vmatpush.xpose.msra.mxu0 0.0
          %1030 = vmatpush.xpose.msra.mxu0 0.0
          %1031 = vmatpush.xpose.msra.mxu0 0.0
          %1032 = vmatpush.xpose.msra.mxu0 0.0
          %1033 = vmatpush.xpose.msra.mxu0 0.0
          %1034 = vmatpush.xpose.msra.mxu0 0.0
          %1035 = vmatpush.xpose.msra.mxu0 0.0
          %1036 = vmatpush.xpose.msra.mxu0 0.0
          %1037 = vmatpush.xpose.msra.mxu0 %v1020
          %1038 = vmatmul.f32.gmra.mxu0 %v1017
          %v1039 = vpop.f32.mrf.mxu0
          %v1040 = vadd.f32 0.0, %v1039
          %1041 = vdwg.mxu0
          %1042 = vxpose.xlu0.b32.start [1/16] %v722, 128
          %1043 = vxpose.xlu0.b32.cont [2/16] %v828, 128
          %1044 = vxpose.xlu0.b32.cont [3/16] %v934, 128
          %1045 = vxpose.xlu0.b32.cont [4/16] %v1040, 128
          %1046 = vxpose.xlu0.b32.cont [5/16] 0.0, 128
          %1047 = vxpose.xlu0.b32.cont [6/16] 0.0, 128
          %1048 = vxpose.xlu0.b32.cont [7/16] 0.0, 128
          %1049 = vxpose.xlu0.b32.cont [8/16] 0.0, 128
          %1050 = vxpose.xlu0.b32.cont [9/16] 0.0, 128
          %1051 = vxpose.xlu0.b32.cont [10/16] 0.0, 128
          %1052 = vxpose.xlu0.b32.cont [11/16] 0.0, 128
          %1053 = vxpose.xlu0.b32.cont [12/16] 0.0, 128
          %1054 = vxpose.xlu0.b32.cont [13/16] 0.0, 128
          %1055 = vxpose.xlu0.b32.cont [14/16] 0.0, 128
          %1056 = vxpose.xlu0.b32.cont [15/16] 0.0, 128
          %1057 = vxpose.xlu0.b32.end [16/16] 0.0, 128
          %v1058 = vpop.trf.xlu0
          %v1059 = vpop.trf.xlu0
          %v1060 = vpop.trf.xlu0
          %v1061 = vpop.trf.xlu0
          %v1062 = vpop.trf.xlu0
          %v1063 = vpop.trf.xlu0
          %v1064 = vpop.trf.xlu0
          %v1065 = vpop.trf.xlu0
          %v1066 = vpop.trf.xlu0
          %v1067 = vpop.trf.xlu0
          %v1068 = vpop.trf.xlu0
          %v1069 = vpop.trf.xlu0
          %v1070 = vpop.trf.xlu0
          %v1071 = vpop.trf.xlu0
          %v1072 = vpop.trf.xlu0
          %v1073 = vpop.trf.xlu0
          %v1074 = vadd.f32 %v400, %v1058
          %1075 = vst.msk [vmem:[#allocation2] sm:$0xff] %vm403, %v1074
        $region68: #{tpu_custom_call.1} parent=63 // pred_fallthru
          _
        %v1076 = vld [vmem:[#allocation2] sm:$0xff]
        %v1077 = vld [vmem:[%s5] sm:$0x1]
        %v1078 = vld [vmem:[%s6] sm:$0x1]
        %vm1079 = vcmask 261120
        %v1080 = vsel %vm1079, %v1076, 0.0
        %1081 = vadd.xlane.f32.xlu0 %v1080
        %v1082 = vpop.xlane.xlu0 %1081
        %v1083 = vrcp.pop 32.0
        %v1084 = vmul.f32 32.0, %v1083
        %v1085 = vsub.f32 1.0, %v1084
        %v1086 = vmul.f32 %v1083, %v1085
        %v1087 = vadd.f32 %v1083, %v1086
        %vm1088 = vweird.f32 %v1083
        %v1089 = vsel %vm1088, %v1083, %v1087
        %v1090 = vmul.f32 %v1082, %v1089
        %v1091 = vsub.f32 %v1076, %v1090
        %v1092 = vmul.f32 %v1091, %v1091
        %v1093 = vsel %vm1079, %v1092, 0.0
        %1094 = vadd.xlane.f32.xlu0 %v1093
        %v1095 = vpop.xlane.xlu0 %1094
        %v1096 = vmul.f32 %v1095, %v1089
        %v1097 = vadd.f32 %v1096, 1e-05
        %v1098 = vrsqrt.pop %v1097
        %v1099 = vmul.f32 %v1098, %v1097
        %v1100 = vmul.f32 %v1099, %v1098
        %v1101 = vmul.f32 0.5, %v1100
        %v1102 = vsub.f32 1.5, %v1101
        %v1103 = vmul.f32 %v1098, %v1102
        %vm1104 = vweird.f32 %v1097
        %vm1105 = vweird.f32 %v1098
        %vm1106 = vmor %vm1104, %vm1105
        %v1107 = vsel %vm1106, %v1098, %v1103
        %v1108 = vmul.f32 %v1091, %v1107
        %v1110 = vperm.slane %v1077, 0
        %v1112 = vmul.f32 %v1108, %v1110
        %v1114 = vperm.slane %v1078, 0
        %v1116 = vadd.f32 %v1112, %v1114
        %v1117 = vld [vmem:[%s7] sm:$0xff]
        %v1118 = vld [vmem:[%s7 + $0x8] sm:$0xff]
        %v1119 = vld [vmem:[%s7 + $0x10] sm:$0xff]
        %v1120 = vld [vmem:[%s7 + $0x18] sm:$0xff]
        %v1121 = vld [vmem:[%s8] sm:$0x1]
        %v1123 = vperm.slane %v1121, 0
        %v1126 = vsel %vm1079, %v1116, 0
        %1128 = vmatpush.msra.mxu0 0.0
        %1129 = vmatpush.msra.mxu0 0.0
        %1130 = vmatpush.msra.mxu0 0.0
        %1131 = vmatpush.msra.mxu0 0.0
        %1132 = vmatpush.msra.mxu0 0.0
        %1133 = vmatpush.msra.mxu0 0.0
        %1134 = vmatpush.msra.mxu0 0.0
        %1135 = vmatpush.msra.mxu0 0.0
        %1136 = vmatpush.msra.mxu0 0.0
        %1137 = vmatpush.msra.mxu0 0.0
        %1138 = vmatpush.msra.mxu0 0.0
        %1139 = vmatpush.msra.mxu0 0.0
        %1140 = vmatpush.msra.mxu0 %v1120
        %1141 = vmatpush.msra.mxu0 %v1119
        %1142 = vmatpush.msra.mxu0 %v1118
        %1143 = vmatpush.msra.mxu0 %v1117
        %1144 = vmatmul.f32.gmra.mxu0 %v1126
        %v1145 = vpop.f32.mrf.mxu0
        %v1146 = vadd.f32 %v1123, %v1145
        %1147 = vdwg.mxu0
        %v1148 = vmul.f32 %v1146, 0.5
        %v1149 = vmul.f32 %v1146, 0.70710677
        %v1150 = vmul.f32 %v1149, %v1149
        %v1151 = vmin.f32 16.0, %v1150
        %v1152 = vmul.f32 %v1151, 2.1237322e-06
        %v1153 = vadd.f32 %v1152, 0.00028619796
        %v1154 = vmul.f32 %v1151, %v1153
        %v1155 = vadd.f32 %v1154, 0.0036580483
        %v1156 = vmul.f32 %v1151, %v1155
        %v1157 = vadd.f32 %v1156, 0.05243302
        %v1158 = vmul.f32 %v1151, %v1157
        %v1159 = vadd.f32 %v1158, 0.18741608
        %v1160 = vmul.f32 %v1151, %v1159
        %v1161 = vadd.f32 %v1160, 1.1283791
        %v1162 = vmul.f32 %v1149, %v1161
        %v1163 = vmul.f32 %v1151, 3.8918573e-05
        %v1164 = vadd.f32 %v1163, 0.001143296
        %v1165 = vmul.f32 %v1151, %v1164
        %v1166 = vadd.f32 %v1165, 0.014752088
        %v1167 = vmul.f32 %v1151, %v1166
        %v1168 = vadd.f32 %v1167, 0.112945676
        %v1169 = vmul.f32 %v1151, %v1168
        %v1170 = vadd.f32 %v1169, 0.4994258
        %v1171 = vmul.f32 %v1151, %v1170
        %v1172 = vadd.f32 %v1171, 1.0
        %v1173 = vrcp.pop %v1172
        %v1174 = vmul.f32 %v1172, %v1173
        %v1175 = vsub.f32 1.0, %v1174
        %v1176 = vmul.f32 %v1173, %v1175
        %v1177 = vadd.f32 %v1173, %v1176
        %vm1178 = vweird.f32 %v1172
        %vm1179 = vweird.f32 %v1173
        %vm1180 = vmor %vm1178, %vm1179
        %v1181 = vsel %vm1180, %v1173, %v1177
        %v1182 = vand.u32 2147483647, %v1172
        %vm1183 = vcmp.eq.f32.partialorder %v1182, 8.507059e+37
        %v1184 = vand.u32 %v1172, 2147483648
        %v1185 = vor.u32 1.1754944e-38, %v1184
        %v1186 = vsel %vm1183, %v1185, %v1181
        %v1187 = vmul.f32 %v1162, %v1186
        %v1188 = vmin.f32 %v1187, 1.0
        %v1189 = vmax.f32 %v1188, -1.0
        %v1190 = vadd.f32 %v1189, 1.0
        %v1191 = vmul.f32 %v1148, %v1190
        %v1192 = vld [vmem:[%s9] sm:$0xff]
        %v1193 = vld [vmem:[%s9 + $0x8] sm:$0xff]
        %v1194 = vld [vmem:[%s9 + $0x10] sm:$0xff]
        %v1195 = vld [vmem:[%s9 + $0x18] sm:$0xff]
        %v1196 = vld [vmem:[%s9 + $0x20] sm:$0xff]
        %v1197 = vld [vmem:[%s9 + $0x28] sm:$0xff]
        %v1198 = vld [vmem:[%s9 + $0x30] sm:$0xff]
        %v1199 = vld [vmem:[%s9 + $0x38] sm:$0xff]
        %v1200 = vld [vmem:[%s10] sm:$0x1]
        %v1202 = vperm.slane %v1200, 0
        %vm1204 = vcmask 523264
        %v1206 = vsel %vm1204, %v1191, 0
        %1208 = vmatpush.msra.mxu0 0.0
        %1209 = vmatpush.msra.mxu0 0.0
        %1210 = vmatpush.msra.mxu0 0.0
        %1211 = vmatpush.msra.mxu0 0.0
        %1212 = vmatpush.msra.mxu0 0.0
        %1213 = vmatpush.msra.mxu0 0.0
        %1214 = vmatpush.msra.mxu0 0.0
        %1215 = vmatpush.msra.mxu0 0.0
        %1216 = vmatpush.msra.mxu0 %v1199
        %1217 = vmatpush.msra.mxu0 %v1198
        %1218 = vmatpush.msra.mxu0 %v1197
        %1219 = vmatpush.msra.mxu0 %v1196
        %1220 = vmatpush.msra.mxu0 %v1195
        %1221 = vmatpush.msra.mxu0 %v1194
        %1222 = vmatpush.msra.mxu0 %v1193
        %1223 = vmatpush.msra.mxu0 %v1192
        %1224 = vmatmul.f32.gmra.mxu0 %v1206
        %v1225 = vpop.f32.mrf.mxu0
        %v1226 = vadd.f32 %v1202, %v1225
        %1227 = vdwg.mxu0
        %v1228 = vadd.f32 %v1076, %v1226
        %1229 = vst.msk [vmem:[%s391] sm:$0xff] %vm1079, %v1228
        %s1230 = sand.u32 %s283, 1
        %s1231 = scalar_lea.sflag [#allocation4], %s1230
        %s1232 = sand.u32 %s283, 1
        %s1233 = smul.addr %s1232, 8
        %s1234 = scalar_lea.vmem [#allocation3], %s1233
        // Predicated region
        $region69: #{tpu_custom_call.1} parent=63 // pred_check
          %p1235 = pneg %p293
        $region70: #{tpu_custom_call.1} parent=63 // pred_check_branch
          %1237 = sbr.rel (%p1235) target = $region72
        $region71: #{tpu_custom_call.1} parent=63 // pred_region
          %1239 = vsyncadd %s1231, 0
          %s1240 = sadd.s32 %s30, %s29
          %s1241 = smul.addr %s1240, 8
          %s1242 = scalar_lea.hbm %s11, %s1241
          %s1244 = sshll.u32 %s1234, 4
          %s1245 = int_to_ptr.vmem [resolvable:$true] %s1244
          %s1246 = sshll.u32 %s1242, 4
          %s1247 = int_to_ptr.hbm [resolvable:$true] %s1246
          %1249 = dma.vmem_to_hbm [thread:$0]  %s1245, 128, %s1247, %s1231
        $region72: #{tpu_custom_call.1} parent=63 // pred_fallthru
          _
      $region64: #{tpu_custom_call.1} parent=5 // pred_fallthru
        _
      %p1250 = scmp.le.s32.totalorder 2, %s20
      // Predicated region
      $region73: #{tpu_custom_call.1} parent=5 // pred_check
        %p1251 = pneg %p1250
      $region74: #{tpu_custom_call.1} parent=5 // pred_check_branch
        %1253 = sbr.rel (%p1251) target = $region76
      $region75: #{tpu_custom_call.1} parent=5 // pred_region
        %s1254 = ssub.s32 %s20, 2
        // Predicated region
        $region77: #{tpu_custom_call.1} parent=75 // pred_check
          %p1255 = pneg %p299
        $region78: #{tpu_custom_call.1} parent=75 // pred_check_branch
          %1257 = sbr.rel (%p1255) target = $region80
        $region79: #{tpu_custom_call.1} parent=75 // pred_region
          %s1258 = sand.u32 %s284, 1
          %s1259 = scalar_lea.sflag [#allocation4], %s1258
          %s1260 = sand.u32 %s284, 1
          %s1261 = smul.addr %s1260, 8
          %s1262 = scalar_lea.vmem [#allocation3], %s1261
          %1264 = dma.done %s1259, 128
        $region80: #{tpu_custom_call.1} parent=75 // pred_fallthru
          _
      $region76: #{tpu_custom_call.1} parent=5 // pred_fallthru
        _
    $region6: #{tpu_custom_call.1} parent=1 // loop_footer
      %s24 = sadd.s32 1, %s20
    $region7: #{tpu_custom_call.1} parent=1 // loop_footer_branch
      %19 = sbr.rel target = $region3
    $region8: #{tpu_custom_call.1} parent=1 // loop_exit
      _
    %1265 = vsyncpa [#allocation4], 1
    %s1266 = scalar_lea.sflag [#allocation4], 1
    %1267 = vsyncpa %s1266, 1

</llo_original>
